<compile_context>
chip_gen: v7x
topology: tpu7x:2x2x1
jax: 0.10.0
libtpu: 0.0.40
codegen_flags: <defaults>
</compile_context>

<pallas_src>
import functools

import numpy as np
import jax
import jax.numpy as jnp
from jax.experimental import pallas as pl
from jax.experimental.pallas import tpu as pltpu

IMG_SIZE = 64       # analog of 1024 (native resolution)
DOWN_SIZE = 32      # analog of 512  (area-downsampled model input)
UP_SIZE = 64        # analog of 1024 (bilinear upsample, align_corners=False)
IN_CH = 3
HIDDEN = 32
NUM_CLASSES = 9
PAD = DOWN_SIZE + 2  # zero-padded model input rows/cols for the 3x3 conv


# --------------------------------------------------------------------------
# attribute -> face-region mapping (pure python glue, same as reference)
# --------------------------------------------------------------------------
def attr2regions(attr):
    if attr in ['wearing_lipstick', 'mouth_slightly_open', 'smiling', 'big_lips']:
        regions = ['mouth']
    elif attr in ['bushy_eyebrows', 'arched_eyebrows']:
        regions = ['eyebrows']
    elif attr in ['narrow_eyes']:
        regions = ['eyes']
    elif attr in ['pointy_nose', 'big_nose']:
        regions = ['nose']
    elif attr in ['black_hair', 'brown_hair', 'blond_hair', 'gray_hair',
                  'wavy_hair', 'straight_hair']:
        regions = ['hair']
    else:
        regions = ['mouth', 'eyebrows', 'eyes', 'hair', 'nose', 'ears']
    return regions


# --------------------------------------------------------------------------
# host-side operator construction (numpy; built once)
# --------------------------------------------------------------------------
def _area_matrix(lo, li):
    """Exact 'area' downsample matrix (average pooling); identity when li==lo."""
    m = np.zeros((lo, li), np.float32)
    if li == lo:
        np.fill_diagonal(m, 1.0)
        return m
    assert li % lo == 0, "area downsample requires an integer scale factor"
    r = li // lo
    for j in range(lo):
        m[j, j * r:(j + 1) * r] = 1.0 / r
    return m


def _bilinear_matrix(lo, li):
    """F.interpolate(mode='bilinear', align_corners=False) as a (lo, li) matrix."""
    scale = li / lo
    m = np.zeros((lo, li), np.float32)
    for o in range(lo):
        src = max((o + 0.5) * scale - 0.5, 0.0)
        i0 = min(int(np.floor(src)), li - 1)
        i1 = min(i0 + 1, li - 1)
        frac = src - i0
        m[o, i0] += 1.0 - frac
        m[o, i1] += frac
    return m


# --------------------------------------------------------------------------
# fused Pallas kernel: one image per grid step, everything VMEM-resident
# --------------------------------------------------------------------------
def _fused_kernel(do_up, idxs, x_ref, dhp_ref, dwb_ref, pm_ref, wc_ref,
                  b1_ref, w2_ref, b2_ref, *rest):
    if do_up:
        uhe_ref, uho_ref, uwt_ref, o_ref = rest
    else:
        (o_ref,) = rest
    f32 = jnp.float32

    # area downsample (both axes) with the 3x3-conv zero padding folded into
    # the operators; x_ref[0] is (H, W*C), result vn is (34, 34*C).
    u = jnp.dot(dhp_ref[...], x_ref[0], preferred_element_type=f32)    # (34, W*C)
    v = jnp.dot(u, dwb_ref[...], preferred_element_type=f32)           # (34, 34*C)
    vn = 2.0 * v - pm_ref[...]     # img*2 - 1 in the interior, 0 on the border

    # 3x3 conv as 3 row-tap matmuls; lane index of the hidden slab = x*HIDDEN + j
    acc = jnp.dot(vn[0:DOWN_SIZE, :], wc_ref[0], preferred_element_type=f32)
    acc = acc + jnp.dot(vn[1:DOWN_SIZE + 1, :], wc_ref[1], preferred_element_type=f32)
    acc = acc + jnp.dot(vn[2:DOWN_SIZE + 2, :], wc_ref[2], preferred_element_type=f32)
    h = jnp.maximum(acc + b1_ref[...], 0.0)                            # (32, 32*HIDDEN)

    # 1x1 conv to classes; lane index = cls*32 + x (class-major blocks)
    logits = jnp.dot(h, w2_ref[...], preferred_element_type=f32) + b2_ref[...]  # (32, 288)

    # per-pixel softmax over the 9 class blocks, then static region-subset sum
    cls_maps = [logits[:, k * DOWN_SIZE:(k + 1) * DOWN_SIZE] for k in range(NUM_CLASSES)]
    m = cls_maps[0]
    for cm in cls_maps[1:]:
        m = jnp.maximum(m, cm)
    exps = [jnp.exp(cm - m) for cm in cls_maps]
    denom = exps[0]
    for e in exps[1:]:
        denom = denom + e
    if len(idxs) > 0:
        sel = exps[idxs[0]]
        for k in idxs[1:]:
            sel = sel + exps[k]
    else:
        sel = jnp.zeros_like(denom)
    parsed = sel * pl.reciprocal(denom, approx=True)                   # (32, 32)

    if do_up:
        # bilinear upsample to 64x64, stored lane-dense as (32, 128):
        # even output rows in lanes [0,64), odd output rows in lanes [64,128).
        t = jnp.dot(parsed, uwt_ref[...], preferred_element_type=f32)  # (32, 64)
        pe = jnp.dot(uhe_ref[...], t, preferred_element_type=f32)      # (32, 64)
        po = jnp.dot(uho_ref[...], t, preferred_element_type=f32)      # (32, 64)
        o_ref[0] = jnp.concatenate([pe, po], axis=1)                   # (32, 128)
    else:
        o_ref[0] = parsed


@functools.partial(jax.jit, static_argnames=("do_up", "idxs"))
def _fused_forward(img, dh_pad, dw_big, pad_mask, wc, b1_flat, w2_big, b2_flat,
                   uh_even, uh_odd, uwt, *, do_up, idxs):
    n, c, h, w = img.shape
    # NCHW -> (N, H, W*C); pixel-row-major with channels minor on lanes
    x_flat = jnp.transpose(img, (0, 2, 3, 1)).reshape(n, h, w * c)

    kernel = functools.partial(_fused_kernel, do_up, idxs)
    in_specs = [
        pl.BlockSpec((1, h, w * c), lambda i: (i, 0, 0)),
        pl.BlockSpec(dh_pad.shape, lambda i: (0, 0)),
        pl.BlockSpec(dw_big.shape, lambda i: (0, 0)),
        pl.BlockSpec(pad_mask.shape, lambda i: (0, 0)),
        pl.BlockSpec(wc.shape, lambda i: (0, 0, 0)),
        pl.BlockSpec(b1_flat.shape, lambda i: (0, 0)),
        pl.BlockSpec(w2_big.shape, lambda i: (0, 0)),
        pl.BlockSpec(b2_flat.shape, lambda i: (0, 0)),
    ]
    args = [x_flat, dh_pad, dw_big, pad_mask, wc, b1_flat, w2_big, b2_flat]
    if do_up:
        in_specs += [
            pl.BlockSpec(uh_even.shape, lambda i: (0, 0)),
            pl.BlockSpec(uh_odd.shape, lambda i: (0, 0)),
            pl.BlockSpec(uwt.shape, lambda i: (0, 0)),
        ]
        args += [uh_even, uh_odd, uwt]
        out_shape = jax.ShapeDtypeStruct((n, UP_SIZE // 2, 2 * UP_SIZE), jnp.float32)
        out_spec = pl.BlockSpec((1, UP_SIZE // 2, 2 * UP_SIZE), lambda i: (i, 0, 0))
    else:
        out_shape = jax.ShapeDtypeStruct((n, DOWN_SIZE, DOWN_SIZE), jnp.float32)
        out_spec = pl.BlockSpec((1, DOWN_SIZE, DOWN_SIZE), lambda i: (i, 0, 0))

    out = pl.pallas_call(
        kernel,
        out_shape=out_shape,
        grid=(n,),
        in_specs=in_specs,
        out_specs=out_spec,
        compiler_params=pltpu.CompilerParams(dimension_semantics=("parallel",)),
    )(*args)

    if do_up:
        # (N, 32, 128) row-major == (N, 64, 64): lane q*64+x of packed row r is
        # output pixel (2r+q, x); pure reshape, no data movement needed.
        return out.reshape(n, 1, UP_SIZE, UP_SIZE)
    return out.reshape(n, 1, DOWN_SIZE, DOWN_SIZE)


# --------------------------------------------------------------------------
# FaceParser (JAX / Pallas version)
# --------------------------------------------------------------------------
class FaceParserPallas:
    def __init__(self, blend_option):
        self.mask_modes = ['recon', 'shape', 'blend', 'dynamic']
        self.all_masks = ['background', 'mouth', 'eyebrows', 'eyes', 'hair',
                          'nose', 'skin', 'ears', 'belowface']
        self.mask2idx = {k: self.all_masks.index(k) for k in self.all_masks}
        self.mask_idxs = {
            'recon': [self.mask2idx['skin']],
            'blend': [self.mask2idx['skin']] if blend_option == 'include_skin' else [],
            'shape': [],
            'dynamic': [],
            'global': [self.mask2idx[a] for a in self.all_masks[1:]],
        }

        # TODO(synk): deeplabv3_resnet50 + 'state.pt' checkpoint replaced by a
        # deterministic synthetic head (3x3 conv -> ReLU -> 1x1 conv, 9 classes).
        k0, k1, k2, k3 = jax.random.split(jax.random.PRNGKey(0), 4)
        self.w1conv = np.asarray(0.1 * jax.random.normal(k0, (HIDDEN, IN_CH, 3, 3), jnp.float32))
        self.b1 = np.asarray(0.01 * jax.random.normal(k1, (HIDDEN,), jnp.float32))
        self.w2 = np.asarray(0.1 * jax.random.normal(k2, (HIDDEN, NUM_CLASSES), jnp.float32))
        self.b2 = np.asarray(0.01 * jax.random.normal(k3, (NUM_CLASSES,), jnp.float32))

        # conv1 folded into 3 row-tap matrices: Wc[di, xp*C+c, x*HIDDEN+j]
        wc = np.zeros((3, PAD * IN_CH, DOWN_SIZE * HIDDEN), np.float32)
        for di in range(3):
            for dj in range(3):
                for c in range(IN_CH):
                    wv = self.w1conv[:, c, di, dj]
                    for x in range(DOWN_SIZE):
                        xp = x + dj
                        wc[di, xp * IN_CH + c, x * HIDDEN:(x + 1) * HIDDEN] = wv
        self.wc = jnp.asarray(wc)
        self.b1_flat = jnp.asarray(np.tile(self.b1, DOWN_SIZE)[None, :])

        # 1x1 conv to classes with class-major lane blocks: lane = cls*32 + x
        w2b = np.zeros((DOWN_SIZE * HIDDEN, NUM_CLASSES * DOWN_SIZE), np.float32)
        for x in range(DOWN_SIZE):
            for cls in range(NUM_CLASSES):
                w2b[x * HIDDEN:(x + 1) * HIDDEN, cls * DOWN_SIZE + x] = self.w2[:, cls]
        self.w2_big = jnp.asarray(w2b)
        self.b2_flat = jnp.asarray(np.repeat(self.b2, DOWN_SIZE)[None, :])

        # bilinear upsample operators; even/odd row split -> lane-dense output
        uh = _bilinear_matrix(UP_SIZE, DOWN_SIZE)
        self.uh_even = jnp.asarray(uh[0::2])
        self.uh_odd = jnp.asarray(uh[1::2])
        self.uwt = jnp.asarray(uh.T)

        # per-input-size downsample operators (cached by spatial size)
        self._ds_cache = {}

    # ---- fused downsample operators (with conv zero-padding folded in) ----
    def _downsample_ops(self, in_size):
        if in_size not in self._ds_cache:
            d = _area_matrix(DOWN_SIZE, in_size)                       # identity if equal
            dh_pad = np.zeros((PAD, in_size), np.float32)
            dh_pad[1:DOWN_SIZE + 1] = d
            dw_big = np.zeros((in_size * IN_CH, PAD * IN_CH), np.float32)
            for x in range(DOWN_SIZE):
                for X in range(in_size):
                    val = d[x, X]
                    if val != 0.0:
                        for c in range(IN_CH):
                            dw_big[X * IN_CH + c, (x + 1) * IN_CH + c] = val
            pad_mask = np.zeros((PAD, PAD * IN_CH), np.float32)
            pad_mask[1:DOWN_SIZE + 1, IN_CH:(DOWN_SIZE + 1) * IN_CH] = 1.0
            self._ds_cache[in_size] = (jnp.asarray(dh_pad), jnp.asarray(dw_big),
                                       jnp.asarray(pad_mask))
        return self._ds_cache[in_size]

    # ---- attribute -> region-index bookkeeping (same as reference) ----
    def set_idx_list(self, attributes):
        for attr in attributes:
            self.set_idx(attr)
        for mask, idxs in self.mask_idxs.items():
            self.mask_idxs[mask] = list(set(idxs))

    def set_idx(self, attribute):
        target_regions = attr2regions(attribute)
        target_idxs = [self.mask2idx[tr] for tr in target_regions]
        self.mask_idxs['blend'] += target_idxs
        self.mask_idxs['shape'] += target_idxs
        self.mask_idxs['dynamic'] += target_idxs
        if attribute in ('straight_hair', 'wavy_hair'):
            self.mask_idxs['recon'] += [self.mask2idx['ears']]
            self.mask_idxs['blend'] += [self.mask2idx['ears']]
            self.mask_idxs['shape'] += [self.mask2idx['ears']]

    # ---- forward ----
    def forward(self, img, mode):
        n, c, h, w = img.shape
        assert c == IN_CH and h == w
        dh_pad, dw_big, pad_mask = self._downsample_ops(w)
        do_up = mode != 'shape'
        idxs = tuple(sorted(set(self.mask_idxs[mode])))
        return _fused_forward(
            img, dh_pad, dw_big, pad_mask, self.wc, self.b1_flat,
            self.w2_big, self.b2_flat, self.uh_even, self.uh_odd, self.uwt,
            do_up=do_up, idxs=idxs)

    def get_image_masks(self, images, is_local):
        assert images.shape[2] == images.shape[3]
        masks = {}
        if is_local:
            for mode in self.mask_modes:
                masks[mode] = self.forward(images, mode)
        else:
            g = self.forward(images, 'global')
            masks['recon'] = g
            masks['blend'] = jnp.array(g)
            masks['dynamic'] = jnp.array(g)
        return masks

    # ---- pure-jnp reference of the same synthetic pipeline (validation) ----
    def reference_forward(self, img, mode):
        n, c, h, w = img.shape
        d = jnp.asarray(_area_matrix(DOWN_SIZE, h))
        xd = jnp.einsum('yY,ncYX,xX->ncyx', d, img, d)
        xn = xd * 2.0 - 1.0
        xp = jnp.pad(xn, ((0, 0), (0, 0), (1, 1), (1, 1)))
        w1 = jnp.asarray(self.w1conv)
        hid = jnp.zeros((n, HIDDEN, DOWN_SIZE, DOWN_SIZE), jnp.float32)
        for di in range(3):
            for dj in range(3):
                hid = hid + jnp.einsum('jc,ncyx->njyx', w1[:, :, di, dj],
                                       xp[:, :, di:di + DOWN_SIZE, dj:dj + DOWN_SIZE])
        hid = jnp.maximum(hid + jnp.asarray(self.b1)[None, :, None, None], 0.0)
        logits = jnp.einsum('njyx,jk->nkyx', hid, jnp.asarray(self.w2))
        logits = logits + jnp.asarray(self.b2)[None, :, None, None]
        probs = jax.nn.softmax(logits, axis=1)
        idxs = sorted(set(self.mask_idxs[mode]))
        if idxs:
            sel = jnp.sum(probs[:, jnp.asarray(idxs)], axis=1, keepdims=True)
        else:
            sel = jnp.zeros((n, 1, DOWN_SIZE, DOWN_SIZE), jnp.float32)
        if mode != 'shape':
            uh = jnp.asarray(_bilinear_matrix(UP_SIZE, DOWN_SIZE))
            sel = jnp.einsum('Yy,nkyx,Xx->nkYX', uh, sel, uh)
        return sel


# --------------------------------------------------------------------------
if __name__ == "__main__":
    key = jax.random.PRNGKey(0)
    images = jax.random.uniform(key, (2, IN_CH, IMG_SIZE, IMG_SIZE), dtype=jnp.float32)

    parser = FaceParserPallas(blend_option='include_skin')
    parser.set_idx_list(['smiling'])

    out_recon = parser.forward(images, 'recon')    # (2, 1, 64, 64), upsampled
    out_shape = parser.forward(images, 'shape')    # (2, 1, 32, 32), no upsample
    out_blend = parser.forward(images, 'blend')    # (2, 1, 64, 64)
    jax.block_until_ready(out_recon)
    jax.block_until_ready(out_shape)
    jax.block_until_ready(out_blend)

    assert out_recon.shape == (2, 1, UP_SIZE, UP_SIZE)
    assert out_shape.shape == (2, 1, DOWN_SIZE, DOWN_SIZE)
    assert out_blend.shape == (2, 1, UP_SIZE, UP_SIZE)
    assert bool(jnp.all(jnp.isfinite(out_recon)))
    assert bool(jnp.all(jnp.isfinite(out_shape)))
    assert bool(jnp.all(jnp.isfinite(out_blend)))

    # validate the fused Pallas pipeline against the pure-jnp reference
    for mode, got in (('recon', out_recon), ('shape', out_shape), ('blend', out_blend)):
        ref = parser.reference_forward(images, mode)
        err = float(jnp.max(jnp.abs(got - ref)))
        assert err < 1e-2, f"mode={mode}: max abs err {err}"

    print("KERNEL_OK")
</pallas_src>

<mosaic_0001>
module attributes {stable_mosaic.version = 11 : i64} {
  func.func @_fused_kernel(%arg0: i32, %arg1: memref<1x64x192xf32, #tpu.memory_space<vmem>>, %arg2: memref<34x64xf32, #tpu.memory_space<vmem>>, %arg3: memref<192x102xf32, #tpu.memory_space<vmem>>, %arg4: memref<34x102xf32, #tpu.memory_space<vmem>>, %arg5: memref<3x102x1024xf32, #tpu.memory_space<vmem>>, %arg6: memref<1x1024xf32, #tpu.memory_space<vmem>>, %arg7: memref<1024x288xf32, #tpu.memory_space<vmem>>, %arg8: memref<1x288xf32, #tpu.memory_space<vmem>>, %arg9: memref<32x32xf32, #tpu.memory_space<vmem>>, %arg10: memref<32x32xf32, #tpu.memory_space<vmem>>, %arg11: memref<32x64xf32, #tpu.memory_space<vmem>>, %arg12: memref<1x32x128xf32, #tpu.memory_space<vmem>>) attributes {dimension_semantics = [#tpu.dimension_semantics<parallel>], iteration_bounds = array<i64: 2>, scalar_prefetch = 0 : i64, scratch_operands = 0 : i64, tpu.core_type = #tpu.core_type<tc>, window_params = [{transform_indices = @transform_0, window_bounds = array<i64: 1, 64, 192>}, {pipeline_mode = #tpu.pipeline_mode<synchronous>, transform_indices = @transform_1, window_bounds = array<i64: 34, 64>}, {pipeline_mode = #tpu.pipeline_mode<synchronous>, transform_indices = @transform_2, window_bounds = array<i64: 192, 102>}, {pipeline_mode = #tpu.pipeline_mode<synchronous>, transform_indices = @transform_3, window_bounds = array<i64: 34, 102>}, {pipeline_mode = #tpu.pipeline_mode<synchronous>, transform_indices = @transform_4, window_bounds = array<i64: 3, 102, 1024>}, {pipeline_mode = #tpu.pipeline_mode<synchronous>, transform_indices = @transform_5, window_bounds = array<i64: 1, 1024>}, {pipeline_mode = #tpu.pipeline_mode<synchronous>, transform_indices = @transform_6, window_bounds = array<i64: 1024, 288>}, {pipeline_mode = #tpu.pipeline_mode<synchronous>, transform_indices = @transform_7, window_bounds = array<i64: 1, 288>}, {pipeline_mode = #tpu.pipeline_mode<synchronous>, transform_indices = @transform_8, window_bounds = array<i64: 32, 32>}, {pipeline_mode = #tpu.pipeline_mode<synchronous>, transform_indices = @transform_9, window_bounds = array<i64: 32, 32>}, {pipeline_mode = #tpu.pipeline_mode<synchronous>, transform_indices = @transform_10, window_bounds = array<i64: 32, 64>}, {transform_indices = @transform_11, window_bounds = array<i64: 1, 32, 128>}]} {
    %c0 = arith.constant 0 : index
    %c0_0 = arith.constant 0 : index
    %0 = vector.load %arg2[%c0, %c0_0] : memref<34x64xf32, #tpu.memory_space<vmem>>, vector<34x64xf32>
    %c0_1 = arith.constant 0 : index
    %c0_2 = arith.constant 0 : index
    %c0_3 = arith.constant 0 : index
    %1 = vector.load %arg1[%c0_1, %c0_2, %c0_3] : memref<1x64x192xf32, #tpu.memory_space<vmem>>, vector<1x64x192xf32>
    %2 = vector.shape_cast %1 : vector<1x64x192xf32> to vector<64x192xf32>
    %cst = arith.constant dense<0.000000e+00> : vector<34x192xf32>
    %3 = tpu.matmul %0, %2, %cst {dimension_numbers = #tpu.dot_dimension_numbers<[1], [0], [0], [1], [0, 0, 1, 1], [], []>} : vector<34x64xf32>, vector<64x192xf32>, vector<34x192xf32> -> vector<34x192xf32>
    %c0_4 = arith.constant 0 : index
    %c0_5 = arith.constant 0 : index
    %4 = vector.load %arg3[%c0_4, %c0_5] : memref<192x102xf32, #tpu.memory_space<vmem>>, vector<192x102xf32>
    %cst_6 = arith.constant dense<0.000000e+00> : vector<34x102xf32>
    %5 = tpu.matmul %3, %4, %cst_6 {dimension_numbers = #tpu.dot_dimension_numbers<[1], [0], [0], [1], [0, 0, 1, 1], [], []>} : vector<34x192xf32>, vector<192x102xf32>, vector<34x102xf32> -> vector<34x102xf32>
    %cst_7 = arith.constant 2.000000e+00 : f32
    %6 = vector.broadcast %cst_7 : f32 to vector<34x102xf32>
    %7 = arith.mulf %6, %5 : vector<34x102xf32>
    %c0_8 = arith.constant 0 : index
    %c0_9 = arith.constant 0 : index
    %8 = vector.load %arg4[%c0_8, %c0_9] : memref<34x102xf32, #tpu.memory_space<vmem>>, vector<34x102xf32>
    %9 = arith.subf %7, %8 : vector<34x102xf32>
    %10 = vector.extract_strided_slice %9 {offsets = [0, 0], sizes = [32, 102], strides = [1, 1]} : vector<34x102xf32> to vector<32x102xf32>
    %c0_10 = arith.constant 0 : index
    %c0_11 = arith.constant 0 : index
    %c0_12 = arith.constant 0 : index
    %11 = vector.load %arg5[%c0_10, %c0_11, %c0_12] : memref<3x102x1024xf32, #tpu.memory_space<vmem>>, vector<1x102x1024xf32>
    %12 = vector.shape_cast %11 : vector<1x102x1024xf32> to vector<102x1024xf32>
    %cst_13 = arith.constant dense<0.000000e+00> : vector<32x1024xf32>
    %13 = tpu.matmul %10, %12, %cst_13 {dimension_numbers = #tpu.dot_dimension_numbers<[1], [0], [0], [1], [0, 0, 1, 1], [], []>} : vector<32x102xf32>, vector<102x1024xf32>, vector<32x1024xf32> -> vector<32x1024xf32>
    %14 = vector.extract_strided_slice %9 {offsets = [1, 0], sizes = [32, 102], strides = [1, 1]} : vector<34x102xf32> to vector<32x102xf32>
    %c1 = arith.constant 1 : index
    %c0_14 = arith.constant 0 : index
    %c0_15 = arith.constant 0 : index
    %15 = vector.load %arg5[%c1, %c0_14, %c0_15] : memref<3x102x1024xf32, #tpu.memory_space<vmem>>, vector<1x102x1024xf32>
    %16 = vector.shape_cast %15 : vector<1x102x1024xf32> to vector<102x1024xf32>
    %cst_16 = arith.constant dense<0.000000e+00> : vector<32x1024xf32>
    %17 = tpu.matmul %14, %16, %cst_16 {dimension_numbers = #tpu.dot_dimension_numbers<[1], [0], [0], [1], [0, 0, 1, 1], [], []>} : vector<32x102xf32>, vector<102x1024xf32>, vector<32x1024xf32> -> vector<32x1024xf32>
    %18 = arith.addf %13, %17 : vector<32x1024xf32>
    %19 = vector.extract_strided_slice %9 {offsets = [2, 0], sizes = [32, 102], strides = [1, 1]} : vector<34x102xf32> to vector<32x102xf32>
    %c2 = arith.constant 2 : index
    %c0_17 = arith.constant 0 : index
    %c0_18 = arith.constant 0 : index
    %20 = vector.load %arg5[%c2, %c0_17, %c0_18] : memref<3x102x1024xf32, #tpu.memory_space<vmem>>, vector<1x102x1024xf32>
    %21 = vector.shape_cast %20 : vector<1x102x1024xf32> to vector<102x1024xf32>
    %cst_19 = arith.constant dense<0.000000e+00> : vector<32x1024xf32>
    %22 = tpu.matmul %19, %21, %cst_19 {dimension_numbers = #tpu.dot_dimension_numbers<[1], [0], [0], [1], [0, 0, 1, 1], [], []>} : vector<32x102xf32>, vector<102x1024xf32>, vector<32x1024xf32> -> vector<32x1024xf32>
    %23 = arith.addf %18, %22 : vector<32x1024xf32>
    %c0_20 = arith.constant 0 : index
    %c0_21 = arith.constant 0 : index
    %24 = vector.load %arg6[%c0_20, %c0_21] : memref<1x1024xf32, #tpu.memory_space<vmem>>, vector<1x1024xf32>
    %25 = vector.broadcast %24 : vector<1x1024xf32> to vector<32x1024xf32>
    %26 = arith.addf %23, %25 : vector<32x1024xf32>
    %cst_22 = arith.constant 0.000000e+00 : f32
    %27 = vector.broadcast %cst_22 : f32 to vector<32x1024xf32>
    %28 = arith.maximumf %26, %27 : vector<32x1024xf32>
    %c0_23 = arith.constant 0 : index
    %c0_24 = arith.constant 0 : index
    %29 = vector.load %arg7[%c0_23, %c0_24] : memref<1024x288xf32, #tpu.memory_space<vmem>>, vector<1024x288xf32>
    %cst_25 = arith.constant dense<0.000000e+00> : vector<32x288xf32>
    %30 = tpu.matmul %28, %29, %cst_25 {dimension_numbers = #tpu.dot_dimension_numbers<[1], [0], [0], [1], [0, 0, 1, 1], [], []>} : vector<32x1024xf32>, vector<1024x288xf32>, vector<32x288xf32> -> vector<32x288xf32>
    %c0_26 = arith.constant 0 : index
    %c0_27 = arith.constant 0 : index
    %31 = vector.load %arg8[%c0_26, %c0_27] : memref<1x288xf32, #tpu.memory_space<vmem>>, vector<1x288xf32>
    %32 = vector.broadcast %31 : vector<1x288xf32> to vector<32x288xf32>
    %33 = arith.addf %30, %32 : vector<32x288xf32>
    %34 = vector.extract_strided_slice %33 {offsets = [0, 0], sizes = [32, 32], strides = [1, 1]} : vector<32x288xf32> to vector<32x32xf32>
    %35 = vector.extract_strided_slice %33 {offsets = [0, 32], sizes = [32, 32], strides = [1, 1]} : vector<32x288xf32> to vector<32x32xf32>
    %36 = vector.extract_strided_slice %33 {offsets = [0, 64], sizes = [32, 32], strides = [1, 1]} : vector<32x288xf32> to vector<32x32xf32>
    %37 = vector.extract_strided_slice %33 {offsets = [0, 96], sizes = [32, 32], strides = [1, 1]} : vector<32x288xf32> to vector<32x32xf32>
    %38 = vector.extract_strided_slice %33 {offsets = [0, 128], sizes = [32, 32], strides = [1, 1]} : vector<32x288xf32> to vector<32x32xf32>
    %39 = vector.extract_strided_slice %33 {offsets = [0, 160], sizes = [32, 32], strides = [1, 1]} : vector<32x288xf32> to vector<32x32xf32>
    %40 = vector.extract_strided_slice %33 {offsets = [0, 192], sizes = [32, 32], strides = [1, 1]} : vector<32x288xf32> to vector<32x32xf32>
    %41 = vector.extract_strided_slice %33 {offsets = [0, 224], sizes = [32, 32], strides = [1, 1]} : vector<32x288xf32> to vector<32x32xf32>
    %42 = vector.extract_strided_slice %33 {offsets = [0, 256], sizes = [32, 32], strides = [1, 1]} : vector<32x288xf32> to vector<32x32xf32>
    %43 = arith.maximumf %34, %35 : vector<32x32xf32>
    %44 = arith.maximumf %43, %36 : vector<32x32xf32>
    %45 = arith.maximumf %44, %37 : vector<32x32xf32>
    %46 = arith.maximumf %45, %38 : vector<32x32xf32>
    %47 = arith.maximumf %46, %39 : vector<32x32xf32>
    %48 = arith.maximumf %47, %40 : vector<32x32xf32>
    %49 = arith.maximumf %48, %41 : vector<32x32xf32>
    %50 = arith.maximumf %49, %42 : vector<32x32xf32>
    %51 = arith.subf %34, %50 : vector<32x32xf32>
    %52 = math.exp %51 : vector<32x32xf32>
    %53 = arith.subf %35, %50 : vector<32x32xf32>
    %54 = math.exp %53 : vector<32x32xf32>
    %55 = arith.subf %36, %50 : vector<32x32xf32>
    %56 = math.exp %55 : vector<32x32xf32>
    %57 = arith.subf %37, %50 : vector<32x32xf32>
    %58 = math.exp %57 : vector<32x32xf32>
    %59 = arith.subf %38, %50 : vector<32x32xf32>
    %60 = math.exp %59 : vector<32x32xf32>
    %61 = arith.subf %39, %50 : vector<32x32xf32>
    %62 = math.exp %61 : vector<32x32xf32>
    %63 = arith.subf %40, %50 : vector<32x32xf32>
    %64 = math.exp %63 : vector<32x32xf32>
    %65 = arith.subf %41, %50 : vector<32x32xf32>
    %66 = math.exp %65 : vector<32x32xf32>
    %67 = arith.subf %42, %50 : vector<32x32xf32>
    %68 = math.exp %67 : vector<32x32xf32>
    %69 = arith.addf %52, %54 : vector<32x32xf32>
    %70 = arith.addf %69, %56 : vector<32x32xf32>
    %71 = arith.addf %70, %58 : vector<32x32xf32>
    %72 = arith.addf %71, %60 : vector<32x32xf32>
    %73 = arith.addf %72, %62 : vector<32x32xf32>
    %74 = arith.addf %73, %64 : vector<32x32xf32>
    %75 = arith.addf %74, %66 : vector<32x32xf32>
    %76 = arith.addf %75, %68 : vector<32x32xf32>
    %77 = tpu.reciprocal %76 {approx = true} : vector<32x32xf32> -> vector<32x32xf32>
    %78 = arith.mulf %64, %77 : vector<32x32xf32>
    %c0_28 = arith.constant 0 : index
    %c0_29 = arith.constant 0 : index
    %79 = vector.load %arg11[%c0_28, %c0_29] : memref<32x64xf32, #tpu.memory_space<vmem>>, vector<32x64xf32>
    %cst_30 = arith.constant dense<0.000000e+00> : vector<32x64xf32>
    %80 = tpu.matmul %78, %79, %cst_30 {dimension_numbers = #tpu.dot_dimension_numbers<[1], [0], [0], [1], [0, 0, 1, 1], [], []>} : vector<32x32xf32>, vector<32x64xf32>, vector<32x64xf32> -> vector<32x64xf32>
    %c0_31 = arith.constant 0 : index
    %c0_32 = arith.constant 0 : index
    %81 = vector.load %arg9[%c0_31, %c0_32] : memref<32x32xf32, #tpu.memory_space<vmem>>, vector<32x32xf32>
    %cst_33 = arith.constant dense<0.000000e+00> : vector<32x64xf32>
    %82 = tpu.matmul %81, %80, %cst_33 {dimension_numbers = #tpu.dot_dimension_numbers<[1], [0], [0], [1], [0, 0, 1, 1], [], []>} : vector<32x32xf32>, vector<32x64xf32>, vector<32x64xf32> -> vector<32x64xf32>
    %c0_34 = arith.constant 0 : index
    %c0_35 = arith.constant 0 : index
    %83 = vector.load %arg10[%c0_34, %c0_35] : memref<32x32xf32, #tpu.memory_space<vmem>>, vector<32x32xf32>
    %cst_36 = arith.constant dense<0.000000e+00> : vector<32x64xf32>
    %84 = tpu.matmul %83, %80, %cst_36 {dimension_numbers = #tpu.dot_dimension_numbers<[1], [0], [0], [1], [0, 0, 1, 1], [], []>} : vector<32x32xf32>, vector<32x64xf32>, vector<32x64xf32> -> vector<32x64xf32>
    %85 = tpu.concatenate %82, %84 in 1 : vector<32x64xf32>, vector<32x64xf32> -> vector<32x128xf32>
    %c0_37 = arith.constant 0 : index
    %c0_38 = arith.constant 0 : index
    %c0_39 = arith.constant 0 : index
    %86 = vector.load %arg12[%c0_37, %c0_38, %c0_39] : memref<1x32x128xf32, #tpu.memory_space<vmem>>, vector<1x32x128xf32>
    %87 = vector.shape_cast %86 : vector<1x32x128xf32> to vector<32x128xf32>
    %88 = vector.shape_cast %85 : vector<32x128xf32> to vector<1x32x128xf32>
    tpu.vector_store %arg12[%c0_37, %c0_38, %c0_39], %88 {strides = array<i32>} : memref<1x32x128xf32, #tpu.memory_space<vmem>>, vector<1x32x128xf32>,
    return
  }
  func.func @transform_0(%arg0: i32) -> (i32, i32, i32) {
    %c0_i32 = arith.constant 0 : i32
    %c0_i32_0 = arith.constant 0 : i32
    %c0_i32_1 = arith.constant 0 : i32
    return %arg0, %c0_i32, %c0_i32_0 : i32, i32, i32
  }
  func.func @transform_1(%arg0: i32) -> (i32, i32) {
    %c0_i32 = arith.constant 0 : i32
    %c0_i32_0 = arith.constant 0 : i32
    %c0_i32_1 = arith.constant 0 : i32
    return %c0_i32, %c0_i32_0 : i32, i32
  }
  func.func @transform_2(%arg0: i32) -> (i32, i32) {
    %c0_i32 = arith.constant 0 : i32
    %c0_i32_0 = arith.constant 0 : i32
    %c0_i32_1 = arith.constant 0 : i32
    return %c0_i32, %c0_i32_0 : i32, i32
  }
  func.func @transform_3(%arg0: i32) -> (i32, i32) {
    %c0_i32 = arith.constant 0 : i32
    %c0_i32_0 = arith.constant 0 : i32
    %c0_i32_1 = arith.constant 0 : i32
    return %c0_i32, %c0_i32_0 : i32, i32
  }
  func.func @transform_4(%arg0: i32) -> (i32, i32, i32) {
    %c0_i32 = arith.constant 0 : i32
    %c0_i32_0 = arith.constant 0 : i32
    %c0_i32_1 = arith.constant 0 : i32
    %c0_i32_2 = arith.constant 0 : i32
    return %c0_i32, %c0_i32_0, %c0_i32_1 : i32, i32, i32
  }
  func.func @transform_5(%arg0: i32) -> (i32, i32) {
    %c0_i32 = arith.constant 0 : i32
    %c0_i32_0 = arith.constant 0 : i32
    %c0_i32_1 = arith.constant 0 : i32
    return %c0_i32, %c0_i32_0 : i32, i32
  }
  func.func @transform_6(%arg0: i32) -> (i32, i32) {
    %c0_i32 = arith.constant 0 : i32
    %c0_i32_0 = arith.constant 0 : i32
    %c0_i32_1 = arith.constant 0 : i32
    return %c0_i32, %c0_i32_0 : i32, i32
  }
  func.func @transform_7(%arg0: i32) -> (i32, i32) {
    %c0_i32 = arith.constant 0 : i32
    %c0_i32_0 = arith.constant 0 : i32
    %c0_i32_1 = arith.constant 0 : i32
    return %c0_i32, %c0_i32_0 : i32, i32
  }
  func.func @transform_8(%arg0: i32) -> (i32, i32) {
    %c0_i32 = arith.constant 0 : i32
    %c0_i32_0 = arith.constant 0 : i32
    %c0_i32_1 = arith.constant 0 : i32
    return %c0_i32, %c0_i32_0 : i32, i32
  }
  func.func @transform_9(%arg0: i32) -> (i32, i32) {
    %c0_i32 = arith.constant 0 : i32
    %c0_i32_0 = arith.constant 0 : i32
    %c0_i32_1 = arith.constant 0 : i32
    return %c0_i32, %c0_i32_0 : i32, i32
  }
  func.func @transform_10(%arg0: i32) -> (i32, i32) {
    %c0_i32 = arith.constant 0 : i32
    %c0_i32_0 = arith.constant 0 : i32
    %c0_i32_1 = arith.constant 0 : i32
    return %c0_i32, %c0_i32_0 : i32, i32
  }
  func.func @transform_11(%arg0: i32) -> (i32, i32, i32) {
    %c0_i32 = arith.constant 0 : i32
    %c0_i32_0 = arith.constant 0 : i32
    %c0_i32_1 = arith.constant 0 : i32
    return %arg0, %c0_i32, %c0_i32_0 : i32, i32, i32
  }
}

</mosaic_0001>

<llo_original>
// kernel: _fused_forward.1
$region0: #{_fused_forward.1}
  #allocation0 [shape = 'u32[]', space=smem, size = 0x4, offset = 0x4, fixed_abs, tag = 'smem constant byte address 0x4 - core index']
  #allocation1 [shape = 'u32[144,128]{1,0:T(1,128)}', space=vmem, size = 0x12000, scoped, tag = 'internal scratch']
  %s0 = inlined_call_operand.vmem [shape: f32[2,64,192], index: 0, kind: input, shape index: {}]
  %s1 = inlined_call_operand.vmem [shape: f32[34,64], index: 1, kind: input, shape index: {}]
  %s2 = inlined_call_operand.vmem [shape: f32[192,102], index: 2, kind: input, shape index: {}]
  %s3 = inlined_call_operand.vmem [shape: f32[34,102], index: 3, kind: input, shape index: {}]
  %s4 = inlined_call_operand.vmem [shape: f32[3,102,1024], index: 4, kind: input, shape index: {}]
  %s5 = inlined_call_operand.vmem [shape: f32[1,1024], index: 5, kind: input, shape index: {}]
  %s6 = inlined_call_operand.vmem [shape: f32[1024,288], index: 6, kind: input, shape index: {}]
  %s7 = inlined_call_operand.vmem [shape: f32[1,288], index: 7, kind: input, shape index: {}]
  %s8 = inlined_call_operand.vmem [shape: f32[32,32], index: 8, kind: input, shape index: {}]
  %s9 = inlined_call_operand.vmem [shape: f32[32,32], index: 9, kind: input, shape index: {}]
  %s10 = inlined_call_operand.vmem [shape: f32[32,64], index: 10, kind: input, shape index: {}]
  %s11 = inlined_call_operand.vmem [shape: f32[2,32,128], index: 11, kind: output, shape index: {}]
  %s12 = sld [smem:[#allocation0]]
  $region77: #{_fused_forward.1} parent=0
    _
  %s14 = ssub.s32 1, %s12
  %s15 = scalar_select 0, %s14, %s12
  loop: start=0, step=1, limit=4
  $region2: #{_fused_forward.1} parent=0 // loop_pre_header
    _
  $region3: #{_fused_forward.1} parent=0 // loop_header
    %s17 = sphi 0, %s21
    %p18 = scmp.ge.s32.totalorder %s17, 4
    %s27 = sphi 0, %s29
    %s30 = sphi 0, %s27
    %s31 = sphi 0, %s30
    %s47 = sphi 0, %s31
    %s51 = sphi 0, %s51
    %s53 = sphi 0, %s51
    %s54 = sphi 0, %s53
    %s68 = sphi 0, %s54
    %s72 = sphi 0, %s72
    %s74 = sphi 0, %s72
    %s75 = sphi 0, %s74
    %s89 = sphi 0, %s75
    %s93 = sphi 0, %s93
    %s95 = sphi 0, %s93
    %s96 = sphi 0, %s95
    %s110 = sphi 0, %s96
    %s114 = sphi 0, %s114
    %s116 = sphi 0, %s114
    %s117 = sphi 0, %s116
    %s131 = sphi 0, %s117
    %s135 = sphi 0, %s135
    %s137 = sphi 0, %s135
    %s138 = sphi 0, %s137
    %s152 = sphi 0, %s138
    %s156 = sphi 0, %s156
    %s158 = sphi 0, %s156
    %s159 = sphi 0, %s158
    %s173 = sphi 0, %s159
    %s177 = sphi 0, %s177
    %s179 = sphi 0, %s177
    %s180 = sphi 0, %s179
    %s194 = sphi 0, %s180
    %s198 = sphi 0, %s198
    %s200 = sphi 0, %s198
    %s201 = sphi 0, %s200
    %s215 = sphi 0, %s201
    %s219 = sphi 0, %s219
    %s221 = sphi 0, %s219
    %s222 = sphi 0, %s221
    %s236 = sphi 0, %s222
    %s240 = sphi 0, %s240
    %s242 = sphi 0, %s240
    %s243 = sphi 0, %s242
    %s257 = sphi 0, %s243
    %s263 = sphi 0, %s265
    %s266 = sphi 0, %s263
    %s267 = sphi 0, %s266
    %s283 = sphi 0, %s267
  $region4: #{_fused_forward.1} parent=0 // loop_header_branch
    %20 = sbr.rel (%p18) target = $region8
  $region5: #{_fused_forward.1} parent=0 // loop_body
    %s22 = ssub.s32 %s17, 1
    %s23 = ssub.s32 %s17, 2
    %s24 = sadd.s32 %s17, 1
    %s25 = ssub.s32 %s17, %s24
    %p26 = scmp.eq.s32.totalorder %s25, 0
    %s28 = sadd.s32 %s27, 1
    %s29 = scalar_select %p26, %s27, %s28
    %p32 = pneg %p26
    %p33 = scmp.eq.s32.totalorder %s17, 1
    %p34 = por %p32, %p33
    %p35 = scmp.ne.s32.totalorder %s27, %s30
    %p36 = scmp.eq.s32.totalorder %s17, 0
    %p37 = por %p35, %p36
    %p38 = scmp.ne.s32.totalorder %s27, %s30
    %p39 = scmp.eq.s32.totalorder %s22, 1
    %p40 = por %p38, %p39
    %p41 = scmp.ne.s32.totalorder %s30, %s31
    %p42 = scmp.eq.s32.totalorder %s22, 0
    %p43 = por %p41, %p42
    %p44 = scmp.ne.s32.totalorder %s30, %s31
    %p45 = scmp.eq.s32.totalorder %s23, 1
    %p46 = por %p44, %p45
    %p48 = scmp.ne.s32.totalorder %s31, %s47
    %p49 = scmp.eq.s32.totalorder %s23, 0
    %p50 = por %p48, %p49
    %s52 = sadd.s32 %s51, 1
    %p55 = scmp.eq.s32.totalorder %s17, 1
    %p56 = scmp.ne.s32.totalorder %s51, %s53
    %p57 = scmp.eq.s32.totalorder %s17, 0
    %p58 = por %p56, %p57
    %p59 = scmp.ne.s32.totalorder %s51, %s53
    %p60 = scmp.eq.s32.totalorder %s22, 1
    %p61 = por %p59, %p60
    %p62 = scmp.ne.s32.totalorder %s53, %s54
    %p63 = scmp.eq.s32.totalorder %s22, 0
    %p64 = por %p62, %p63
    %p65 = scmp.ne.s32.totalorder %s53, %s54
    %p66 = scmp.eq.s32.totalorder %s23, 1
    %p67 = por %p65, %p66
    %p69 = scmp.ne.s32.totalorder %s54, %s68
    %p70 = scmp.eq.s32.totalorder %s23, 0
    %p71 = por %p69, %p70
    %s73 = sadd.s32 %s72, 1
    %p76 = scmp.eq.s32.totalorder %s17, 1
    %p77 = scmp.ne.s32.totalorder %s72, %s74
    %p78 = scmp.eq.s32.totalorder %s17, 0
    %p79 = por %p77, %p78
    %p80 = scmp.ne.s32.totalorder %s72, %s74
    %p81 = scmp.eq.s32.totalorder %s22, 1
    %p82 = por %p80, %p81
    %p83 = scmp.ne.s32.totalorder %s74, %s75
    %p84 = scmp.eq.s32.totalorder %s22, 0
    %p85 = por %p83, %p84
    %p86 = scmp.ne.s32.totalorder %s74, %s75
    %p87 = scmp.eq.s32.totalorder %s23, 1
    %p88 = por %p86, %p87
    %p90 = scmp.ne.s32.totalorder %s75, %s89
    %p91 = scmp.eq.s32.totalorder %s23, 0
    %p92 = por %p90, %p91
    %s94 = sadd.s32 %s93, 1
    %p97 = scmp.eq.s32.totalorder %s17, 1
    %p98 = scmp.ne.s32.totalorder %s93, %s95
    %p99 = scmp.eq.s32.totalorder %s17, 0
    %p100 = por %p98, %p99
    %p101 = scmp.ne.s32.totalorder %s93, %s95
    %p102 = scmp.eq.s32.totalorder %s22, 1
    %p103 = por %p101, %p102
    %p104 = scmp.ne.s32.totalorder %s95, %s96
    %p105 = scmp.eq.s32.totalorder %s22, 0
    %p106 = por %p104, %p105
    %p107 = scmp.ne.s32.totalorder %s95, %s96
    %p108 = scmp.eq.s32.totalorder %s23, 1
    %p109 = por %p107, %p108
    %p111 = scmp.ne.s32.totalorder %s96, %s110
    %p112 = scmp.eq.s32.totalorder %s23, 0
    %p113 = por %p111, %p112
    %s115 = sadd.s32 %s114, 1
    %p118 = scmp.eq.s32.totalorder %s17, 1
    %p119 = scmp.ne.s32.totalorder %s114, %s116
    %p120 = scmp.eq.s32.totalorder %s17, 0
    %p121 = por %p119, %p120
    %p122 = scmp.ne.s32.totalorder %s114, %s116
    %p123 = scmp.eq.s32.totalorder %s22, 1
    %p124 = por %p122, %p123
    %p125 = scmp.ne.s32.totalorder %s116, %s117
    %p126 = scmp.eq.s32.totalorder %s22, 0
    %p127 = por %p125, %p126
    %p128 = scmp.ne.s32.totalorder %s116, %s117
    %p129 = scmp.eq.s32.totalorder %s23, 1
    %p130 = por %p128, %p129
    %p132 = scmp.ne.s32.totalorder %s117, %s131
    %p133 = scmp.eq.s32.totalorder %s23, 0
    %p134 = por %p132, %p133
    %s136 = sadd.s32 %s135, 1
    %p139 = scmp.eq.s32.totalorder %s17, 1
    %p140 = scmp.ne.s32.totalorder %s135, %s137
    %p141 = scmp.eq.s32.totalorder %s17, 0
    %p142 = por %p140, %p141
    %p143 = scmp.ne.s32.totalorder %s135, %s137
    %p144 = scmp.eq.s32.totalorder %s22, 1
    %p145 = por %p143, %p144
    %p146 = scmp.ne.s32.totalorder %s137, %s138
    %p147 = scmp.eq.s32.totalorder %s22, 0
    %p148 = por %p146, %p147
    %p149 = scmp.ne.s32.totalorder %s137, %s138
    %p150 = scmp.eq.s32.totalorder %s23, 1
    %p151 = por %p149, %p150
    %p153 = scmp.ne.s32.totalorder %s138, %s152
    %p154 = scmp.eq.s32.totalorder %s23, 0
    %p155 = por %p153, %p154
    %s157 = sadd.s32 %s156, 1
    %p160 = scmp.eq.s32.totalorder %s17, 1
    %p161 = scmp.ne.s32.totalorder %s156, %s158
    %p162 = scmp.eq.s32.totalorder %s17, 0
    %p163 = por %p161, %p162
    %p164 = scmp.ne.s32.totalorder %s156, %s158
    %p165 = scmp.eq.s32.totalorder %s22, 1
    %p166 = por %p164, %p165
    %p167 = scmp.ne.s32.totalorder %s158, %s159
    %p168 = scmp.eq.s32.totalorder %s22, 0
    %p169 = por %p167, %p168
    %p170 = scmp.ne.s32.totalorder %s158, %s159
    %p171 = scmp.eq.s32.totalorder %s23, 1
    %p172 = por %p170, %p171
    %p174 = scmp.ne.s32.totalorder %s159, %s173
    %p175 = scmp.eq.s32.totalorder %s23, 0
    %p176 = por %p174, %p175
    %s178 = sadd.s32 %s177, 1
    %p181 = scmp.eq.s32.totalorder %s17, 1
    %p182 = scmp.ne.s32.totalorder %s177, %s179
    %p183 = scmp.eq.s32.totalorder %s17, 0
    %p184 = por %p182, %p183
    %p185 = scmp.ne.s32.totalorder %s177, %s179
    %p186 = scmp.eq.s32.totalorder %s22, 1
    %p187 = por %p185, %p186
    %p188 = scmp.ne.s32.totalorder %s179, %s180
    %p189 = scmp.eq.s32.totalorder %s22, 0
    %p190 = por %p188, %p189
    %p191 = scmp.ne.s32.totalorder %s179, %s180
    %p192 = scmp.eq.s32.totalorder %s23, 1
    %p193 = por %p191, %p192
    %p195 = scmp.ne.s32.totalorder %s180, %s194
    %p196 = scmp.eq.s32.totalorder %s23, 0
    %p197 = por %p195, %p196
    %s199 = sadd.s32 %s198, 1
    %p202 = scmp.eq.s32.totalorder %s17, 1
    %p203 = scmp.ne.s32.totalorder %s198, %s200
    %p204 = scmp.eq.s32.totalorder %s17, 0
    %p205 = por %p203, %p204
    %p206 = scmp.ne.s32.totalorder %s198, %s200
    %p207 = scmp.eq.s32.totalorder %s22, 1
    %p208 = por %p206, %p207
    %p209 = scmp.ne.s32.totalorder %s200, %s201
    %p210 = scmp.eq.s32.totalorder %s22, 0
    %p211 = por %p209, %p210
    %p212 = scmp.ne.s32.totalorder %s200, %s201
    %p213 = scmp.eq.s32.totalorder %s23, 1
    %p214 = por %p212, %p213
    %p216 = scmp.ne.s32.totalorder %s201, %s215
    %p217 = scmp.eq.s32.totalorder %s23, 0
    %p218 = por %p216, %p217
    %s220 = sadd.s32 %s219, 1
    %p223 = scmp.eq.s32.totalorder %s17, 1
    %p224 = scmp.ne.s32.totalorder %s219, %s221
    %p225 = scmp.eq.s32.totalorder %s17, 0
    %p226 = por %p224, %p225
    %p227 = scmp.ne.s32.totalorder %s219, %s221
    %p228 = scmp.eq.s32.totalorder %s22, 1
    %p229 = por %p227, %p228
    %p230 = scmp.ne.s32.totalorder %s221, %s222
    %p231 = scmp.eq.s32.totalorder %s22, 0
    %p232 = por %p230, %p231
    %p233 = scmp.ne.s32.totalorder %s221, %s222
    %p234 = scmp.eq.s32.totalorder %s23, 1
    %p235 = por %p233, %p234
    %p237 = scmp.ne.s32.totalorder %s222, %s236
    %p238 = scmp.eq.s32.totalorder %s23, 0
    %p239 = por %p237, %p238
    %s241 = sadd.s32 %s240, 1
    %p244 = scmp.eq.s32.totalorder %s17, 1
    %p245 = scmp.ne.s32.totalorder %s240, %s242
    %p246 = scmp.eq.s32.totalorder %s17, 0
    %p247 = por %p245, %p246
    %p248 = scmp.ne.s32.totalorder %s240, %s242
    %p249 = scmp.eq.s32.totalorder %s22, 1
    %p250 = por %p248, %p249
    %p251 = scmp.ne.s32.totalorder %s242, %s243
    %p252 = scmp.eq.s32.totalorder %s22, 0
    %p253 = por %p251, %p252
    %p254 = scmp.ne.s32.totalorder %s242, %s243
    %p255 = scmp.eq.s32.totalorder %s23, 1
    %p256 = por %p254, %p255
    %p258 = scmp.ne.s32.totalorder %s243, %s257
    %p259 = scmp.eq.s32.totalorder %s23, 0
    %p260 = por %p258, %p259
    %s261 = ssub.s32 %s17, %s24
    %p262 = scmp.eq.s32.totalorder %s261, 0
    %s264 = sadd.s32 %s263, 1
    %s265 = scalar_select %p262, %s263, %s264
    %p268 = pneg %p262
    %p269 = scmp.eq.s32.totalorder %s17, 1
    %p270 = por %p268, %p269
    %p271 = scmp.ne.s32.totalorder %s263, %s266
    %p272 = scmp.eq.s32.totalorder %s17, 0
    %p273 = por %p271, %p272
    %p274 = scmp.ne.s32.totalorder %s263, %s266
    %p275 = scmp.eq.s32.totalorder %s22, 1
    %p276 = por %p274, %p275
    %p277 = scmp.ne.s32.totalorder %s266, %s267
    %p278 = scmp.eq.s32.totalorder %s22, 0
    %p279 = por %p277, %p278
    %p280 = scmp.ne.s32.totalorder %s266, %s267
    %p281 = scmp.eq.s32.totalorder %s23, 1
    %p282 = por %p280, %p281
    %p284 = scmp.ne.s32.totalorder %s267, %s283
    %p285 = scmp.eq.s32.totalorder %s23, 0
    %p286 = por %p284, %p285
    %p287 = scmp.le.s32.totalorder 1, %s17
    %p288 = scmp.lt.s32.totalorder %s17, 3
    %p289 = pnand %p287, %p288
    %p290 = pneg %p289
    // Predicated region
    $region9: #{_fused_forward.1} parent=5 // pred_check
      _
    $region10: #{_fused_forward.1} parent=5 // pred_check_branch
      %292 = sbr.rel (%p289) target = $region12
    $region11: #{_fused_forward.1} parent=5 // pred_region
      %s293 = ssub.s32 %s17, 1
      // Predicated region
      $region13: #{_fused_forward.1} parent=11 // pred_check
        %p294 = pneg %p64
      $region14: #{_fused_forward.1} parent=11 // pred_check_branch
        %296 = sbr.rel (%p294) target = $region16
      $region15: #{_fused_forward.1} parent=11 // pred_region
        _
      $region16: #{_fused_forward.1} parent=11 // pred_fallthru
        _
      // Predicated region
      $region17: #{_fused_forward.1} parent=11 // pred_check
        %p297 = pneg %p85
      $region18: #{_fused_forward.1} parent=11 // pred_check_branch
        %299 = sbr.rel (%p297) target = $region20
      $region19: #{_fused_forward.1} parent=11 // pred_region
        _
      $region20: #{_fused_forward.1} parent=11 // pred_fallthru
        _
      // Predicated region
      $region21: #{_fused_forward.1} parent=11 // pred_check
        %p300 = pneg %p106
      $region22: #{_fused_forward.1} parent=11 // pred_check_branch
        %302 = sbr.rel (%p300) target = $region24
      $region23: #{_fused_forward.1} parent=11 // pred_region
        _
      $region24: #{_fused_forward.1} parent=11 // pred_fallthru
        _
      // Predicated region
      $region25: #{_fused_forward.1} parent=11 // pred_check
        %p303 = pneg %p127
      $region26: #{_fused_forward.1} parent=11 // pred_check_branch
        %305 = sbr.rel (%p303) target = $region28
      $region27: #{_fused_forward.1} parent=11 // pred_region
        _
      $region28: #{_fused_forward.1} parent=11 // pred_fallthru
        _
      // Predicated region
      $region29: #{_fused_forward.1} parent=11 // pred_check
        %p306 = pneg %p148
      $region30: #{_fused_forward.1} parent=11 // pred_check_branch
        %308 = sbr.rel (%p306) target = $region32
      $region31: #{_fused_forward.1} parent=11 // pred_region
        _
      $region32: #{_fused_forward.1} parent=11 // pred_fallthru
        _
      // Predicated region
      $region33: #{_fused_forward.1} parent=11 // pred_check
        %p309 = pneg %p169
      $region34: #{_fused_forward.1} parent=11 // pred_check_branch
        %311 = sbr.rel (%p309) target = $region36
      $region35: #{_fused_forward.1} parent=11 // pred_region
        _
      $region36: #{_fused_forward.1} parent=11 // pred_fallthru
        _
      // Predicated region
      $region37: #{_fused_forward.1} parent=11 // pred_check
        %p312 = pneg %p190
      $region38: #{_fused_forward.1} parent=11 // pred_check_branch
        %314 = sbr.rel (%p312) target = $region40
      $region39: #{_fused_forward.1} parent=11 // pred_region
        _
      $region40: #{_fused_forward.1} parent=11 // pred_fallthru
        _
      // Predicated region
      $region41: #{_fused_forward.1} parent=11 // pred_check
        %p315 = pneg %p211
      $region42: #{_fused_forward.1} parent=11 // pred_check_branch
        %317 = sbr.rel (%p315) target = $region44
      $region43: #{_fused_forward.1} parent=11 // pred_region
        _
      $region44: #{_fused_forward.1} parent=11 // pred_fallthru
        _
      // Predicated region
      $region45: #{_fused_forward.1} parent=11 // pred_check
        %p318 = pneg %p232
      $region46: #{_fused_forward.1} parent=11 // pred_check_branch
        %320 = sbr.rel (%p318) target = $region48
      $region47: #{_fused_forward.1} parent=11 // pred_region
        _
      $region48: #{_fused_forward.1} parent=11 // pred_fallthru
        _
      // Predicated region
      $region49: #{_fused_forward.1} parent=11 // pred_check
        %p321 = pneg %p253
      $region50: #{_fused_forward.1} parent=11 // pred_check_branch
        %323 = sbr.rel (%p321) target = $region52
      $region51: #{_fused_forward.1} parent=11 // pred_region
        _
      $region52: #{_fused_forward.1} parent=11 // pred_fallthru
        _
    $region12: #{_fused_forward.1} parent=5 // pred_fallthru
      _
    %p324 = scmp.lt.s32.totalorder %s17, 2
    // Predicated region
    $region53: #{_fused_forward.1} parent=5 // pred_check
      %p325 = pneg %p324
    $region54: #{_fused_forward.1} parent=5 // pred_check_branch
      %327 = sbr.rel (%p325) target = $region56
    $region55: #{_fused_forward.1} parent=5 // pred_region
      // Predicated region
      $region57: #{_fused_forward.1} parent=55 // pred_check
        %p328 = pneg %p37
      $region58: #{_fused_forward.1} parent=55 // pred_check_branch
        %330 = sbr.rel (%p328) target = $region60
      $region59: #{_fused_forward.1} parent=55 // pred_region
        %p331 = scmp.lt.s32.totalorder %s17, 1
        %s332 = scalar_select %p331, %s17, 1
        %s333 = smul.addr %s332, 16
        %s334 = smul.addr %s333, 8
        %s335 = scalar_lea.vmem %s0, %s334
      $region60: #{_fused_forward.1} parent=55 // pred_fallthru
        _
    $region56: #{_fused_forward.1} parent=5 // pred_fallthru
      _
    %p336 = scmp.le.s32.totalorder 1, %s17
    %p337 = scmp.lt.s32.totalorder %s17, 3
    %p338 = pnand %p336, %p337
    %p339 = pneg %p338
    // Predicated region
    $region61: #{_fused_forward.1} parent=5 // pred_check
      _
    $region62: #{_fused_forward.1} parent=5 // pred_check_branch
      %341 = sbr.rel (%p338) target = $region64
    $region63: #{_fused_forward.1} parent=5 // pred_region
      %s342 = ssub.s32 %s17, 1
      %p343 = scmp.lt.s32.totalorder %s22, 1
      %s344 = scalar_select %p343, %s22, 1
      %s345 = smul.addr %s344, 16
      %s346 = smul.addr %s345, 8
      %s347 = scalar_lea.vmem %s0, %s346
      %p348 = pneg %p43
      %p349 = pneg %p40
      %p350 = pneg %p64
      %p351 = pneg %p61
      %p352 = pneg %p85
      %p353 = pneg %p82
      %p354 = pneg %p106
      %p355 = pneg %p103
      %p356 = pneg %p127
      %p357 = pneg %p124
      %p358 = pneg %p148
      %p359 = pneg %p145
      %p360 = pneg %p169
      %p361 = pneg %p166
      %p362 = pneg %p190
      %p363 = pneg %p187
      %p364 = pneg %p211
      %p365 = pneg %p208
      %p366 = pneg %p232
      %p367 = pneg %p229
      %p368 = pneg %p253
      %p369 = pneg %p250
      %p370 = pneg %p279
      %p371 = pneg %p276
      %p372 = scmp.lt.s32.totalorder %s22, 1
      %s373 = scalar_select %p372, %s22, 1
      %s374 = smul.addr %s373, 4
      %s375 = smul.addr %s374, 8
      %s376 = scalar_lea.vmem %s11, %s375
      %p377 = scmp.lt.s32.totalorder %s22, 1
      %s378 = scalar_select %p377, %s22, 1
      %s379 = smul.addr %s378, 16
      %s380 = smul.addr %s379, 8
      %s381 = scalar_lea.vmem %s0, %s380
      %p382 = scmp.lt.s32.totalorder %s22, 1
      %s383 = scalar_select %p382, %s22, 1
      %s384 = smul.addr %s383, 4
      %s385 = smul.addr %s384, 8
      %s386 = scalar_lea.vmem %s11, %s385
      %v387 = vld [vmem:[%s1] sm:$0xff]
      %v388 = vld [vmem:[%s1 + $0x8] sm:$0xff]
      %v389 = vld [vmem:[%s1 + $0x10] sm:$0xff]
      %v390 = vld [vmem:[%s1 + $0x18] sm:$0xff]
      %v391 = vld [vmem:[%s1 + $0x20] sm:$0x3]
      %v392 = vld [vmem:[%s381] sm:$0xff]
      %v393 = vld [vmem:[%s381 + $0x8] sm:$0xff]
      %v394 = vld [vmem:[%s381 + $0x10] sm:$0xff]
      %v395 = vld [vmem:[%s381 + $0x18] sm:$0xff]
      %v396 = vld [vmem:[%s381 + $0x20] sm:$0xff]
      %v397 = vld [vmem:[%s381 + $0x28] sm:$0xff]
      %v398 = vld [vmem:[%s381 + $0x30] sm:$0xff]
      %v399 = vld [vmem:[%s381 + $0x38] sm:$0xff]
      %v400 = vld [vmem:[%s381 + $0x40] sm:$0xff]
      %v401 = vld [vmem:[%s381 + $0x48] sm:$0xff]
      %v402 = vld [vmem:[%s381 + $0x50] sm:$0xff]
      %v403 = vld [vmem:[%s381 + $0x58] sm:$0xff]
      %v404 = vld [vmem:[%s381 + $0x60] sm:$0xff]
      %v405 = vld [vmem:[%s381 + $0x68] sm:$0xff]
      %v406 = vld [vmem:[%s381 + $0x70] sm:$0xff]
      %v407 = vld [vmem:[%s381 + $0x78] sm:$0xff]
      %vm408 = vcmask 523264
      %v410 = vsel %vm408, %v387, 0
      %v413 = vsel %vm408, %v388, 0
      %v416 = vsel %vm408, %v389, 0
      %v419 = vsel %vm408, %v390, 0
      %v422 = vsel %vm408, %v391, 0
      %424 = vmatprep.subr.mxu0 %v393
      %425 = vmatpush1.msra.mxu0 %v392
      %426 = vmatprep.subr.mxu0 %v395
      %427 = vmatpush1.msra.mxu0 %v394
      %428 = vmatprep.subr.mxu0 %v397
      %429 = vmatpush1.msra.mxu0 %v396
      %430 = vmatprep.subr.mxu0 %v399
      %431 = vmatpush1.msra.mxu0 %v398
      %432 = vmatprep.subr.mxu0 %v401
      %433 = vmatpush1.msra.mxu0 %v400
      %434 = vmatprep.subr.mxu0 %v403
      %435 = vmatpush1.msra.mxu0 %v402
      %436 = vmatprep.subr.mxu0 %v405
      %437 = vmatpush1.msra.mxu0 %v404
      %438 = vmatprep.subr.mxu0 %v407
      %439 = vmatpush1.msra.mxu0 %v406
      %440 = vmatprep.subr.mxu0 0.0
      %441 = vmatpush1.msra.mxu0 0.0
      %442 = vmatprep.subr.mxu0 0.0
      %443 = vmatpush1.msra.mxu0 0.0
      %444 = vmatprep.subr.mxu0 0.0
      %445 = vmatpush1.msra.mxu0 0.0
      %446 = vmatprep.subr.mxu0 0.0
      %447 = vmatpush1.msra.mxu0 0.0
      %448 = vmatprep.subr.mxu0 0.0
      %449 = vmatpush1.msra.mxu0 0.0
      %450 = vmatprep.subr.mxu0 0.0
      %451 = vmatpush1.msra.mxu0 0.0
      %452 = vmatprep.subr.mxu0 0.0
      %453 = vmatpush1.msra.mxu0 0.0
      %454 = vmatprep.subr.mxu0 0.0
      %455 = vmatpush1.msra.mxu0 0.0
      %456 = vmatprep.subr.mxu0 0.0
      %457 = vmatpush1.msra.mxu0 0.0
      %458 = vmatprep.subr.mxu0 0.0
      %459 = vmatpush1.msra.mxu0 0.0
      %460 = vmatprep.subr.mxu0 0.0
      %461 = vmatpush1.msra.mxu0 0.0
      %462 = vmatprep.subr.mxu0 0.0
      %463 = vmatpush1.msra.mxu0 0.0
      %464 = vmatprep.subr.mxu0 0.0
      %465 = vmatpush1.msra.mxu0 0.0
      %466 = vmatprep.subr.mxu0 0.0
      %467 = vmatpush1.msra.mxu0 0.0
      %468 = vmatprep.subr.mxu0 0.0
      %469 = vmatpush1.msra.mxu0 0.0
      %470 = vmatprep.subr.mxu0 0.0
      %471 = vmatpush1.msra.mxu0 0.0
      %472 = vmatprep.subr.mxu0 0.0
      %473 = vmatpush1.msra.mxu0 0.0
      %474 = vmatprep.subr.mxu0 0.0
      %475 = vmatpush1.msra.mxu0 0.0
      %476 = vmatprep.subr.mxu0 0.0
      %477 = vmatpush1.msra.mxu0 0.0
      %478 = vmatprep.subr.mxu0 0.0
      %479 = vmatpush1.msra.mxu0 0.0
      %480 = vmatprep.subr.mxu0 0.0
      %481 = vmatpush1.msra.mxu0 0.0
      %482 = vmatprep.subr.mxu0 0.0
      %483 = vmatpush1.msra.mxu0 0.0
      %484 = vmatprep.subr.mxu0 0.0
      %485 = vmatpush1.msra.mxu0 0.0
      %486 = vmatprep.subr.mxu0 0.0
      %487 = vmatpush1.msra.mxu0 0.0
      %488 = vmatprep.mubr.f32.mxu0 0.0
      %489 = vmatmul.mubr.f32.gmra.mrb[0].mxu0 %v410
      %v490 = vpop.f32.mrb[0].mxu0
      %v491 = vadd.f32 0.0, %v490
      %v492 = vpop.f32.mrb[0].mxu0
      %v493 = vadd.f32 0.0, %v492
      %494 = vmatprep.mubr.f32.mxu0 0.0
      %495 = vmatmul.mubr.f32.gmra.mrb[0].mxu0 %v413
      %v496 = vpop.f32.mrb[0].mxu0
      %v497 = vadd.f32 0.0, %v496
      %v498 = vpop.f32.mrb[0].mxu0
      %v499 = vadd.f32 0.0, %v498
      %500 = vmatprep.mubr.f32.mxu0 0.0
      %501 = vmatmul.mubr.f32.gmra.mrb[0].mxu0 %v416
      %v502 = vpop.f32.mrb[0].mxu0
      %v503 = vadd.f32 0.0, %v502
      %v504 = vpop.f32.mrb[0].mxu0
      %v505 = vadd.f32 0.0, %v504
      %506 = vmatprep.mubr.f32.mxu0 0.0
      %507 = vmatmul.mubr.f32.gmra.mrb[0].mxu0 %v419
      %v508 = vpop.f32.mrb[0].mxu0
      %v509 = vadd.f32 0.0, %v508
      %v510 = vpop.f32.mrb[0].mxu0
      %v511 = vadd.f32 0.0, %v510
      %512 = vmatprep.mubr.f32.mxu0 0.0
      %513 = vmatmul.mubr.f32.gmra.mrb[0].mxu0 %v422
      %v514 = vpop.f32.mrb[0].mxu0
      %v515 = vadd.f32 0.0, %v514
      %v516 = vpop.f32.mrb[0].mxu0
      %v517 = vadd.f32 0.0, %v516
      %518 = vdwg.mxu0
      %v519 = vld [vmem:[%s2] sm:$0xff]
      %v520 = vld [vmem:[%s2 + $0x8] sm:$0xff]
      %v521 = vld [vmem:[%s2 + $0x10] sm:$0xff]
      %v522 = vld [vmem:[%s2 + $0x18] sm:$0xff]
      %v523 = vld [vmem:[%s2 + $0x20] sm:$0xff]
      %v524 = vld [vmem:[%s2 + $0x28] sm:$0xff]
      %v525 = vld [vmem:[%s2 + $0x30] sm:$0xff]
      %v526 = vld [vmem:[%s2 + $0x38] sm:$0xff]
      %v527 = vld [vmem:[%s2 + $0x40] sm:$0xff]
      %v528 = vld [vmem:[%s2 + $0x48] sm:$0xff]
      %v529 = vld [vmem:[%s2 + $0x50] sm:$0xff]
      %v530 = vld [vmem:[%s2 + $0x58] sm:$0xff]
      %v531 = vld [vmem:[%s2 + $0x60] sm:$0xff]
      %v532 = vld [vmem:[%s2 + $0x68] sm:$0xff]
      %v533 = vld [vmem:[%s2 + $0x70] sm:$0xff]
      %v534 = vld [vmem:[%s2 + $0x78] sm:$0xff]
      %v535 = vld [vmem:[%s2 + $0x80] sm:$0xff]
      %v536 = vld [vmem:[%s2 + $0x88] sm:$0xff]
      %v537 = vld [vmem:[%s2 + $0x90] sm:$0xff]
      %v538 = vld [vmem:[%s2 + $0x98] sm:$0xff]
      %v539 = vld [vmem:[%s2 + $0xa0] sm:$0xff]
      %v540 = vld [vmem:[%s2 + $0xa8] sm:$0xff]
      %v541 = vld [vmem:[%s2 + $0xb0] sm:$0xff]
      %v542 = vld [vmem:[%s2 + $0xb8] sm:$0xff]
      %v544 = vsel %vm408, %v493, 0
      %v547 = vsel %vm408, %v499, 0
      %v550 = vsel %vm408, %v505, 0
      %v553 = vsel %vm408, %v511, 0
      %v556 = vsel %vm408, %v517, 0
      %558 = vmatprep.subr.mxu0 0.0
      %559 = vmatpush1.msra.mxu0 %v519
      %560 = vmatprep.subr.mxu0 0.0
      %561 = vmatpush1.msra.mxu0 %v520
      %562 = vmatprep.subr.mxu0 0.0
      %563 = vmatpush1.msra.mxu0 %v521
      %564 = vmatprep.subr.mxu0 0.0
      %565 = vmatpush1.msra.mxu0 %v522
      %566 = vmatprep.subr.mxu0 0.0
      %567 = vmatpush1.msra.mxu0 %v523
      %568 = vmatprep.subr.mxu0 0.0
      %569 = vmatpush1.msra.mxu0 %v524
      %570 = vmatprep.subr.mxu0 0.0
      %571 = vmatpush1.msra.mxu0 %v525
      %572 = vmatprep.subr.mxu0 0.0
      %573 = vmatpush1.msra.mxu0 %v526
      %574 = vmatprep.subr.mxu0 0.0
      %575 = vmatpush1.msra.mxu0 %v527
      %576 = vmatprep.subr.mxu0 0.0
      %577 = vmatpush1.msra.mxu0 %v528
      %578 = vmatprep.subr.mxu0 0.0
      %579 = vmatpush1.msra.mxu0 %v529
      %580 = vmatprep.subr.mxu0 0.0
      %581 = vmatpush1.msra.mxu0 %v530
      %582 = vmatprep.subr.mxu0 0.0
      %583 = vmatpush1.msra.mxu0 %v531
      %584 = vmatprep.subr.mxu0 0.0
      %585 = vmatpush1.msra.mxu0 %v532
      %586 = vmatprep.subr.mxu0 0.0
      %587 = vmatpush1.msra.mxu0 %v533
      %588 = vmatprep.subr.mxu0 0.0
      %589 = vmatpush1.msra.mxu0 %v534
      %590 = vmatprep.subr.mxu0 0.0
      %591 = vmatpush1.msra.mxu0 %v535
      %592 = vmatprep.subr.mxu0 0.0
      %593 = vmatpush1.msra.mxu0 %v536
      %594 = vmatprep.subr.mxu0 0.0
      %595 = vmatpush1.msra.mxu0 %v537
      %596 = vmatprep.subr.mxu0 0.0
      %597 = vmatpush1.msra.mxu0 %v538
      %598 = vmatprep.subr.mxu0 0.0
      %599 = vmatpush1.msra.mxu0 %v539
      %600 = vmatprep.subr.mxu0 0.0
      %601 = vmatpush1.msra.mxu0 %v540
      %602 = vmatprep.subr.mxu0 0.0
      %603 = vmatpush1.msra.mxu0 %v541
      %604 = vmatprep.subr.mxu0 0.0
      %605 = vmatpush1.msra.mxu0 %v542
      %606 = vmatprep.subr.mxu0 0.0
      %607 = vmatpush1.msra.mxu0 0.0
      %608 = vmatprep.subr.mxu0 0.0
      %609 = vmatpush1.msra.mxu0 0.0
      %610 = vmatprep.subr.mxu0 0.0
      %611 = vmatpush1.msra.mxu0 0.0
      %612 = vmatprep.subr.mxu0 0.0
      %613 = vmatpush1.msra.mxu0 0.0
      %614 = vmatprep.subr.mxu0 0.0
      %615 = vmatpush1.msra.mxu0 0.0
      %616 = vmatprep.subr.mxu0 0.0
      %617 = vmatpush1.msra.mxu0 0.0
      %618 = vmatprep.subr.mxu0 0.0
      %619 = vmatpush1.msra.mxu0 0.0
      %620 = vmatprep.subr.mxu0 0.0
      %621 = vmatpush1.msra.mxu0 0.0
      %622 = vmatprep.mubr.f32.mxu0 %v544
      %623 = vmatmul.mubr.f32.gmra.mrb[0].mxu0 %v491
      %v624 = vpop.f32.mrb[0].mxu0
      %v625 = vadd.f32 0.0, %v624
      %v626 = vpop.f32.mrb[0].mxu0
      %627 = vmatprep.mubr.f32.mxu0 %v547
      %628 = vmatmul.mubr.f32.gmra.mrb[0].mxu0 %v497
      %v629 = vpop.f32.mrb[0].mxu0
      %v630 = vadd.f32 0.0, %v629
      %v631 = vpop.f32.mrb[0].mxu0
      %632 = vmatprep.mubr.f32.mxu0 %v550
      %633 = vmatmul.mubr.f32.gmra.mrb[0].mxu0 %v503
      %v634 = vpop.f32.mrb[0].mxu0
      %v635 = vadd.f32 0.0, %v634
      %v636 = vpop.f32.mrb[0].mxu0
      %637 = vmatprep.mubr.f32.mxu0 %v553
      %638 = vmatmul.mubr.f32.gmra.mrb[0].mxu0 %v509
      %v639 = vpop.f32.mrb[0].mxu0
      %v640 = vadd.f32 0.0, %v639
      %v641 = vpop.f32.mrb[0].mxu0
      %642 = vmatprep.mubr.f32.mxu0 %v556
      %643 = vmatmul.mubr.f32.gmra.mrb[0].mxu0 %v515
      %v644 = vpop.f32.mrb[0].mxu0
      %v645 = vadd.f32 0.0, %v644
      %v646 = vpop.f32.mrb[0].mxu0
      %647 = vdwg.mxu0
      %v648 = vmul.f32 %v625, 2.0
      %v649 = vmul.f32 %v630, 2.0
      %v650 = vmul.f32 %v635, 2.0
      %v651 = vmul.f32 %v640, 2.0
      %v652 = vmul.f32 %v645, 2.0
      %v653 = vld [vmem:[%s3] sm:$0xff]
      %v654 = vld [vmem:[%s3 + $0x8] sm:$0xff]
      %v655 = vld [vmem:[%s3 + $0x10] sm:$0xff]
      %v656 = vld [vmem:[%s3 + $0x18] sm:$0xff]
      %v657 = vld [vmem:[%s3 + $0x20] sm:$0x3]
      %v658 = vsub.f32 %v648, %v653
      %v659 = vsub.f32 %v649, %v654
      %v660 = vsub.f32 %v650, %v655
      %v661 = vsub.f32 %v651, %v656
      %v662 = vsub.f32 %v652, %v657
      %v663 = vld [vmem:[%s4] sm:$0xff]
      %v664 = vld [vmem:[%s4 + $0x8] sm:$0xff]
      %v665 = vld [vmem:[%s4 + $0x10] sm:$0xff]
      %v666 = vld [vmem:[%s4 + $0x18] sm:$0xff]
      %v667 = vld [vmem:[%s4 + $0x20] sm:$0xff]
      %v668 = vld [vmem:[%s4 + $0x28] sm:$0xff]
      %v669 = vld [vmem:[%s4 + $0x30] sm:$0xff]
      %v670 = vld [vmem:[%s4 + $0x38] sm:$0xff]
      %v671 = vld [vmem:[%s4 + $0x40] sm:$0xff]
      %v672 = vld [vmem:[%s4 + $0x48] sm:$0xff]
      %v673 = vld [vmem:[%s4 + $0x50] sm:$0xff]
      %v674 = vld [vmem:[%s4 + $0x58] sm:$0xff]
      %v675 = vld [vmem:[%s4 + $0x60] sm:$0xff]
      %v676 = vld [vmem:[%s4 + $0x68] sm:$0xff]
      %v677 = vld [vmem:[%s4 + $0x70] sm:$0xff]
      %v678 = vld [vmem:[%s4 + $0x78] sm:$0xff]
      %v679 = vld [vmem:[%s4 + $0x80] sm:$0xff]
      %v680 = vld [vmem:[%s4 + $0x88] sm:$0xff]
      %v681 = vld [vmem:[%s4 + $0x90] sm:$0xff]
      %v682 = vld [vmem:[%s4 + $0x98] sm:$0xff]
      %v683 = vld [vmem:[%s4 + $0xa0] sm:$0xff]
      %v684 = vld [vmem:[%s4 + $0xa8] sm:$0xff]
      %v685 = vld [vmem:[%s4 + $0xb0] sm:$0xff]
      %v686 = vld [vmem:[%s4 + $0xb8] sm:$0xff]
      %v687 = vld [vmem:[%s4 + $0xc0] sm:$0xff]
      %v688 = vld [vmem:[%s4 + $0xc8] sm:$0xff]
      %v689 = vld [vmem:[%s4 + $0xd0] sm:$0xff]
      %v690 = vld [vmem:[%s4 + $0xd8] sm:$0xff]
      %v691 = vld [vmem:[%s4 + $0xe0] sm:$0xff]
      %v692 = vld [vmem:[%s4 + $0xe8] sm:$0xff]
      %v693 = vld [vmem:[%s4 + $0xf0] sm:$0xff]
      %v694 = vld [vmem:[%s4 + $0xf8] sm:$0xff]
      %v695 = vld [vmem:[%s4 + $0x100] sm:$0xff]
      %v696 = vld [vmem:[%s4 + $0x108] sm:$0xff]
      %v697 = vld [vmem:[%s4 + $0x110] sm:$0xff]
      %v698 = vld [vmem:[%s4 + $0x118] sm:$0xff]
      %v699 = vld [vmem:[%s4 + $0x120] sm:$0xff]
      %v700 = vld [vmem:[%s4 + $0x128] sm:$0xff]
      %v701 = vld [vmem:[%s4 + $0x130] sm:$0xff]
      %v702 = vld [vmem:[%s4 + $0x138] sm:$0xff]
      %v703 = vld [vmem:[%s4 + $0x140] sm:$0xff]
      %v704 = vld [vmem:[%s4 + $0x148] sm:$0xff]
      %v705 = vld [vmem:[%s4 + $0x150] sm:$0xff]
      %v706 = vld [vmem:[%s4 + $0x158] sm:$0xff]
      %v707 = vld [vmem:[%s4 + $0x160] sm:$0xff]
      %v708 = vld [vmem:[%s4 + $0x168] sm:$0xff]
      %v709 = vld [vmem:[%s4 + $0x170] sm:$0xff]
      %v710 = vld [vmem:[%s4 + $0x178] sm:$0xff]
      %v711 = vld [vmem:[%s4 + $0x180] sm:$0xff]
      %v712 = vld [vmem:[%s4 + $0x188] sm:$0xff]
      %v713 = vld [vmem:[%s4 + $0x190] sm:$0xff]
      %v714 = vld [vmem:[%s4 + $0x198] sm:$0xff]
      %v715 = vld [vmem:[%s4 + $0x1a0] sm:$0xff]
      %v716 = vld [vmem:[%s4 + $0x1a8] sm:$0xff]
      %v717 = vld [vmem:[%s4 + $0x1b0] sm:$0xff]
      %v718 = vld [vmem:[%s4 + $0x1b8] sm:$0xff]
      %v719 = vld [vmem:[%s4 + $0x1c0] sm:$0xff]
      %v720 = vld [vmem:[%s4 + $0x1c8] sm:$0xff]
      %v721 = vld [vmem:[%s4 + $0x1d0] sm:$0xff]
      %v722 = vld [vmem:[%s4 + $0x1d8] sm:$0xff]
      %v723 = vld [vmem:[%s4 + $0x1e0] sm:$0xff]
      %v724 = vld [vmem:[%s4 + $0x1e8] sm:$0xff]
      %v725 = vld [vmem:[%s4 + $0x1f0] sm:$0xff]
      %v726 = vld [vmem:[%s4 + $0x1f8] sm:$0xff]
      %v727 = vld [vmem:[%s4 + $0x200] sm:$0xff]
      %v728 = vld [vmem:[%s4 + $0x208] sm:$0xff]
      %v729 = vld [vmem:[%s4 + $0x210] sm:$0xff]
      %v730 = vld [vmem:[%s4 + $0x218] sm:$0xff]
      %v731 = vld [vmem:[%s4 + $0x220] sm:$0xff]
      %v732 = vld [vmem:[%s4 + $0x228] sm:$0xff]
      %v733 = vld [vmem:[%s4 + $0x230] sm:$0xff]
      %v734 = vld [vmem:[%s4 + $0x238] sm:$0xff]
      %v735 = vld [vmem:[%s4 + $0x240] sm:$0xff]
      %v736 = vld [vmem:[%s4 + $0x248] sm:$0xff]
      %v737 = vld [vmem:[%s4 + $0x250] sm:$0xff]
      %v738 = vld [vmem:[%s4 + $0x258] sm:$0xff]
      %v739 = vld [vmem:[%s4 + $0x260] sm:$0xff]
      %v740 = vld [vmem:[%s4 + $0x268] sm:$0xff]
      %v741 = vld [vmem:[%s4 + $0x270] sm:$0xff]
      %v742 = vld [vmem:[%s4 + $0x278] sm:$0xff]
      %v743 = vld [vmem:[%s4 + $0x280] sm:$0xff]
      %v744 = vld [vmem:[%s4 + $0x288] sm:$0xff]
      %v745 = vld [vmem:[%s4 + $0x290] sm:$0xff]
      %v746 = vld [vmem:[%s4 + $0x298] sm:$0xff]
      %v747 = vld [vmem:[%s4 + $0x2a0] sm:$0xff]
      %v748 = vld [vmem:[%s4 + $0x2a8] sm:$0xff]
      %v749 = vld [vmem:[%s4 + $0x2b0] sm:$0xff]
      %v750 = vld [vmem:[%s4 + $0x2b8] sm:$0xff]
      %v751 = vld [vmem:[%s4 + $0x2c0] sm:$0xff]
      %v752 = vld [vmem:[%s4 + $0x2c8] sm:$0xff]
      %v753 = vld [vmem:[%s4 + $0x2d0] sm:$0xff]
      %v754 = vld [vmem:[%s4 + $0x2d8] sm:$0xff]
      %v755 = vld [vmem:[%s4 + $0x2e0] sm:$0xff]
      %v756 = vld [vmem:[%s4 + $0x2e8] sm:$0xff]
      %v757 = vld [vmem:[%s4 + $0x2f0] sm:$0xff]
      %v758 = vld [vmem:[%s4 + $0x2f8] sm:$0xff]
      %v759 = vld [vmem:[%s4 + $0x300] sm:$0x3f]
      %v760 = vld [vmem:[%s4 + $0x308] sm:$0x3f]
      %v761 = vld [vmem:[%s4 + $0x310] sm:$0x3f]
      %v762 = vld [vmem:[%s4 + $0x318] sm:$0x3f]
      %v763 = vld [vmem:[%s4 + $0x320] sm:$0x3f]
      %v764 = vld [vmem:[%s4 + $0x328] sm:$0x3f]
      %v765 = vld [vmem:[%s4 + $0x330] sm:$0x3f]
      %v766 = vld [vmem:[%s4 + $0x338] sm:$0x3f]
      %s767 = scalar_lea.vmem %s4, 832
      %v768 = vld [vmem:[%s767] sm:$0xff]
      %v769 = vld [vmem:[%s767 + $0x8] sm:$0xff]
      %v770 = vld [vmem:[%s767 + $0x10] sm:$0xff]
      %v771 = vld [vmem:[%s767 + $0x18] sm:$0xff]
      %v772 = vld [vmem:[%s767 + $0x20] sm:$0xff]
      %v773 = vld [vmem:[%s767 + $0x28] sm:$0xff]
      %v774 = vld [vmem:[%s767 + $0x30] sm:$0xff]
      %v775 = vld [vmem:[%s767 + $0x38] sm:$0xff]
      %v776 = vld [vmem:[%s767 + $0x40] sm:$0xff]
      %v777 = vld [vmem:[%s767 + $0x48] sm:$0xff]
      %v778 = vld [vmem:[%s767 + $0x50] sm:$0xff]
      %v779 = vld [vmem:[%s767 + $0x58] sm:$0xff]
      %v780 = vld [vmem:[%s767 + $0x60] sm:$0xff]
      %v781 = vld [vmem:[%s767 + $0x68] sm:$0xff]
      %v782 = vld [vmem:[%s767 + $0x70] sm:$0xff]
      %v783 = vld [vmem:[%s767 + $0x78] sm:$0xff]
      %v784 = vld [vmem:[%s767 + $0x80] sm:$0xff]
      %v785 = vld [vmem:[%s767 + $0x88] sm:$0xff]
      %v786 = vld [vmem:[%s767 + $0x90] sm:$0xff]
      %v787 = vld [vmem:[%s767 + $0x98] sm:$0xff]
      %v788 = vld [vmem:[%s767 + $0xa0] sm:$0xff]
      %v789 = vld [vmem:[%s767 + $0xa8] sm:$0xff]
      %v790 = vld [vmem:[%s767 + $0xb0] sm:$0xff]
      %v791 = vld [vmem:[%s767 + $0xb8] sm:$0xff]
      %v792 = vld [vmem:[%s767 + $0xc0] sm:$0xff]
      %v793 = vld [vmem:[%s767 + $0xc8] sm:$0xff]
      %v794 = vld [vmem:[%s767 + $0xd0] sm:$0xff]
      %v795 = vld [vmem:[%s767 + $0xd8] sm:$0xff]
      %v796 = vld [vmem:[%s767 + $0xe0] sm:$0xff]
      %v797 = vld [vmem:[%s767 + $0xe8] sm:$0xff]
      %v798 = vld [vmem:[%s767 + $0xf0] sm:$0xff]
      %v799 = vld [vmem:[%s767 + $0xf8] sm:$0xff]
      %v800 = vld [vmem:[%s767 + $0x100] sm:$0xff]
      %v801 = vld [vmem:[%s767 + $0x108] sm:$0xff]
      %v802 = vld [vmem:[%s767 + $0x110] sm:$0xff]
      %v803 = vld [vmem:[%s767 + $0x118] sm:$0xff]
      %v804 = vld [vmem:[%s767 + $0x120] sm:$0xff]
      %v805 = vld [vmem:[%s767 + $0x128] sm:$0xff]
      %v806 = vld [vmem:[%s767 + $0x130] sm:$0xff]
      %v807 = vld [vmem:[%s767 + $0x138] sm:$0xff]
      %v808 = vld [vmem:[%s767 + $0x140] sm:$0xff]
      %v809 = vld [vmem:[%s767 + $0x148] sm:$0xff]
      %v810 = vld [vmem:[%s767 + $0x150] sm:$0xff]
      %v811 = vld [vmem:[%s767 + $0x158] sm:$0xff]
      %v812 = vld [vmem:[%s767 + $0x160] sm:$0xff]
      %v813 = vld [vmem:[%s767 + $0x168] sm:$0xff]
      %v814 = vld [vmem:[%s767 + $0x170] sm:$0xff]
      %v815 = vld [vmem:[%s767 + $0x178] sm:$0xff]
      %v816 = vld [vmem:[%s767 + $0x180] sm:$0xff]
      %v817 = vld [vmem:[%s767 + $0x188] sm:$0xff]
      %v818 = vld [vmem:[%s767 + $0x190] sm:$0xff]
      %v819 = vld [vmem:[%s767 + $0x198] sm:$0xff]
      %v820 = vld [vmem:[%s767 + $0x1a0] sm:$0xff]
      %v821 = vld [vmem:[%s767 + $0x1a8] sm:$0xff]
      %v822 = vld [vmem:[%s767 + $0x1b0] sm:$0xff]
      %v823 = vld [vmem:[%s767 + $0x1b8] sm:$0xff]
      %v824 = vld [vmem:[%s767 + $0x1c0] sm:$0xff]
      %v825 = vld [vmem:[%s767 + $0x1c8] sm:$0xff]
      %v826 = vld [vmem:[%s767 + $0x1d0] sm:$0xff]
      %v827 = vld [vmem:[%s767 + $0x1d8] sm:$0xff]
      %v828 = vld [vmem:[%s767 + $0x1e0] sm:$0xff]
      %v829 = vld [vmem:[%s767 + $0x1e8] sm:$0xff]
      %v830 = vld [vmem:[%s767 + $0x1f0] sm:$0xff]
      %v831 = vld [vmem:[%s767 + $0x1f8] sm:$0xff]
      %v832 = vld [vmem:[%s767 + $0x200] sm:$0xff]
      %v833 = vld [vmem:[%s767 + $0x208] sm:$0xff]
      %v834 = vld [vmem:[%s767 + $0x210] sm:$0xff]
      %v835 = vld [vmem:[%s767 + $0x218] sm:$0xff]
      %v836 = vld [vmem:[%s767 + $0x220] sm:$0xff]
      %v837 = vld [vmem:[%s767 + $0x228] sm:$0xff]
      %v838 = vld [vmem:[%s767 + $0x230] sm:$0xff]
      %v839 = vld [vmem:[%s767 + $0x238] sm:$0xff]
      %v840 = vld [vmem:[%s767 + $0x240] sm:$0xff]
      %v841 = vld [vmem:[%s767 + $0x248] sm:$0xff]
      %v842 = vld [vmem:[%s767 + $0x250] sm:$0xff]
      %v843 = vld [vmem:[%s767 + $0x258] sm:$0xff]
      %v844 = vld [vmem:[%s767 + $0x260] sm:$0xff]
      %v845 = vld [vmem:[%s767 + $0x268] sm:$0xff]
      %v846 = vld [vmem:[%s767 + $0x270] sm:$0xff]
      %v847 = vld [vmem:[%s767 + $0x278] sm:$0xff]
      %v848 = vld [vmem:[%s767 + $0x280] sm:$0xff]
      %v849 = vld [vmem:[%s767 + $0x288] sm:$0xff]
      %v850 = vld [vmem:[%s767 + $0x290] sm:$0xff]
      %v851 = vld [vmem:[%s767 + $0x298] sm:$0xff]
      %v852 = vld [vmem:[%s767 + $0x2a0] sm:$0xff]
      %v853 = vld [vmem:[%s767 + $0x2a8] sm:$0xff]
      %v854 = vld [vmem:[%s767 + $0x2b0] sm:$0xff]
      %v855 = vld [vmem:[%s767 + $0x2b8] sm:$0xff]
      %v856 = vld [vmem:[%s767 + $0x2c0] sm:$0xff]
      %v857 = vld [vmem:[%s767 + $0x2c8] sm:$0xff]
      %v858 = vld [vmem:[%s767 + $0x2d0] sm:$0xff]
      %v859 = vld [vmem:[%s767 + $0x2d8] sm:$0xff]
      %v860 = vld [vmem:[%s767 + $0x2e0] sm:$0xff]
      %v861 = vld [vmem:[%s767 + $0x2e8] sm:$0xff]
      %v862 = vld [vmem:[%s767 + $0x2f0] sm:$0xff]
      %v863 = vld [vmem:[%s767 + $0x2f8] sm:$0xff]
      %v864 = vld [vmem:[%s767 + $0x300] sm:$0x3f]
      %v865 = vld [vmem:[%s767 + $0x308] sm:$0x3f]
      %v866 = vld [vmem:[%s767 + $0x310] sm:$0x3f]
      %v867 = vld [vmem:[%s767 + $0x318] sm:$0x3f]
      %v868 = vld [vmem:[%s767 + $0x320] sm:$0x3f]
      %v869 = vld [vmem:[%s767 + $0x328] sm:$0x3f]
      %v870 = vld [vmem:[%s767 + $0x330] sm:$0x3f]
      %v871 = vld [vmem:[%s767 + $0x338] sm:$0x3f]
      %vm877 = vcmask 1046528
      %v878 = vrot.slane %v658, 1
      %v879 = vrot.slane %v659, 1
      %v880 = vsel %vm877, %v878, %v879
      %v881 = vrot.slane %v660, 1
      %v882 = vsel %vm877, %v879, %v881
      %v883 = vrot.slane %v661, 1
      %v884 = vsel %vm877, %v881, %v883
      %v885 = vrot.slane %v662, 1
      %v886 = vsel %vm877, %v883, %v885
      %vm887 = vcmask 834560
      %v888 = vsel %vm887, %v880, 0
      %v890 = vsel %vm887, %v882, 0
      %v892 = vsel %vm887, %v884, 0
      %v894 = vsel %vm887, %v886, 0
      %vm896 = vcmask 1045504
      %v898 = vsel %vm896, %v864, 0
      %v901 = vsel %vm896, %v865, 0
      %v904 = vsel %vm896, %v866, 0
      %v907 = vsel %vm896, %v867, 0
      %v910 = vsel %vm896, %v868, 0
      %v913 = vsel %vm896, %v869, 0
      %v916 = vsel %vm896, %v870, 0
      %v919 = vsel %vm896, %v871, 0
      %921 = vmatprep.subr.mxu0 %v769
      %922 = vmatpush1.msra.mxu0 %v768
      %923 = vmatprep.subr.mxu0 %v777
      %924 = vmatpush1.msra.mxu0 %v776
      %925 = vmatprep.subr.mxu0 %v785
      %926 = vmatpush1.msra.mxu0 %v784
      %927 = vmatprep.subr.mxu0 %v793
      %928 = vmatpush1.msra.mxu0 %v792
      %929 = vmatprep.subr.mxu0 %v801
      %930 = vmatpush1.msra.mxu0 %v800
      %931 = vmatprep.subr.mxu0 %v809
      %932 = vmatpush1.msra.mxu0 %v808
      %933 = vmatprep.subr.mxu0 %v817
      %934 = vmatpush1.msra.mxu0 %v816
      %935 = vmatprep.subr.mxu0 %v825
      %936 = vmatpush1.msra.mxu0 %v824
      %937 = vmatprep.subr.mxu0 %v833
      %938 = vmatpush1.msra.mxu0 %v832
      %939 = vmatprep.subr.mxu0 %v841
      %940 = vmatpush1.msra.mxu0 %v840
      %941 = vmatprep.subr.mxu0 %v849
      %942 = vmatpush1.msra.mxu0 %v848
      %943 = vmatprep.subr.mxu0 %v857
      %944 = vmatpush1.msra.mxu0 %v856
      %945 = vmatprep.subr.mxu0 %v901
      %946 = vmatpush1.msra.mxu0 %v898
      %947 = vmatprep.subr.mxu0 0.0
      %948 = vmatpush1.msra.mxu0 0.0
      %949 = vmatprep.subr.mxu0 0.0
      %950 = vmatpush1.msra.mxu0 0.0
      %951 = vmatprep.subr.mxu0 0.0
      %952 = vmatpush1.msra.mxu0 0.0
      %953 = vmatprep.subr.mxu0 0.0
      %954 = vmatpush1.msra.mxu0 0.0
      %955 = vmatprep.subr.mxu0 0.0
      %956 = vmatpush1.msra.mxu0 0.0
      %957 = vmatprep.subr.mxu0 0.0
      %958 = vmatpush1.msra.mxu0 0.0
      %959 = vmatprep.subr.mxu0 0.0
      %960 = vmatpush1.msra.mxu0 0.0
      %961 = vmatprep.subr.mxu0 0.0
      %962 = vmatpush1.msra.mxu0 0.0
      %963 = vmatprep.subr.mxu0 0.0
      %964 = vmatpush1.msra.mxu0 0.0
      %965 = vmatprep.subr.mxu0 0.0
      %966 = vmatpush1.msra.mxu0 0.0
      %967 = vmatprep.subr.mxu0 0.0
      %968 = vmatpush1.msra.mxu0 0.0
      %969 = vmatprep.subr.mxu0 0.0
      %970 = vmatpush1.msra.mxu0 0.0
      %971 = vmatprep.subr.mxu0 0.0
      %972 = vmatpush1.msra.mxu0 0.0
      %973 = vmatprep.subr.mxu0 0.0
      %974 = vmatpush1.msra.mxu0 0.0
      %975 = vmatprep.subr.mxu0 0.0
      %976 = vmatpush1.msra.mxu0 0.0
      %977 = vmatprep.subr.mxu0 0.0
      %978 = vmatpush1.msra.mxu0 0.0
      %979 = vmatprep.subr.mxu0 0.0
      %980 = vmatpush1.msra.mxu0 0.0
      %981 = vmatprep.subr.mxu0 0.0
      %982 = vmatpush1.msra.mxu0 0.0
      %983 = vmatprep.subr.mxu0 0.0
      %984 = vmatpush1.msra.mxu0 0.0
      %985 = vmatprep.mubr.f32.mxu0 0.0
      %986 = vmatmul.mubr.f32.gmra.mrb[0].mxu0 %v888
      %v987 = vpop.f32.mrb[0].mxu0
      %v988 = vadd.f32 0.0, %v987
      %v989 = vpop.f32.mrb[0].mxu0
      %v990 = vadd.f32 0.0, %v989
      %991 = vmatprep.mubr.f32.mxu0 0.0
      %992 = vmatmul.mubr.f32.gmra.mrb[0].mxu0 %v890
      %v993 = vpop.f32.mrb[0].mxu0
      %v994 = vadd.f32 0.0, %v993
      %v995 = vpop.f32.mrb[0].mxu0
      %v996 = vadd.f32 0.0, %v995
      %997 = vmatprep.mubr.f32.mxu0 0.0
      %998 = vmatmul.mubr.f32.gmra.mrb[0].mxu0 %v892
      %v999 = vpop.f32.mrb[0].mxu0
      %v1000 = vadd.f32 0.0, %v999
      %v1001 = vpop.f32.mrb[0].mxu0
      %v1002 = vadd.f32 0.0, %v1001
      %1003 = vmatprep.mubr.f32.mxu0 0.0
      %1004 = vmatmul.mubr.f32.gmra.mrb[0].mxu0 %v894
      %v1005 = vpop.f32.mrb[0].mxu0
      %v1006 = vadd.f32 0.0, %v1005
      %v1007 = vpop.f32.mrb[0].mxu0
      %v1008 = vadd.f32 0.0, %v1007
      %1009 = vdwg.mxu0
      %1010 = vmatprep.subr.mxu0 %v771
      %1011 = vmatpush1.msra.mxu0 %v770
      %1012 = vmatprep.subr.mxu0 %v779
      %1013 = vmatpush1.msra.mxu0 %v778
      %1014 = vmatprep.subr.mxu0 %v787
      %1015 = vmatpush1.msra.mxu0 %v786
      %1016 = vmatprep.subr.mxu0 %v795
      %1017 = vmatpush1.msra.mxu0 %v794
      %1018 = vmatprep.subr.mxu0 %v803
      %1019 = vmatpush1.msra.mxu0 %v802
      %1020 = vmatprep.subr.mxu0 %v811
      %1021 = vmatpush1.msra.mxu0 %v810
      %1022 = vmatprep.subr.mxu0 %v819
      %1023 = vmatpush1.msra.mxu0 %v818
      %1024 = vmatprep.subr.mxu0 %v827
      %1025 = vmatpush1.msra.mxu0 %v826
      %1026 = vmatprep.subr.mxu0 %v835
      %1027 = vmatpush1.msra.mxu0 %v834
      %1028 = vmatprep.subr.mxu0 %v843
      %1029 = vmatpush1.msra.mxu0 %v842
      %1030 = vmatprep.subr.mxu0 %v851
      %1031 = vmatpush1.msra.mxu0 %v850
      %1032 = vmatprep.subr.mxu0 %v859
      %1033 = vmatpush1.msra.mxu0 %v858
      %1034 = vmatprep.subr.mxu0 %v907
      %1035 = vmatpush1.msra.mxu0 %v904
      %1036 = vmatprep.subr.mxu0 0.0
      %1037 = vmatpush1.msra.mxu0 0.0
      %1038 = vmatprep.subr.mxu0 0.0
      %1039 = vmatpush1.msra.mxu0 0.0
      %1040 = vmatprep.subr.mxu0 0.0
      %1041 = vmatpush1.msra.mxu0 0.0
      %1042 = vmatprep.subr.mxu0 0.0
      %1043 = vmatpush1.msra.mxu0 0.0
      %1044 = vmatprep.subr.mxu0 0.0
      %1045 = vmatpush1.msra.mxu0 0.0
      %1046 = vmatprep.subr.mxu0 0.0
      %1047 = vmatpush1.msra.mxu0 0.0
      %1048 = vmatprep.subr.mxu0 0.0
      %1049 = vmatpush1.msra.mxu0 0.0
      %1050 = vmatprep.subr.mxu0 0.0
      %1051 = vmatpush1.msra.mxu0 0.0
      %1052 = vmatprep.subr.mxu0 0.0
      %1053 = vmatpush1.msra.mxu0 0.0
      %1054 = vmatprep.subr.mxu0 0.0
      %1055 = vmatpush1.msra.mxu0 0.0
      %1056 = vmatprep.subr.mxu0 0.0
      %1057 = vmatpush1.msra.mxu0 0.0
      %1058 = vmatprep.subr.mxu0 0.0
      %1059 = vmatpush1.msra.mxu0 0.0
      %1060 = vmatprep.subr.mxu0 0.0
      %1061 = vmatpush1.msra.mxu0 0.0
      %1062 = vmatprep.subr.mxu0 0.0
      %1063 = vmatpush1.msra.mxu0 0.0
      %1064 = vmatprep.subr.mxu0 0.0
      %1065 = vmatpush1.msra.mxu0 0.0
      %1066 = vmatprep.subr.mxu0 0.0
      %1067 = vmatpush1.msra.mxu0 0.0
      %1068 = vmatprep.subr.mxu0 0.0
      %1069 = vmatpush1.msra.mxu0 0.0
      %1070 = vmatprep.subr.mxu0 0.0
      %1071 = vmatpush1.msra.mxu0 0.0
      %1072 = vmatprep.subr.mxu0 0.0
      %1073 = vmatpush1.msra.mxu0 0.0
      %1074 = vmatprep.mubr.f32.mxu0 0.0
      %1075 = vmatmul.mubr.f32.gmra.mrb[0].mxu0 %v888
      %v1076 = vpop.f32.mrb[0].mxu0
      %v1077 = vadd.f32 0.0, %v1076
      %v1078 = vpop.f32.mrb[0].mxu0
      %v1079 = vadd.f32 0.0, %v1078
      %1080 = vmatprep.mubr.f32.mxu0 0.0
      %1081 = vmatmul.mubr.f32.gmra.mrb[0].mxu0 %v890
      %v1082 = vpop.f32.mrb[0].mxu0
      %v1083 = vadd.f32 0.0, %v1082
      %v1084 = vpop.f32.mrb[0].mxu0
      %v1085 = vadd.f32 0.0, %v1084
      %1086 = vmatprep.mubr.f32.mxu0 0.0
      %1087 = vmatmul.mubr.f32.gmra.mrb[0].mxu0 %v892
      %v1088 = vpop.f32.mrb[0].mxu0
      %v1089 = vadd.f32 0.0, %v1088
      %v1090 = vpop.f32.mrb[0].mxu0
      %v1091 = vadd.f32 0.0, %v1090
      %1092 = vmatprep.mubr.f32.mxu0 0.0
      %1093 = vmatmul.mubr.f32.gmra.mrb[0].mxu0 %v894
      %v1094 = vpop.f32.mrb[0].mxu0
      %v1095 = vadd.f32 0.0, %v1094
      %v1096 = vpop.f32.mrb[0].mxu0
      %v1097 = vadd.f32 0.0, %v1096
      %1098 = vdwg.mxu0
      %1099 = vmatprep.subr.mxu0 %v773
      %1100 = vmatpush1.msra.mxu0 %v772
      %1101 = vmatprep.subr.mxu0 %v781
      %1102 = vmatpush1.msra.mxu0 %v780
      %1103 = vmatprep.subr.mxu0 %v789
      %1104 = vmatpush1.msra.mxu0 %v788
      %1105 = vmatprep.subr.mxu0 %v797
      %1106 = vmatpush1.msra.mxu0 %v796
      %1107 = vmatprep.subr.mxu0 %v805
      %1108 = vmatpush1.msra.mxu0 %v804
      %1109 = vmatprep.subr.mxu0 %v813
      %1110 = vmatpush1.msra.mxu0 %v812
      %1111 = vmatprep.subr.mxu0 %v821
      %1112 = vmatpush1.msra.mxu0 %v820
      %1113 = vmatprep.subr.mxu0 %v829
      %1114 = vmatpush1.msra.mxu0 %v828
      %1115 = vmatprep.subr.mxu0 %v837
      %1116 = vmatpush1.msra.mxu0 %v836
      %1117 = vmatprep.subr.mxu0 %v845
      %1118 = vmatpush1.msra.mxu0 %v844
      %1119 = vmatprep.subr.mxu0 %v853
      %1120 = vmatpush1.msra.mxu0 %v852
      %1121 = vmatprep.subr.mxu0 %v861
      %1122 = vmatpush1.msra.mxu0 %v860
      %1123 = vmatprep.subr.mxu0 %v913
      %1124 = vmatpush1.msra.mxu0 %v910
      %1125 = vmatprep.subr.mxu0 0.0
      %1126 = vmatpush1.msra.mxu0 0.0
      %1127 = vmatprep.subr.mxu0 0.0
      %1128 = vmatpush1.msra.mxu0 0.0
      %1129 = vmatprep.subr.mxu0 0.0
      %1130 = vmatpush1.msra.mxu0 0.0
      %1131 = vmatprep.subr.mxu0 0.0
      %1132 = vmatpush1.msra.mxu0 0.0
      %1133 = vmatprep.subr.mxu0 0.0
      %1134 = vmatpush1.msra.mxu0 0.0
      %1135 = vmatprep.subr.mxu0 0.0
      %1136 = vmatpush1.msra.mxu0 0.0
      %1137 = vmatprep.subr.mxu0 0.0
      %1138 = vmatpush1.msra.mxu0 0.0
      %1139 = vmatprep.subr.mxu0 0.0
      %1140 = vmatpush1.msra.mxu0 0.0
      %1141 = vmatprep.subr.mxu0 0.0
      %1142 = vmatpush1.msra.mxu0 0.0
      %1143 = vmatprep.subr.mxu0 0.0
      %1144 = vmatpush1.msra.mxu0 0.0
      %1145 = vmatprep.subr.mxu0 0.0
      %1146 = vmatpush1.msra.mxu0 0.0
      %1147 = vmatprep.subr.mxu0 0.0
      %1148 = vmatpush1.msra.mxu0 0.0
      %1149 = vmatprep.subr.mxu0 0.0
      %1150 = vmatpush1.msra.mxu0 0.0
      %1151 = vmatprep.subr.mxu0 0.0
      %1152 = vmatpush1.msra.mxu0 0.0
      %1153 = vmatprep.subr.mxu0 0.0
      %1154 = vmatpush1.msra.mxu0 0.0
      %1155 = vmatprep.subr.mxu0 0.0
      %1156 = vmatpush1.msra.mxu0 0.0
      %1157 = vmatprep.subr.mxu0 0.0
      %1158 = vmatpush1.msra.mxu0 0.0
      %1159 = vmatprep.subr.mxu0 0.0
      %1160 = vmatpush1.msra.mxu0 0.0
      %1161 = vmatprep.subr.mxu0 0.0
      %1162 = vmatpush1.msra.mxu0 0.0
      %1163 = vmatprep.mubr.f32.mxu0 0.0
      %1164 = vmatmul.mubr.f32.gmra.mrb[0].mxu0 %v888
      %v1165 = vpop.f32.mrb[0].mxu0
      %v1166 = vadd.f32 0.0, %v1165
      %v1167 = vpop.f32.mrb[0].mxu0
      %v1168 = vadd.f32 0.0, %v1167
      %1169 = vmatprep.mubr.f32.mxu0 0.0
      %1170 = vmatmul.mubr.f32.gmra.mrb[0].mxu0 %v890
      %v1171 = vpop.f32.mrb[0].mxu0
      %v1172 = vadd.f32 0.0, %v1171
      %v1173 = vpop.f32.mrb[0].mxu0
      %v1174 = vadd.f32 0.0, %v1173
      %1175 = vmatprep.mubr.f32.mxu0 0.0
      %1176 = vmatmul.mubr.f32.gmra.mrb[0].mxu0 %v892
      %v1177 = vpop.f32.mrb[0].mxu0
      %v1178 = vadd.f32 0.0, %v1177
      %v1179 = vpop.f32.mrb[0].mxu0
      %v1180 = vadd.f32 0.0, %v1179
      %1181 = vmatprep.mubr.f32.mxu0 0.0
      %1182 = vmatmul.mubr.f32.gmra.mrb[0].mxu0 %v894
      %v1183 = vpop.f32.mrb[0].mxu0
      %v1184 = vadd.f32 0.0, %v1183
      %v1185 = vpop.f32.mrb[0].mxu0
      %v1186 = vadd.f32 0.0, %v1185
      %1187 = vdwg.mxu0
      %1188 = vmatprep.subr.mxu0 %v775
      %1189 = vmatpush1.msra.mxu0 %v774
      %1190 = vmatprep.subr.mxu0 %v783
      %1191 = vmatpush1.msra.mxu0 %v782
      %1192 = vmatprep.subr.mxu0 %v791
      %1193 = vmatpush1.msra.mxu0 %v790
      %1194 = vmatprep.subr.mxu0 %v799
      %1195 = vmatpush1.msra.mxu0 %v798
      %1196 = vmatprep.subr.mxu0 %v807
      %1197 = vmatpush1.msra.mxu0 %v806
      %1198 = vmatprep.subr.mxu0 %v815
      %1199 = vmatpush1.msra.mxu0 %v814
      %1200 = vmatprep.subr.mxu0 %v823
      %1201 = vmatpush1.msra.mxu0 %v822
      %1202 = vmatprep.subr.mxu0 %v831
      %1203 = vmatpush1.msra.mxu0 %v830
      %1204 = vmatprep.subr.mxu0 %v839
      %1205 = vmatpush1.msra.mxu0 %v838
      %1206 = vmatprep.subr.mxu0 %v847
      %1207 = vmatpush1.msra.mxu0 %v846
      %1208 = vmatprep.subr.mxu0 %v855
      %1209 = vmatpush1.msra.mxu0 %v854
      %1210 = vmatprep.subr.mxu0 %v863
      %1211 = vmatpush1.msra.mxu0 %v862
      %1212 = vmatprep.subr.mxu0 %v919
      %1213 = vmatpush1.msra.mxu0 %v916
      %1214 = vmatprep.subr.mxu0 0.0
      %1215 = vmatpush1.msra.mxu0 0.0
      %1216 = vmatprep.subr.mxu0 0.0
      %1217 = vmatpush1.msra.mxu0 0.0
      %1218 = vmatprep.subr.mxu0 0.0
      %1219 = vmatpush1.msra.mxu0 0.0
      %1220 = vmatprep.subr.mxu0 0.0
      %1221 = vmatpush1.msra.mxu0 0.0
      %1222 = vmatprep.subr.mxu0 0.0
      %1223 = vmatpush1.msra.mxu0 0.0
      %1224 = vmatprep.subr.mxu0 0.0
      %1225 = vmatpush1.msra.mxu0 0.0
      %1226 = vmatprep.subr.mxu0 0.0
      %1227 = vmatpush1.msra.mxu0 0.0
      %1228 = vmatprep.subr.mxu0 0.0
      %1229 = vmatpush1.msra.mxu0 0.0
      %1230 = vmatprep.subr.mxu0 0.0
      %1231 = vmatpush1.msra.mxu0 0.0
      %1232 = vmatprep.subr.mxu0 0.0
      %1233 = vmatpush1.msra.mxu0 0.0
      %1234 = vmatprep.subr.mxu0 0.0
      %1235 = vmatpush1.msra.mxu0 0.0
      %1236 = vmatprep.subr.mxu0 0.0
      %1237 = vmatpush1.msra.mxu0 0.0
      %1238 = vmatprep.subr.mxu0 0.0
      %1239 = vmatpush1.msra.mxu0 0.0
      %1240 = vmatprep.subr.mxu0 0.0
      %1241 = vmatpush1.msra.mxu0 0.0
      %1242 = vmatprep.subr.mxu0 0.0
      %1243 = vmatpush1.msra.mxu0 0.0
      %1244 = vmatprep.subr.mxu0 0.0
      %1245 = vmatpush1.msra.mxu0 0.0
      %1246 = vmatprep.subr.mxu0 0.0
      %1247 = vmatpush1.msra.mxu0 0.0
      %1248 = vmatprep.subr.mxu0 0.0
      %1249 = vmatpush1.msra.mxu0 0.0
      %1250 = vmatprep.subr.mxu0 0.0
      %1251 = vmatpush1.msra.mxu0 0.0
      %1252 = vmatprep.mubr.f32.mxu0 0.0
      %1253 = vmatmul.mubr.f32.gmra.mrb[0].mxu0 %v888
      %v1254 = vpop.f32.mrb[0].mxu0
      %v1255 = vadd.f32 0.0, %v1254
      %v1256 = vpop.f32.mrb[0].mxu0
      %v1257 = vadd.f32 0.0, %v1256
      %1258 = vmatprep.mubr.f32.mxu0 0.0
      %1259 = vmatmul.mubr.f32.gmra.mrb[0].mxu0 %v890
      %v1260 = vpop.f32.mrb[0].mxu0
      %v1261 = vadd.f32 0.0, %v1260
      %v1262 = vpop.f32.mrb[0].mxu0
      %v1263 = vadd.f32 0.0, %v1262
      %1264 = vmatprep.mubr.f32.mxu0 0.0
      %1265 = vmatmul.mubr.f32.gmra.mrb[0].mxu0 %v892
      %v1266 = vpop.f32.mrb[0].mxu0
      %v1267 = vadd.f32 0.0, %v1266
      %v1268 = vpop.f32.mrb[0].mxu0
      %v1269 = vadd.f32 0.0, %v1268
      %1270 = vmatprep.mubr.f32.mxu0 0.0
      %1271 = vmatmul.mubr.f32.gmra.mrb[0].mxu0 %v894
      %v1272 = vpop.f32.mrb[0].mxu0
      %v1273 = vadd.f32 0.0, %v1272
      %v1274 = vpop.f32.mrb[0].mxu0
      %v1275 = vadd.f32 0.0, %v1274
      %1276 = vdwg.mxu0
      %v1277 = vsel %vm887, %v658, 0
      %v1279 = vsel %vm887, %v659, 0
      %v1281 = vsel %vm887, %v660, 0
      %v1283 = vsel %vm887, %v661, 0
      %v1286 = vsel %vm896, %v759, 0
      %v1289 = vsel %vm896, %v760, 0
      %v1292 = vsel %vm896, %v761, 0
      %v1295 = vsel %vm896, %v762, 0
      %v1298 = vsel %vm896, %v763, 0
      %v1301 = vsel %vm896, %v764, 0
      %v1304 = vsel %vm896, %v765, 0
      %v1307 = vsel %vm896, %v766, 0
      %1309 = vmatprep.subr.mxu0 %v664
      %1310 = vmatpush1.msra.mxu0 %v663
      %1311 = vmatprep.subr.mxu0 %v672
      %1312 = vmatpush1.msra.mxu0 %v671
      %1313 = vmatprep.subr.mxu0 %v680
      %1314 = vmatpush1.msra.mxu0 %v679
      %1315 = vmatprep.subr.mxu0 %v688
      %1316 = vmatpush1.msra.mxu0 %v687
      %1317 = vmatprep.subr.mxu0 %v696
      %1318 = vmatpush1.msra.mxu0 %v695
      %1319 = vmatprep.subr.mxu0 %v704
      %1320 = vmatpush1.msra.mxu0 %v703
      %1321 = vmatprep.subr.mxu0 %v712
      %1322 = vmatpush1.msra.mxu0 %v711
      %1323 = vmatprep.subr.mxu0 %v720
      %1324 = vmatpush1.msra.mxu0 %v719
      %1325 = vmatprep.subr.mxu0 %v728
      %1326 = vmatpush1.msra.mxu0 %v727
      %1327 = vmatprep.subr.mxu0 %v736
      %1328 = vmatpush1.msra.mxu0 %v735
      %1329 = vmatprep.subr.mxu0 %v744
      %1330 = vmatpush1.msra.mxu0 %v743
      %1331 = vmatprep.subr.mxu0 %v752
      %1332 = vmatpush1.msra.mxu0 %v751
      %1333 = vmatprep.subr.mxu0 %v1289
      %1334 = vmatpush1.msra.mxu0 %v1286
      %1335 = vmatprep.subr.mxu0 0.0
      %1336 = vmatpush1.msra.mxu0 0.0
      %1337 = vmatprep.subr.mxu0 0.0
      %1338 = vmatpush1.msra.mxu0 0.0
      %1339 = vmatprep.subr.mxu0 0.0
      %1340 = vmatpush1.msra.mxu0 0.0
      %1341 = vmatprep.subr.mxu0 0.0
      %1342 = vmatpush1.msra.mxu0 0.0
      %1343 = vmatprep.subr.mxu0 0.0
      %1344 = vmatpush1.msra.mxu0 0.0
      %1345 = vmatprep.subr.mxu0 0.0
      %1346 = vmatpush1.msra.mxu0 0.0
      %1347 = vmatprep.subr.mxu0 0.0
      %1348 = vmatpush1.msra.mxu0 0.0
      %1349 = vmatprep.subr.mxu0 0.0
      %1350 = vmatpush1.msra.mxu0 0.0
      %1351 = vmatprep.subr.mxu0 0.0
      %1352 = vmatpush1.msra.mxu0 0.0
      %1353 = vmatprep.subr.mxu0 0.0
      %1354 = vmatpush1.msra.mxu0 0.0
      %1355 = vmatprep.subr.mxu0 0.0
      %1356 = vmatpush1.msra.mxu0 0.0
      %1357 = vmatprep.subr.mxu0 0.0
      %1358 = vmatpush1.msra.mxu0 0.0
      %1359 = vmatprep.subr.mxu0 0.0
      %1360 = vmatpush1.msra.mxu0 0.0
      %1361 = vmatprep.subr.mxu0 0.0
      %1362 = vmatpush1.msra.mxu0 0.0
      %1363 = vmatprep.subr.mxu0 0.0
      %1364 = vmatpush1.msra.mxu0 0.0
      %1365 = vmatprep.subr.mxu0 0.0
      %1366 = vmatpush1.msra.mxu0 0.0
      %1367 = vmatprep.subr.mxu0 0.0
      %1368 = vmatpush1.msra.mxu0 0.0
      %1369 = vmatprep.subr.mxu0 0.0
      %1370 = vmatpush1.msra.mxu0 0.0
      %1371 = vmatprep.subr.mxu0 0.0
      %1372 = vmatpush1.msra.mxu0 0.0
      %1373 = vmatprep.mubr.f32.mxu0 0.0
      %1374 = vmatmul.mubr.f32.gmra.mrb[0].mxu0 %v1277
      %v1375 = vpop.f32.mrb[0].mxu0
      %v1376 = vadd.f32 %v988, %v1375
      %v1377 = vpop.f32.mrb[0].mxu0
      %v1378 = vadd.f32 %v990, %v1377
      %1379 = vmatprep.mubr.f32.mxu0 0.0
      %1380 = vmatmul.mubr.f32.gmra.mrb[0].mxu0 %v1279
      %v1381 = vpop.f32.mrb[0].mxu0
      %v1382 = vadd.f32 %v994, %v1381
      %v1383 = vpop.f32.mrb[0].mxu0
      %v1384 = vadd.f32 %v996, %v1383
      %1385 = vmatprep.mubr.f32.mxu0 0.0
      %1386 = vmatmul.mubr.f32.gmra.mrb[0].mxu0 %v1281
      %v1387 = vpop.f32.mrb[0].mxu0
      %v1388 = vadd.f32 %v1000, %v1387
      %v1389 = vpop.f32.mrb[0].mxu0
      %v1390 = vadd.f32 %v1002, %v1389
      %1391 = vmatprep.mubr.f32.mxu0 0.0
      %1392 = vmatmul.mubr.f32.gmra.mrb[0].mxu0 %v1283
      %v1393 = vpop.f32.mrb[0].mxu0
      %v1394 = vadd.f32 %v1006, %v1393
      %v1395 = vpop.f32.mrb[0].mxu0
      %v1396 = vadd.f32 %v1008, %v1395
      %1397 = vdwg.mxu0
      %1398 = vmatprep.subr.mxu0 %v666
      %1399 = vmatpush1.msra.mxu0 %v665
      %1400 = vmatprep.subr.mxu0 %v674
      %1401 = vmatpush1.msra.mxu0 %v673
      %1402 = vmatprep.subr.mxu0 %v682
      %1403 = vmatpush1.msra.mxu0 %v681
      %1404 = vmatprep.subr.mxu0 %v690
      %1405 = vmatpush1.msra.mxu0 %v689
      %1406 = vmatprep.subr.mxu0 %v698
      %1407 = vmatpush1.msra.mxu0 %v697
      %1408 = vmatprep.subr.mxu0 %v706
      %1409 = vmatpush1.msra.mxu0 %v705
      %1410 = vmatprep.subr.mxu0 %v714
      %1411 = vmatpush1.msra.mxu0 %v713
      %1412 = vmatprep.subr.mxu0 %v722
      %1413 = vmatpush1.msra.mxu0 %v721
      %1414 = vmatprep.subr.mxu0 %v730
      %1415 = vmatpush1.msra.mxu0 %v729
      %1416 = vmatprep.subr.mxu0 %v738
      %1417 = vmatpush1.msra.mxu0 %v737
      %1418 = vmatprep.subr.mxu0 %v746
      %1419 = vmatpush1.msra.mxu0 %v745
      %1420 = vmatprep.subr.mxu0 %v754
      %1421 = vmatpush1.msra.mxu0 %v753
      %1422 = vmatprep.subr.mxu0 %v1295
      %1423 = vmatpush1.msra.mxu0 %v1292
      %1424 = vmatprep.subr.mxu0 0.0
      %1425 = vmatpush1.msra.mxu0 0.0
      %1426 = vmatprep.subr.mxu0 0.0
      %1427 = vmatpush1.msra.mxu0 0.0
      %1428 = vmatprep.subr.mxu0 0.0
      %1429 = vmatpush1.msra.mxu0 0.0
      %1430 = vmatprep.subr.mxu0 0.0
      %1431 = vmatpush1.msra.mxu0 0.0
      %1432 = vmatprep.subr.mxu0 0.0
      %1433 = vmatpush1.msra.mxu0 0.0
      %1434 = vmatprep.subr.mxu0 0.0
      %1435 = vmatpush1.msra.mxu0 0.0
      %1436 = vmatprep.subr.mxu0 0.0
      %1437 = vmatpush1.msra.mxu0 0.0
      %1438 = vmatprep.subr.mxu0 0.0
      %1439 = vmatpush1.msra.mxu0 0.0
      %1440 = vmatprep.subr.mxu0 0.0
      %1441 = vmatpush1.msra.mxu0 0.0
      %1442 = vmatprep.subr.mxu0 0.0
      %1443 = vmatpush1.msra.mxu0 0.0
      %1444 = vmatprep.subr.mxu0 0.0
      %1445 = vmatpush1.msra.mxu0 0.0
      %1446 = vmatprep.subr.mxu0 0.0
      %1447 = vmatpush1.msra.mxu0 0.0
      %1448 = vmatprep.subr.mxu0 0.0
      %1449 = vmatpush1.msra.mxu0 0.0
      %1450 = vmatprep.subr.mxu0 0.0
      %1451 = vmatpush1.msra.mxu0 0.0
      %1452 = vmatprep.subr.mxu0 0.0
      %1453 = vmatpush1.msra.mxu0 0.0
      %1454 = vmatprep.subr.mxu0 0.0
      %1455 = vmatpush1.msra.mxu0 0.0
      %1456 = vmatprep.subr.mxu0 0.0
      %1457 = vmatpush1.msra.mxu0 0.0
      %1458 = vmatprep.subr.mxu0 0.0
      %1459 = vmatpush1.msra.mxu0 0.0
      %1460 = vmatprep.subr.mxu0 0.0
      %1461 = vmatpush1.msra.mxu0 0.0
      %1462 = vmatprep.mubr.f32.mxu0 0.0
      %1463 = vmatmul.mubr.f32.gmra.mrb[0].mxu0 %v1277
      %v1464 = vpop.f32.mrb[0].mxu0
      %v1465 = vadd.f32 %v1077, %v1464
      %v1466 = vpop.f32.mrb[0].mxu0
      %v1467 = vadd.f32 %v1079, %v1466
      %1468 = vmatprep.mubr.f32.mxu0 0.0
      %1469 = vmatmul.mubr.f32.gmra.mrb[0].mxu0 %v1279
      %v1470 = vpop.f32.mrb[0].mxu0
      %v1471 = vadd.f32 %v1083, %v1470
      %v1472 = vpop.f32.mrb[0].mxu0
      %v1473 = vadd.f32 %v1085, %v1472
      %1474 = vmatprep.mubr.f32.mxu0 0.0
      %1475 = vmatmul.mubr.f32.gmra.mrb[0].mxu0 %v1281
      %v1476 = vpop.f32.mrb[0].mxu0
      %v1477 = vadd.f32 %v1089, %v1476
      %v1478 = vpop.f32.mrb[0].mxu0
      %v1479 = vadd.f32 %v1091, %v1478
      %1480 = vmatprep.mubr.f32.mxu0 0.0
      %1481 = vmatmul.mubr.f32.gmra.mrb[0].mxu0 %v1283
      %v1482 = vpop.f32.mrb[0].mxu0
      %v1483 = vadd.f32 %v1095, %v1482
      %v1484 = vpop.f32.mrb[0].mxu0
      %v1485 = vadd.f32 %v1097, %v1484
      %1486 = vdwg.mxu0
      %1487 = vmatprep.subr.mxu0 %v668
      %1488 = vmatpush1.msra.mxu0 %v667
      %1489 = vmatprep.subr.mxu0 %v676
      %1490 = vmatpush1.msra.mxu0 %v675
      %1491 = vmatprep.subr.mxu0 %v684
      %1492 = vmatpush1.msra.mxu0 %v683
      %1493 = vmatprep.subr.mxu0 %v692
      %1494 = vmatpush1.msra.mxu0 %v691
      %1495 = vmatprep.subr.mxu0 %v700
      %1496 = vmatpush1.msra.mxu0 %v699
      %1497 = vmatprep.subr.mxu0 %v708
      %1498 = vmatpush1.msra.mxu0 %v707
      %1499 = vmatprep.subr.mxu0 %v716
      %1500 = vmatpush1.msra.mxu0 %v715
      %1501 = vmatprep.subr.mxu0 %v724
      %1502 = vmatpush1.msra.mxu0 %v723
      %1503 = vmatprep.subr.mxu0 %v732
      %1504 = vmatpush1.msra.mxu0 %v731
      %1505 = vmatprep.subr.mxu0 %v740
      %1506 = vmatpush1.msra.mxu0 %v739
      %1507 = vmatprep.subr.mxu0 %v748
      %1508 = vmatpush1.msra.mxu0 %v747
      %1509 = vmatprep.subr.mxu0 %v756
      %1510 = vmatpush1.msra.mxu0 %v755
      %1511 = vmatprep.subr.mxu0 %v1301
      %1512 = vmatpush1.msra.mxu0 %v1298
      %1513 = vmatprep.subr.mxu0 0.0
      %1514 = vmatpush1.msra.mxu0 0.0
      %1515 = vmatprep.subr.mxu0 0.0
      %1516 = vmatpush1.msra.mxu0 0.0
      %1517 = vmatprep.subr.mxu0 0.0
      %1518 = vmatpush1.msra.mxu0 0.0
      %1519 = vmatprep.subr.mxu0 0.0
      %1520 = vmatpush1.msra.mxu0 0.0
      %1521 = vmatprep.subr.mxu0 0.0
      %1522 = vmatpush1.msra.mxu0 0.0
      %1523 = vmatprep.subr.mxu0 0.0
      %1524 = vmatpush1.msra.mxu0 0.0
      %1525 = vmatprep.subr.mxu0 0.0
      %1526 = vmatpush1.msra.mxu0 0.0
      %1527 = vmatprep.subr.mxu0 0.0
      %1528 = vmatpush1.msra.mxu0 0.0
      %1529 = vmatprep.subr.mxu0 0.0
      %1530 = vmatpush1.msra.mxu0 0.0
      %1531 = vmatprep.subr.mxu0 0.0
      %1532 = vmatpush1.msra.mxu0 0.0
      %1533 = vmatprep.subr.mxu0 0.0
      %1534 = vmatpush1.msra.mxu0 0.0
      %1535 = vmatprep.subr.mxu0 0.0
      %1536 = vmatpush1.msra.mxu0 0.0
      %1537 = vmatprep.subr.mxu0 0.0
      %1538 = vmatpush1.msra.mxu0 0.0
      %1539 = vmatprep.subr.mxu0 0.0
      %1540 = vmatpush1.msra.mxu0 0.0
      %1541 = vmatprep.subr.mxu0 0.0
      %1542 = vmatpush1.msra.mxu0 0.0
      %1543 = vmatprep.subr.mxu0 0.0
      %1544 = vmatpush1.msra.mxu0 0.0
      %1545 = vmatprep.subr.mxu0 0.0
      %1546 = vmatpush1.msra.mxu0 0.0
      %1547 = vmatprep.subr.mxu0 0.0
      %1548 = vmatpush1.msra.mxu0 0.0
      %1549 = vmatprep.subr.mxu0 0.0
      %1550 = vmatpush1.msra.mxu0 0.0
      %1551 = vmatprep.mubr.f32.mxu0 0.0
      %1552 = vmatmul.mubr.f32.gmra.mrb[0].mxu0 %v1277
      %v1553 = vpop.f32.mrb[0].mxu0
      %v1554 = vadd.f32 %v1166, %v1553
      %v1555 = vpop.f32.mrb[0].mxu0
      %v1556 = vadd.f32 %v1168, %v1555
      %1557 = vmatprep.mubr.f32.mxu0 0.0
      %1558 = vmatmul.mubr.f32.gmra.mrb[0].mxu0 %v1279
      %v1559 = vpop.f32.mrb[0].mxu0
      %v1560 = vadd.f32 %v1172, %v1559
      %v1561 = vpop.f32.mrb[0].mxu0
      %v1562 = vadd.f32 %v1174, %v1561
      %1563 = vmatprep.mubr.f32.mxu0 0.0
      %1564 = vmatmul.mubr.f32.gmra.mrb[0].mxu0 %v1281
      %v1565 = vpop.f32.mrb[0].mxu0
      %v1566 = vadd.f32 %v1178, %v1565
      %v1567 = vpop.f32.mrb[0].mxu0
      %v1568 = vadd.f32 %v1180, %v1567
      %1569 = vmatprep.mubr.f32.mxu0 0.0
      %1570 = vmatmul.mubr.f32.gmra.mrb[0].mxu0 %v1283
      %v1571 = vpop.f32.mrb[0].mxu0
      %v1572 = vadd.f32 %v1184, %v1571
      %v1573 = vpop.f32.mrb[0].mxu0
      %v1574 = vadd.f32 %v1186, %v1573
      %1575 = vdwg.mxu0
      %1576 = vmatprep.subr.mxu0 %v670
      %1577 = vmatpush1.msra.mxu0 %v669
      %1578 = vmatprep.subr.mxu0 %v678
      %1579 = vmatpush1.msra.mxu0 %v677
      %1580 = vmatprep.subr.mxu0 %v686
      %1581 = vmatpush1.msra.mxu0 %v685
      %1582 = vmatprep.subr.mxu0 %v694
      %1583 = vmatpush1.msra.mxu0 %v693
      %1584 = vmatprep.subr.mxu0 %v702
      %1585 = vmatpush1.msra.mxu0 %v701
      %1586 = vmatprep.subr.mxu0 %v710
      %1587 = vmatpush1.msra.mxu0 %v709
      %1588 = vmatprep.subr.mxu0 %v718
      %1589 = vmatpush1.msra.mxu0 %v717
      %1590 = vmatprep.subr.mxu0 %v726
      %1591 = vmatpush1.msra.mxu0 %v725
      %1592 = vmatprep.subr.mxu0 %v734
      %1593 = vmatpush1.msra.mxu0 %v733
      %1594 = vmatprep.subr.mxu0 %v742
      %1595 = vmatpush1.msra.mxu0 %v741
      %1596 = vmatprep.subr.mxu0 %v750
      %1597 = vmatpush1.msra.mxu0 %v749
      %1598 = vmatprep.subr.mxu0 %v758
      %1599 = vmatpush1.msra.mxu0 %v757
      %1600 = vmatprep.subr.mxu0 %v1307
      %1601 = vmatpush1.msra.mxu0 %v1304
      %1602 = vmatprep.subr.mxu0 0.0
      %1603 = vmatpush1.msra.mxu0 0.0
      %1604 = vmatprep.subr.mxu0 0.0
      %1605 = vmatpush1.msra.mxu0 0.0
      %1606 = vmatprep.subr.mxu0 0.0
      %1607 = vmatpush1.msra.mxu0 0.0
      %1608 = vmatprep.subr.mxu0 0.0
      %1609 = vmatpush1.msra.mxu0 0.0
      %1610 = vmatprep.subr.mxu0 0.0
      %1611 = vmatpush1.msra.mxu0 0.0
      %1612 = vmatprep.subr.mxu0 0.0
      %1613 = vmatpush1.msra.mxu0 0.0
      %1614 = vmatprep.subr.mxu0 0.0
      %1615 = vmatpush1.msra.mxu0 0.0
      %1616 = vmatprep.subr.mxu0 0.0
      %1617 = vmatpush1.msra.mxu0 0.0
      %1618 = vmatprep.subr.mxu0 0.0
      %1619 = vmatpush1.msra.mxu0 0.0
      %1620 = vmatprep.subr.mxu0 0.0
      %1621 = vmatpush1.msra.mxu0 0.0
      %1622 = vmatprep.subr.mxu0 0.0
      %1623 = vmatpush1.msra.mxu0 0.0
      %1624 = vmatprep.subr.mxu0 0.0
      %1625 = vmatpush1.msra.mxu0 0.0
      %1626 = vmatprep.subr.mxu0 0.0
      %1627 = vmatpush1.msra.mxu0 0.0
      %1628 = vmatprep.subr.mxu0 0.0
      %1629 = vmatpush1.msra.mxu0 0.0
      %1630 = vmatprep.subr.mxu0 0.0
      %1631 = vmatpush1.msra.mxu0 0.0
      %1632 = vmatprep.subr.mxu0 0.0
      %1633 = vmatpush1.msra.mxu0 0.0
      %1634 = vmatprep.subr.mxu0 0.0
      %1635 = vmatpush1.msra.mxu0 0.0
      %1636 = vmatprep.subr.mxu0 0.0
      %1637 = vmatpush1.msra.mxu0 0.0
      %1638 = vmatprep.subr.mxu0 0.0
      %1639 = vmatpush1.msra.mxu0 0.0
      %1640 = vmatprep.mubr.f32.mxu0 0.0
      %1641 = vmatmul.mubr.f32.gmra.mrb[0].mxu0 %v1277
      %v1642 = vpop.f32.mrb[0].mxu0
      %v1643 = vadd.f32 %v1255, %v1642
      %v1644 = vpop.f32.mrb[0].mxu0
      %v1645 = vadd.f32 %v1257, %v1644
      %1646 = vmatprep.mubr.f32.mxu0 0.0
      %1647 = vmatmul.mubr.f32.gmra.mrb[0].mxu0 %v1279
      %v1648 = vpop.f32.mrb[0].mxu0
      %v1649 = vadd.f32 %v1261, %v1648
      %v1650 = vpop.f32.mrb[0].mxu0
      %v1651 = vadd.f32 %v1263, %v1650
      %1652 = vmatprep.mubr.f32.mxu0 0.0
      %1653 = vmatmul.mubr.f32.gmra.mrb[0].mxu0 %v1281
      %v1654 = vpop.f32.mrb[0].mxu0
      %v1655 = vadd.f32 %v1267, %v1654
      %v1656 = vpop.f32.mrb[0].mxu0
      %v1657 = vadd.f32 %v1269, %v1656
      %1658 = vmatprep.mubr.f32.mxu0 0.0
      %1659 = vmatmul.mubr.f32.gmra.mrb[0].mxu0 %v1283
      %v1660 = vpop.f32.mrb[0].mxu0
      %v1661 = vadd.f32 %v1273, %v1660
      %v1662 = vpop.f32.mrb[0].mxu0
      %v1663 = vadd.f32 %v1275, %v1662
      %1664 = vdwg.mxu0
      %s1665 = scalar_lea.vmem %s4, 1664
      %v1666 = vld [vmem:[%s1665] sm:$0xff]
      %v1667 = vld [vmem:[%s1665 + $0x8] sm:$0xff]
      %v1668 = vld [vmem:[%s1665 + $0x10] sm:$0xff]
      %v1669 = vld [vmem:[%s1665 + $0x18] sm:$0xff]
      %v1670 = vld [vmem:[%s1665 + $0x20] sm:$0xff]
      %v1671 = vld [vmem:[%s1665 + $0x28] sm:$0xff]
      %v1672 = vld [vmem:[%s1665 + $0x30] sm:$0xff]
      %v1673 = vld [vmem:[%s1665 + $0x38] sm:$0xff]
      %v1674 = vld [vmem:[%s1665 + $0x40] sm:$0xff]
      %v1675 = vld [vmem:[%s1665 + $0x48] sm:$0xff]
      %v1676 = vld [vmem:[%s1665 + $0x50] sm:$0xff]
      %v1677 = vld [vmem:[%s1665 + $0x58] sm:$0xff]
      %v1678 = vld [vmem:[%s1665 + $0x60] sm:$0xff]
      %v1679 = vld [vmem:[%s1665 + $0x68] sm:$0xff]
      %v1680 = vld [vmem:[%s1665 + $0x70] sm:$0xff]
      %v1681 = vld [vmem:[%s1665 + $0x78] sm:$0xff]
      %v1682 = vld [vmem:[%s1665 + $0x80] sm:$0xff]
      %v1683 = vld [vmem:[%s1665 + $0x88] sm:$0xff]
      %v1684 = vld [vmem:[%s1665 + $0x90] sm:$0xff]
      %v1685 = vld [vmem:[%s1665 + $0x98] sm:$0xff]
      %v1686 = vld [vmem:[%s1665 + $0xa0] sm:$0xff]
      %v1687 = vld [vmem:[%s1665 + $0xa8] sm:$0xff]
      %v1688 = vld [vmem:[%s1665 + $0xb0] sm:$0xff]
      %v1689 = vld [vmem:[%s1665 + $0xb8] sm:$0xff]
      %v1690 = vld [vmem:[%s1665 + $0xc0] sm:$0xff]
      %v1691 = vld [vmem:[%s1665 + $0xc8] sm:$0xff]
      %v1692 = vld [vmem:[%s1665 + $0xd0] sm:$0xff]
      %v1693 = vld [vmem:[%s1665 + $0xd8] sm:$0xff]
      %v1694 = vld [vmem:[%s1665 + $0xe0] sm:$0xff]
      %v1695 = vld [vmem:[%s1665 + $0xe8] sm:$0xff]
      %v1696 = vld [vmem:[%s1665 + $0xf0] sm:$0xff]
      %v1697 = vld [vmem:[%s1665 + $0xf8] sm:$0xff]
      %v1698 = vld [vmem:[%s1665 + $0x100] sm:$0xff]
      %v1699 = vld [vmem:[%s1665 + $0x108] sm:$0xff]
      %v1700 = vld [vmem:[%s1665 + $0x110] sm:$0xff]
      %v1701 = vld [vmem:[%s1665 + $0x118] sm:$0xff]
      %v1702 = vld [vmem:[%s1665 + $0x120] sm:$0xff]
      %v1703 = vld [vmem:[%s1665 + $0x128] sm:$0xff]
      %v1704 = vld [vmem:[%s1665 + $0x130] sm:$0xff]
      %v1705 = vld [vmem:[%s1665 + $0x138] sm:$0xff]
      %v1706 = vld [vmem:[%s1665 + $0x140] sm:$0xff]
      %v1707 = vld [vmem:[%s1665 + $0x148] sm:$0xff]
      %v1708 = vld [vmem:[%s1665 + $0x150] sm:$0xff]
      %v1709 = vld [vmem:[%s1665 + $0x158] sm:$0xff]
      %v1710 = vld [vmem:[%s1665 + $0x160] sm:$0xff]
      %v1711 = vld [vmem:[%s1665 + $0x168] sm:$0xff]
      %v1712 = vld [vmem:[%s1665 + $0x170] sm:$0xff]
      %v1713 = vld [vmem:[%s1665 + $0x178] sm:$0xff]
      %v1714 = vld [vmem:[%s1665 + $0x180] sm:$0xff]
      %v1715 = vld [vmem:[%s1665 + $0x188] sm:$0xff]
      %v1716 = vld [vmem:[%s1665 + $0x190] sm:$0xff]
      %v1717 = vld [vmem:[%s1665 + $0x198] sm:$0xff]
      %v1718 = vld [vmem:[%s1665 + $0x1a0] sm:$0xff]
      %v1719 = vld [vmem:[%s1665 + $0x1a8] sm:$0xff]
      %v1720 = vld [vmem:[%s1665 + $0x1b0] sm:$0xff]
      %v1721 = vld [vmem:[%s1665 + $0x1b8] sm:$0xff]
      %v1722 = vld [vmem:[%s1665 + $0x1c0] sm:$0xff]
      %v1723 = vld [vmem:[%s1665 + $0x1c8] sm:$0xff]
      %v1724 = vld [vmem:[%s1665 + $0x1d0] sm:$0xff]
      %v1725 = vld [vmem:[%s1665 + $0x1d8] sm:$0xff]
      %v1726 = vld [vmem:[%s1665 + $0x1e0] sm:$0xff]
      %v1727 = vld [vmem:[%s1665 + $0x1e8] sm:$0xff]
      %v1728 = vld [vmem:[%s1665 + $0x1f0] sm:$0xff]
      %v1729 = vld [vmem:[%s1665 + $0x1f8] sm:$0xff]
      %v1730 = vld [vmem:[%s1665 + $0x200] sm:$0xff]
      %v1731 = vld [vmem:[%s1665 + $0x208] sm:$0xff]
      %v1732 = vld [vmem:[%s1665 + $0x210] sm:$0xff]
      %v1733 = vld [vmem:[%s1665 + $0x218] sm:$0xff]
      %v1734 = vld [vmem:[%s1665 + $0x220] sm:$0xff]
      %v1735 = vld [vmem:[%s1665 + $0x228] sm:$0xff]
      %v1736 = vld [vmem:[%s1665 + $0x230] sm:$0xff]
      %v1737 = vld [vmem:[%s1665 + $0x238] sm:$0xff]
      %v1738 = vld [vmem:[%s1665 + $0x240] sm:$0xff]
      %v1739 = vld [vmem:[%s1665 + $0x248] sm:$0xff]
      %v1740 = vld [vmem:[%s1665 + $0x250] sm:$0xff]
      %v1741 = vld [vmem:[%s1665 + $0x258] sm:$0xff]
      %v1742 = vld [vmem:[%s1665 + $0x260] sm:$0xff]
      %v1743 = vld [vmem:[%s1665 + $0x268] sm:$0xff]
      %v1744 = vld [vmem:[%s1665 + $0x270] sm:$0xff]
      %v1745 = vld [vmem:[%s1665 + $0x278] sm:$0xff]
      %v1746 = vld [vmem:[%s1665 + $0x280] sm:$0xff]
      %v1747 = vld [vmem:[%s1665 + $0x288] sm:$0xff]
      %v1748 = vld [vmem:[%s1665 + $0x290] sm:$0xff]
      %v1749 = vld [vmem:[%s1665 + $0x298] sm:$0xff]
      %v1750 = vld [vmem:[%s1665 + $0x2a0] sm:$0xff]
      %v1751 = vld [vmem:[%s1665 + $0x2a8] sm:$0xff]
      %v1752 = vld [vmem:[%s1665 + $0x2b0] sm:$0xff]
      %v1753 = vld [vmem:[%s1665 + $0x2b8] sm:$0xff]
      %v1754 = vld [vmem:[%s1665 + $0x2c0] sm:$0xff]
      %v1755 = vld [vmem:[%s1665 + $0x2c8] sm:$0xff]
      %v1756 = vld [vmem:[%s1665 + $0x2d0] sm:$0xff]
      %v1757 = vld [vmem:[%s1665 + $0x2d8] sm:$0xff]
      %v1758 = vld [vmem:[%s1665 + $0x2e0] sm:$0xff]
      %v1759 = vld [vmem:[%s1665 + $0x2e8] sm:$0xff]
      %v1760 = vld [vmem:[%s1665 + $0x2f0] sm:$0xff]
      %v1761 = vld [vmem:[%s1665 + $0x2f8] sm:$0xff]
      %v1762 = vld [vmem:[%s1665 + $0x300] sm:$0x3f]
      %v1763 = vld [vmem:[%s1665 + $0x308] sm:$0x3f]
      %v1764 = vld [vmem:[%s1665 + $0x310] sm:$0x3f]
      %v1765 = vld [vmem:[%s1665 + $0x318] sm:$0x3f]
      %v1766 = vld [vmem:[%s1665 + $0x320] sm:$0x3f]
      %v1767 = vld [vmem:[%s1665 + $0x328] sm:$0x3f]
      %v1768 = vld [vmem:[%s1665 + $0x330] sm:$0x3f]
      %v1769 = vld [vmem:[%s1665 + $0x338] sm:$0x3f]
      %v1770 = vrot.slane %v658, 2
      %v1771 = vrot.slane %v659, 2
      %v1772 = vsel %vm896, %v1770, %v1771
      %v1773 = vrot.slane %v660, 2
      %v1774 = vsel %vm896, %v1771, %v1773
      %v1775 = vrot.slane %v661, 2
      %v1776 = vsel %vm896, %v1773, %v1775
      %v1777 = vrot.slane %v662, 2
      %v1778 = vsel %vm896, %v1775, %v1777
      %v1779 = vsel %vm887, %v1772, 0
      %v1781 = vsel %vm887, %v1774, 0
      %v1783 = vsel %vm887, %v1776, 0
      %v1785 = vsel %vm887, %v1778, 0
      %v1788 = vsel %vm896, %v1762, 0
      %v1791 = vsel %vm896, %v1763, 0
      %v1794 = vsel %vm896, %v1764, 0
      %v1797 = vsel %vm896, %v1765, 0
      %v1800 = vsel %vm896, %v1766, 0
      %v1803 = vsel %vm896, %v1767, 0
      %v1806 = vsel %vm896, %v1768, 0
      %v1809 = vsel %vm896, %v1769, 0
      %1811 = vmatprep.subr.mxu0 %v1667
      %1812 = vmatpush1.msra.mxu0 %v1666
      %1813 = vmatprep.subr.mxu0 %v1675
      %1814 = vmatpush1.msra.mxu0 %v1674
      %1815 = vmatprep.subr.mxu0 %v1683
      %1816 = vmatpush1.msra.mxu0 %v1682
      %1817 = vmatprep.subr.mxu0 %v1691
      %1818 = vmatpush1.msra.mxu0 %v1690
      %1819 = vmatprep.subr.mxu0 %v1699
      %1820 = vmatpush1.msra.mxu0 %v1698
      %1821 = vmatprep.subr.mxu0 %v1707
      %1822 = vmatpush1.msra.mxu0 %v1706
      %1823 = vmatprep.subr.mxu0 %v1715
      %1824 = vmatpush1.msra.mxu0 %v1714
      %1825 = vmatprep.subr.mxu0 %v1723
      %1826 = vmatpush1.msra.mxu0 %v1722
      %1827 = vmatprep.subr.mxu0 %v1731
      %1828 = vmatpush1.msra.mxu0 %v1730
      %1829 = vmatprep.subr.mxu0 %v1739
      %1830 = vmatpush1.msra.mxu0 %v1738
      %1831 = vmatprep.subr.mxu0 %v1747
      %1832 = vmatpush1.msra.mxu0 %v1746
      %1833 = vmatprep.subr.mxu0 %v1755
      %1834 = vmatpush1.msra.mxu0 %v1754
      %1835 = vmatprep.subr.mxu0 %v1791
      %1836 = vmatpush1.msra.mxu0 %v1788
      %1837 = vmatprep.subr.mxu0 0.0
      %1838 = vmatpush1.msra.mxu0 0.0
      %1839 = vmatprep.subr.mxu0 0.0
      %1840 = vmatpush1.msra.mxu0 0.0
      %1841 = vmatprep.subr.mxu0 0.0
      %1842 = vmatpush1.msra.mxu0 0.0
      %1843 = vmatprep.subr.mxu0 0.0
      %1844 = vmatpush1.msra.mxu0 0.0
      %1845 = vmatprep.subr.mxu0 0.0
      %1846 = vmatpush1.msra.mxu0 0.0
      %1847 = vmatprep.subr.mxu0 0.0
      %1848 = vmatpush1.msra.mxu0 0.0
      %1849 = vmatprep.subr.mxu0 0.0
      %1850 = vmatpush1.msra.mxu0 0.0
      %1851 = vmatprep.subr.mxu0 0.0
      %1852 = vmatpush1.msra.mxu0 0.0
      %1853 = vmatprep.subr.mxu0 0.0
      %1854 = vmatpush1.msra.mxu0 0.0
      %1855 = vmatprep.subr.mxu0 0.0
      %1856 = vmatpush1.msra.mxu0 0.0
      %1857 = vmatprep.subr.mxu0 0.0
      %1858 = vmatpush1.msra.mxu0 0.0
      %1859 = vmatprep.subr.mxu0 0.0
      %1860 = vmatpush1.msra.mxu0 0.0
      %1861 = vmatprep.subr.mxu0 0.0
      %1862 = vmatpush1.msra.mxu0 0.0
      %1863 = vmatprep.subr.mxu0 0.0
      %1864 = vmatpush1.msra.mxu0 0.0
      %1865 = vmatprep.subr.mxu0 0.0
      %1866 = vmatpush1.msra.mxu0 0.0
      %1867 = vmatprep.subr.mxu0 0.0
      %1868 = vmatpush1.msra.mxu0 0.0
      %1869 = vmatprep.subr.mxu0 0.0
      %1870 = vmatpush1.msra.mxu0 0.0
      %1871 = vmatprep.subr.mxu0 0.0
      %1872 = vmatpush1.msra.mxu0 0.0
      %1873 = vmatprep.subr.mxu0 0.0
      %1874 = vmatpush1.msra.mxu0 0.0
      %1875 = vmatprep.mubr.f32.mxu0 0.0
      %1876 = vmatmul.mubr.f32.gmra.mrb[0].mxu0 %v1779
      %v1877 = vpop.f32.mrb[0].mxu0
      %v1878 = vadd.f32 0.0, %v1877
      %v1879 = vpop.f32.mrb[0].mxu0
      %v1880 = vadd.f32 0.0, %v1879
      %1881 = vmatprep.mubr.f32.mxu0 0.0
      %1882 = vmatmul.mubr.f32.gmra.mrb[0].mxu0 %v1781
      %v1883 = vpop.f32.mrb[0].mxu0
      %v1884 = vadd.f32 0.0, %v1883
      %v1885 = vpop.f32.mrb[0].mxu0
      %v1886 = vadd.f32 0.0, %v1885
      %1887 = vmatprep.mubr.f32.mxu0 0.0
      %1888 = vmatmul.mubr.f32.gmra.mrb[0].mxu0 %v1783
      %v1889 = vpop.f32.mrb[0].mxu0
      %v1890 = vadd.f32 0.0, %v1889
      %v1891 = vpop.f32.mrb[0].mxu0
      %v1892 = vadd.f32 0.0, %v1891
      %1893 = vmatprep.mubr.f32.mxu0 0.0
      %1894 = vmatmul.mubr.f32.gmra.mrb[0].mxu0 %v1785
      %v1895 = vpop.f32.mrb[0].mxu0
      %v1896 = vadd.f32 0.0, %v1895
      %v1897 = vpop.f32.mrb[0].mxu0
      %v1898 = vadd.f32 0.0, %v1897
      %1899 = vdwg.mxu0
      %1900 = vmatprep.subr.mxu0 %v1669
      %1901 = vmatpush1.msra.mxu0 %v1668
      %1902 = vmatprep.subr.mxu0 %v1677
      %1903 = vmatpush1.msra.mxu0 %v1676
      %1904 = vmatprep.subr.mxu0 %v1685
      %1905 = vmatpush1.msra.mxu0 %v1684
      %1906 = vmatprep.subr.mxu0 %v1693
      %1907 = vmatpush1.msra.mxu0 %v1692
      %1908 = vmatprep.subr.mxu0 %v1701
      %1909 = vmatpush1.msra.mxu0 %v1700
      %1910 = vmatprep.subr.mxu0 %v1709
      %1911 = vmatpush1.msra.mxu0 %v1708
      %1912 = vmatprep.subr.mxu0 %v1717
      %1913 = vmatpush1.msra.mxu0 %v1716
      %1914 = vmatprep.subr.mxu0 %v1725
      %1915 = vmatpush1.msra.mxu0 %v1724
      %1916 = vmatprep.subr.mxu0 %v1733
      %1917 = vmatpush1.msra.mxu0 %v1732
      %1918 = vmatprep.subr.mxu0 %v1741
      %1919 = vmatpush1.msra.mxu0 %v1740
      %1920 = vmatprep.subr.mxu0 %v1749
      %1921 = vmatpush1.msra.mxu0 %v1748
      %1922 = vmatprep.subr.mxu0 %v1757
      %1923 = vmatpush1.msra.mxu0 %v1756
      %1924 = vmatprep.subr.mxu0 %v1797
      %1925 = vmatpush1.msra.mxu0 %v1794
      %1926 = vmatprep.subr.mxu0 0.0
      %1927 = vmatpush1.msra.mxu0 0.0
      %1928 = vmatprep.subr.mxu0 0.0
      %1929 = vmatpush1.msra.mxu0 0.0
      %1930 = vmatprep.subr.mxu0 0.0
      %1931 = vmatpush1.msra.mxu0 0.0
      %1932 = vmatprep.subr.mxu0 0.0
      %1933 = vmatpush1.msra.mxu0 0.0
      %1934 = vmatprep.subr.mxu0 0.0
      %1935 = vmatpush1.msra.mxu0 0.0
      %1936 = vmatprep.subr.mxu0 0.0
      %1937 = vmatpush1.msra.mxu0 0.0
      %1938 = vmatprep.subr.mxu0 0.0
      %1939 = vmatpush1.msra.mxu0 0.0
      %1940 = vmatprep.subr.mxu0 0.0
      %1941 = vmatpush1.msra.mxu0 0.0
      %1942 = vmatprep.subr.mxu0 0.0
      %1943 = vmatpush1.msra.mxu0 0.0
      %1944 = vmatprep.subr.mxu0 0.0
      %1945 = vmatpush1.msra.mxu0 0.0
      %1946 = vmatprep.subr.mxu0 0.0
      %1947 = vmatpush1.msra.mxu0 0.0
      %1948 = vmatprep.subr.mxu0 0.0
      %1949 = vmatpush1.msra.mxu0 0.0
      %1950 = vmatprep.subr.mxu0 0.0
      %1951 = vmatpush1.msra.mxu0 0.0
      %1952 = vmatprep.subr.mxu0 0.0
      %1953 = vmatpush1.msra.mxu0 0.0
      %1954 = vmatprep.subr.mxu0 0.0
      %1955 = vmatpush1.msra.mxu0 0.0
      %1956 = vmatprep.subr.mxu0 0.0
      %1957 = vmatpush1.msra.mxu0 0.0
      %1958 = vmatprep.subr.mxu0 0.0
      %1959 = vmatpush1.msra.mxu0 0.0
      %1960 = vmatprep.subr.mxu0 0.0
      %1961 = vmatpush1.msra.mxu0 0.0
      %1962 = vmatprep.subr.mxu0 0.0
      %1963 = vmatpush1.msra.mxu0 0.0
      %1964 = vmatprep.mubr.f32.mxu0 0.0
      %1965 = vmatmul.mubr.f32.gmra.mrb[0].mxu0 %v1779
      %v1966 = vpop.f32.mrb[0].mxu0
      %v1967 = vadd.f32 0.0, %v1966
      %v1968 = vpop.f32.mrb[0].mxu0
      %v1969 = vadd.f32 0.0, %v1968
      %1970 = vmatprep.mubr.f32.mxu0 0.0
      %1971 = vmatmul.mubr.f32.gmra.mrb[0].mxu0 %v1781
      %v1972 = vpop.f32.mrb[0].mxu0
      %v1973 = vadd.f32 0.0, %v1972
      %v1974 = vpop.f32.mrb[0].mxu0
      %v1975 = vadd.f32 0.0, %v1974
      %1976 = vmatprep.mubr.f32.mxu0 0.0
      %1977 = vmatmul.mubr.f32.gmra.mrb[0].mxu0 %v1783
      %v1978 = vpop.f32.mrb[0].mxu0
      %v1979 = vadd.f32 0.0, %v1978
      %v1980 = vpop.f32.mrb[0].mxu0
      %v1981 = vadd.f32 0.0, %v1980
      %1982 = vmatprep.mubr.f32.mxu0 0.0
      %1983 = vmatmul.mubr.f32.gmra.mrb[0].mxu0 %v1785
      %v1984 = vpop.f32.mrb[0].mxu0
      %v1985 = vadd.f32 0.0, %v1984
      %v1986 = vpop.f32.mrb[0].mxu0
      %v1987 = vadd.f32 0.0, %v1986
      %1988 = vdwg.mxu0
      %1989 = vmatprep.subr.mxu0 %v1671
      %1990 = vmatpush1.msra.mxu0 %v1670
      %1991 = vmatprep.subr.mxu0 %v1679
      %1992 = vmatpush1.msra.mxu0 %v1678
      %1993 = vmatprep.subr.mxu0 %v1687
      %1994 = vmatpush1.msra.mxu0 %v1686
      %1995 = vmatprep.subr.mxu0 %v1695
      %1996 = vmatpush1.msra.mxu0 %v1694
      %1997 = vmatprep.subr.mxu0 %v1703
      %1998 = vmatpush1.msra.mxu0 %v1702
      %1999 = vmatprep.subr.mxu0 %v1711
      %2000 = vmatpush1.msra.mxu0 %v1710
      %2001 = vmatprep.subr.mxu0 %v1719
      %2002 = vmatpush1.msra.mxu0 %v1718
      %2003 = vmatprep.subr.mxu0 %v1727
      %2004 = vmatpush1.msra.mxu0 %v1726
      %2005 = vmatprep.subr.mxu0 %v1735
      %2006 = vmatpush1.msra.mxu0 %v1734
      %2007 = vmatprep.subr.mxu0 %v1743
      %2008 = vmatpush1.msra.mxu0 %v1742
      %2009 = vmatprep.subr.mxu0 %v1751
      %2010 = vmatpush1.msra.mxu0 %v1750
      %2011 = vmatprep.subr.mxu0 %v1759
      %2012 = vmatpush1.msra.mxu0 %v1758
      %2013 = vmatprep.subr.mxu0 %v1803
      %2014 = vmatpush1.msra.mxu0 %v1800
      %2015 = vmatprep.subr.mxu0 0.0
      %2016 = vmatpush1.msra.mxu0 0.0
      %2017 = vmatprep.subr.mxu0 0.0
      %2018 = vmatpush1.msra.mxu0 0.0
      %2019 = vmatprep.subr.mxu0 0.0
      %2020 = vmatpush1.msra.mxu0 0.0
      %2021 = vmatprep.subr.mxu0 0.0
      %2022 = vmatpush1.msra.mxu0 0.0
      %2023 = vmatprep.subr.mxu0 0.0
      %2024 = vmatpush1.msra.mxu0 0.0
      %2025 = vmatprep.subr.mxu0 0.0
      %2026 = vmatpush1.msra.mxu0 0.0
      %2027 = vmatprep.subr.mxu0 0.0
      %2028 = vmatpush1.msra.mxu0 0.0
      %2029 = vmatprep.subr.mxu0 0.0
      %2030 = vmatpush1.msra.mxu0 0.0
      %2031 = vmatprep.subr.mxu0 0.0
      %2032 = vmatpush1.msra.mxu0 0.0
      %2033 = vmatprep.subr.mxu0 0.0
      %2034 = vmatpush1.msra.mxu0 0.0
      %2035 = vmatprep.subr.mxu0 0.0
      %2036 = vmatpush1.msra.mxu0 0.0
      %2037 = vmatprep.subr.mxu0 0.0
      %2038 = vmatpush1.msra.mxu0 0.0
      %2039 = vmatprep.subr.mxu0 0.0
      %2040 = vmatpush1.msra.mxu0 0.0
      %2041 = vmatprep.subr.mxu0 0.0
      %2042 = vmatpush1.msra.mxu0 0.0
      %2043 = vmatprep.subr.mxu0 0.0
      %2044 = vmatpush1.msra.mxu0 0.0
      %2045 = vmatprep.subr.mxu0 0.0
      %2046 = vmatpush1.msra.mxu0 0.0
      %2047 = vmatprep.subr.mxu0 0.0
      %2048 = vmatpush1.msra.mxu0 0.0
      %2049 = vmatprep.subr.mxu0 0.0
      %2050 = vmatpush1.msra.mxu0 0.0
      %2051 = vmatprep.subr.mxu0 0.0
      %2052 = vmatpush1.msra.mxu0 0.0
      %2053 = vmatprep.mubr.f32.mxu0 0.0
      %2054 = vmatmul.mubr.f32.gmra.mrb[0].mxu0 %v1779
      %v2055 = vpop.f32.mrb[0].mxu0
      %v2056 = vadd.f32 0.0, %v2055
      %v2057 = vpop.f32.mrb[0].mxu0
      %v2058 = vadd.f32 0.0, %v2057
      %2059 = vmatprep.mubr.f32.mxu0 0.0
      %2060 = vmatmul.mubr.f32.gmra.mrb[0].mxu0 %v1781
      %v2061 = vpop.f32.mrb[0].mxu0
      %v2062 = vadd.f32 0.0, %v2061
      %v2063 = vpop.f32.mrb[0].mxu0
      %v2064 = vadd.f32 0.0, %v2063
      %2065 = vmatprep.mubr.f32.mxu0 0.0
      %2066 = vmatmul.mubr.f32.gmra.mrb[0].mxu0 %v1783
      %v2067 = vpop.f32.mrb[0].mxu0
      %v2068 = vadd.f32 0.0, %v2067
      %v2069 = vpop.f32.mrb[0].mxu0
      %v2070 = vadd.f32 0.0, %v2069
      %2071 = vmatprep.mubr.f32.mxu0 0.0
      %2072 = vmatmul.mubr.f32.gmra.mrb[0].mxu0 %v1785
      %v2073 = vpop.f32.mrb[0].mxu0
      %v2074 = vadd.f32 0.0, %v2073
      %v2075 = vpop.f32.mrb[0].mxu0
      %v2076 = vadd.f32 0.0, %v2075
      %2077 = vdwg.mxu0
      %2078 = vmatprep.subr.mxu0 %v1673
      %2079 = vmatpush1.msra.mxu0 %v1672
      %2080 = vmatprep.subr.mxu0 %v1681
      %2081 = vmatpush1.msra.mxu0 %v1680
      %2082 = vmatprep.subr.mxu0 %v1689
      %2083 = vmatpush1.msra.mxu0 %v1688
      %2084 = vmatprep.subr.mxu0 %v1697
      %2085 = vmatpush1.msra.mxu0 %v1696
      %2086 = vmatprep.subr.mxu0 %v1705
      %2087 = vmatpush1.msra.mxu0 %v1704
      %2088 = vmatprep.subr.mxu0 %v1713
      %2089 = vmatpush1.msra.mxu0 %v1712
      %2090 = vmatprep.subr.mxu0 %v1721
      %2091 = vmatpush1.msra.mxu0 %v1720
      %2092 = vmatprep.subr.mxu0 %v1729
      %2093 = vmatpush1.msra.mxu0 %v1728
      %2094 = vmatprep.subr.mxu0 %v1737
      %2095 = vmatpush1.msra.mxu0 %v1736
      %2096 = vmatprep.subr.mxu0 %v1745
      %2097 = vmatpush1.msra.mxu0 %v1744
      %2098 = vmatprep.subr.mxu0 %v1753
      %2099 = vmatpush1.msra.mxu0 %v1752
      %2100 = vmatprep.subr.mxu0 %v1761
      %2101 = vmatpush1.msra.mxu0 %v1760
      %2102 = vmatprep.subr.mxu0 %v1809
      %2103 = vmatpush1.msra.mxu0 %v1806
      %2104 = vmatprep.subr.mxu0 0.0
      %2105 = vmatpush1.msra.mxu0 0.0
      %2106 = vmatprep.subr.mxu0 0.0
      %2107 = vmatpush1.msra.mxu0 0.0
      %2108 = vmatprep.subr.mxu0 0.0
      %2109 = vmatpush1.msra.mxu0 0.0
      %2110 = vmatprep.subr.mxu0 0.0
      %2111 = vmatpush1.msra.mxu0 0.0
      %2112 = vmatprep.subr.mxu0 0.0
      %2113 = vmatpush1.msra.mxu0 0.0
      %2114 = vmatprep.subr.mxu0 0.0
      %2115 = vmatpush1.msra.mxu0 0.0
      %2116 = vmatprep.subr.mxu0 0.0
      %2117 = vmatpush1.msra.mxu0 0.0
      %2118 = vmatprep.subr.mxu0 0.0
      %2119 = vmatpush1.msra.mxu0 0.0
      %2120 = vmatprep.subr.mxu0 0.0
      %2121 = vmatpush1.msra.mxu0 0.0
      %2122 = vmatprep.subr.mxu0 0.0
      %2123 = vmatpush1.msra.mxu0 0.0
      %2124 = vmatprep.subr.mxu0 0.0
      %2125 = vmatpush1.msra.mxu0 0.0
      %2126 = vmatprep.subr.mxu0 0.0
      %2127 = vmatpush1.msra.mxu0 0.0
      %2128 = vmatprep.subr.mxu0 0.0
      %2129 = vmatpush1.msra.mxu0 0.0
      %2130 = vmatprep.subr.mxu0 0.0
      %2131 = vmatpush1.msra.mxu0 0.0
      %2132 = vmatprep.subr.mxu0 0.0
      %2133 = vmatpush1.msra.mxu0 0.0
      %2134 = vmatprep.subr.mxu0 0.0
      %2135 = vmatpush1.msra.mxu0 0.0
      %2136 = vmatprep.subr.mxu0 0.0
      %2137 = vmatpush1.msra.mxu0 0.0
      %2138 = vmatprep.subr.mxu0 0.0
      %2139 = vmatpush1.msra.mxu0 0.0
      %2140 = vmatprep.subr.mxu0 0.0
      %2141 = vmatpush1.msra.mxu0 0.0
      %2142 = vmatprep.mubr.f32.mxu0 0.0
      %2143 = vmatmul.mubr.f32.gmra.mrb[0].mxu0 %v1779
      %v2144 = vpop.f32.mrb[0].mxu0
      %v2145 = vadd.f32 0.0, %v2144
      %v2146 = vpop.f32.mrb[0].mxu0
      %v2147 = vadd.f32 0.0, %v2146
      %2148 = vmatprep.mubr.f32.mxu0 0.0
      %2149 = vmatmul.mubr.f32.gmra.mrb[0].mxu0 %v1781
      %v2150 = vpop.f32.mrb[0].mxu0
      %v2151 = vadd.f32 0.0, %v2150
      %v2152 = vpop.f32.mrb[0].mxu0
      %v2153 = vadd.f32 0.0, %v2152
      %2154 = vmatprep.mubr.f32.mxu0 0.0
      %2155 = vmatmul.mubr.f32.gmra.mrb[0].mxu0 %v1783
      %v2156 = vpop.f32.mrb[0].mxu0
      %v2157 = vadd.f32 0.0, %v2156
      %v2158 = vpop.f32.mrb[0].mxu0
      %v2159 = vadd.f32 0.0, %v2158
      %2160 = vmatprep.mubr.f32.mxu0 0.0
      %2161 = vmatmul.mubr.f32.gmra.mrb[0].mxu0 %v1785
      %v2162 = vpop.f32.mrb[0].mxu0
      %v2163 = vadd.f32 0.0, %v2162
      %v2164 = vpop.f32.mrb[0].mxu0
      %v2165 = vadd.f32 0.0, %v2164
      %2166 = vdwg.mxu0
      %v2167 = vadd.f32 %v1376, %v1878
      %v2168 = vadd.f32 %v1378, %v1880
      %v2169 = vadd.f32 %v1465, %v1967
      %v2170 = vadd.f32 %v1467, %v1969
      %v2171 = vadd.f32 %v1554, %v2056
      %v2172 = vadd.f32 %v1556, %v2058
      %v2173 = vadd.f32 %v1643, %v2145
      %v2174 = vadd.f32 %v1645, %v2147
      %v2175 = vadd.f32 %v1382, %v1884
      %v2176 = vadd.f32 %v1384, %v1886
      %v2177 = vadd.f32 %v1471, %v1973
      %v2178 = vadd.f32 %v1473, %v1975
      %v2179 = vadd.f32 %v1560, %v2062
      %v2180 = vadd.f32 %v1562, %v2064
      %v2181 = vadd.f32 %v1649, %v2151
      %v2182 = vadd.f32 %v1651, %v2153
      %v2183 = vadd.f32 %v1388, %v1890
      %v2184 = vadd.f32 %v1390, %v1892
      %v2185 = vadd.f32 %v1477, %v1979
      %v2186 = vadd.f32 %v1479, %v1981
      %v2187 = vadd.f32 %v1566, %v2068
      %v2188 = vadd.f32 %v1568, %v2070
      %v2189 = vadd.f32 %v1655, %v2157
      %v2190 = vadd.f32 %v1657, %v2159
      %v2191 = vadd.f32 %v1394, %v1896
      %v2192 = vadd.f32 %v1396, %v1898
      %v2193 = vadd.f32 %v1483, %v1985
      %v2194 = vadd.f32 %v1485, %v1987
      %v2195 = vadd.f32 %v1572, %v2074
      %v2196 = vadd.f32 %v1574, %v2076
      %v2197 = vadd.f32 %v1661, %v2163
      %v2198 = vadd.f32 %v1663, %v2165
      %v2199 = vld [vmem:[%s5] sm:$0xff]
      %v2201 = vlaneseq
      %v2202 = vshrl.u32 %v2201, 7
      %v2203 = vsub.s32 0, %v2202
      %v2204 = vrot.slane %v2199, %v2203
      %v2205 = vlaneseq
      %v2206 = vshrl.u32 %v2205, 7
      %v2207 = vsub.s32 1, %v2206
      %v2208 = vrot.slane %v2199, %v2207
      %v2209 = vlaneseq
      %v2210 = vshrl.u32 %v2209, 7
      %v2211 = vsub.s32 2, %v2210
      %v2212 = vrot.slane %v2199, %v2211
      %v2213 = vlaneseq
      %v2214 = vshrl.u32 %v2213, 7
      %v2215 = vsub.s32 3, %v2214
      %v2216 = vrot.slane %v2199, %v2215
      %v2217 = vlaneseq
      %v2218 = vshrl.u32 %v2217, 7
      %v2219 = vsub.s32 4, %v2218
      %v2220 = vrot.slane %v2199, %v2219
      %v2221 = vlaneseq
      %v2222 = vshrl.u32 %v2221, 7
      %v2223 = vsub.s32 5, %v2222
      %v2224 = vrot.slane %v2199, %v2223
      %v2225 = vlaneseq
      %v2226 = vshrl.u32 %v2225, 7
      %v2227 = vsub.s32 6, %v2226
      %v2228 = vrot.slane %v2199, %v2227
      %v2229 = vlaneseq
      %v2230 = vshrl.u32 %v2229, 7
      %v2231 = vsub.s32 7, %v2230
      %v2232 = vrot.slane %v2199, %v2231
      %v2241 = vadd.f32 %v2167, %v2204
      %v2242 = vadd.f32 %v2168, %v2208
      %v2243 = vadd.f32 %v2169, %v2212
      %v2244 = vadd.f32 %v2170, %v2216
      %v2245 = vadd.f32 %v2171, %v2220
      %v2246 = vadd.f32 %v2172, %v2224
      %v2247 = vadd.f32 %v2173, %v2228
      %v2248 = vadd.f32 %v2174, %v2232
      %v2249 = vadd.f32 %v2175, %v2204
      %v2250 = vadd.f32 %v2176, %v2208
      %v2251 = vadd.f32 %v2177, %v2212
      %v2252 = vadd.f32 %v2178, %v2216
      %v2253 = vadd.f32 %v2179, %v2220
      %v2254 = vadd.f32 %v2180, %v2224
      %v2255 = vadd.f32 %v2181, %v2228
      %v2256 = vadd.f32 %v2182, %v2232
      %v2257 = vadd.f32 %v2183, %v2204
      %v2258 = vadd.f32 %v2184, %v2208
      %v2259 = vadd.f32 %v2185, %v2212
      %v2260 = vadd.f32 %v2186, %v2216
      %v2261 = vadd.f32 %v2187, %v2220
      %v2262 = vadd.f32 %v2188, %v2224
      %v2263 = vadd.f32 %v2189, %v2228
      %v2264 = vadd.f32 %v2190, %v2232
      %v2265 = vadd.f32 %v2191, %v2204
      %v2266 = vadd.f32 %v2192, %v2208
      %v2267 = vadd.f32 %v2193, %v2212
      %v2268 = vadd.f32 %v2194, %v2216
      %v2269 = vadd.f32 %v2195, %v2220
      %v2270 = vadd.f32 %v2196, %v2224
      %v2271 = vadd.f32 %v2197, %v2228
      %v2272 = vadd.f32 %v2198, %v2232
      %v2273 = vmax.f32 %v2241, 0.0
      %v2274 = vmax.f32 %v2242, 0.0
      %v2275 = vmax.f32 %v2243, 0.0
      %v2276 = vmax.f32 %v2244, 0.0
      %v2277 = vmax.f32 %v2245, 0.0
      %v2278 = vmax.f32 %v2246, 0.0
      %v2279 = vmax.f32 %v2247, 0.0
      %v2280 = vmax.f32 %v2248, 0.0
      %v2281 = vmax.f32 %v2249, 0.0
      %v2282 = vmax.f32 %v2250, 0.0
      %v2283 = vmax.f32 %v2251, 0.0
      %v2284 = vmax.f32 %v2252, 0.0
      %v2285 = vmax.f32 %v2253, 0.0
      %v2286 = vmax.f32 %v2254, 0.0
      %v2287 = vmax.f32 %v2255, 0.0
      %v2288 = vmax.f32 %v2256, 0.0
      %v2289 = vmax.f32 %v2257, 0.0
      %v2290 = vmax.f32 %v2258, 0.0
      %v2291 = vmax.f32 %v2259, 0.0
      %v2292 = vmax.f32 %v2260, 0.0
      %v2293 = vmax.f32 %v2261, 0.0
      %v2294 = vmax.f32 %v2262, 0.0
      %v2295 = vmax.f32 %v2263, 0.0
      %v2296 = vmax.f32 %v2264, 0.0
      %v2297 = vmax.f32 %v2265, 0.0
      %v2298 = vmax.f32 %v2266, 0.0
      %v2299 = vmax.f32 %v2267, 0.0
      %v2300 = vmax.f32 %v2268, 0.0
      %v2301 = vmax.f32 %v2269, 0.0
      %v2302 = vmax.f32 %v2270, 0.0
      %v2303 = vmax.f32 %v2271, 0.0
      %v2304 = vmax.f32 %v2272, 0.0
      %v2305 = vld [vmem:[%s6] sm:$0xff]
      %v2306 = vld [vmem:[%s6 + $0x8] sm:$0xff]
      %v2307 = vld [vmem:[%s6 + $0x10] sm:$0xff]
      %v2308 = vld [vmem:[%s6 + $0x18] sm:$0xff]
      %v2309 = vld [vmem:[%s6 + $0x20] sm:$0xff]
      %v2310 = vld [vmem:[%s6 + $0x28] sm:$0xff]
      %v2311 = vld [vmem:[%s6 + $0x30] sm:$0xff]
      %v2312 = vld [vmem:[%s6 + $0x38] sm:$0xff]
      %v2313 = vld [vmem:[%s6 + $0x40] sm:$0xff]
      %v2314 = vld [vmem:[%s6 + $0x48] sm:$0xff]
      %v2315 = vld [vmem:[%s6 + $0x50] sm:$0xff]
      %v2316 = vld [vmem:[%s6 + $0x58] sm:$0xff]
      %v2317 = vld [vmem:[%s6 + $0x60] sm:$0xff]
      %v2318 = vld [vmem:[%s6 + $0x68] sm:$0xff]
      %v2319 = vld [vmem:[%s6 + $0x70] sm:$0xff]
      %v2320 = vld [vmem:[%s6 + $0x78] sm:$0xff]
      %v2321 = vld [vmem:[%s6 + $0x80] sm:$0xff]
      %v2322 = vld [vmem:[%s6 + $0x88] sm:$0xff]
      %v2323 = vld [vmem:[%s6 + $0x90] sm:$0xff]
      %v2324 = vld [vmem:[%s6 + $0x98] sm:$0xff]
      %v2325 = vld [vmem:[%s6 + $0xa0] sm:$0xff]
      %v2326 = vld [vmem:[%s6 + $0xa8] sm:$0xff]
      %v2327 = vld [vmem:[%s6 + $0xb0] sm:$0xff]
      %v2328 = vld [vmem:[%s6 + $0xb8] sm:$0xff]
      %v2329 = vld [vmem:[%s6 + $0xc0] sm:$0xff]
      %v2330 = vld [vmem:[%s6 + $0xc8] sm:$0xff]
      %v2331 = vld [vmem:[%s6 + $0xd0] sm:$0xff]
      %v2332 = vld [vmem:[%s6 + $0xd8] sm:$0xff]
      %v2333 = vld [vmem:[%s6 + $0xe0] sm:$0xff]
      %v2334 = vld [vmem:[%s6 + $0xe8] sm:$0xff]
      %v2335 = vld [vmem:[%s6 + $0xf0] sm:$0xff]
      %v2336 = vld [vmem:[%s6 + $0xf8] sm:$0xff]
      %v2337 = vld [vmem:[%s6 + $0x100] sm:$0xff]
      %v2338 = vld [vmem:[%s6 + $0x108] sm:$0xff]
      %v2339 = vld [vmem:[%s6 + $0x110] sm:$0xff]
      %v2340 = vld [vmem:[%s6 + $0x118] sm:$0xff]
      %v2341 = vld [vmem:[%s6 + $0x120] sm:$0xff]
      %v2342 = vld [vmem:[%s6 + $0x128] sm:$0xff]
      %v2343 = vld [vmem:[%s6 + $0x130] sm:$0xff]
      %v2344 = vld [vmem:[%s6 + $0x138] sm:$0xff]
      %v2345 = vld [vmem:[%s6 + $0x140] sm:$0xff]
      %v2346 = vld [vmem:[%s6 + $0x148] sm:$0xff]
      %v2347 = vld [vmem:[%s6 + $0x150] sm:$0xff]
      %v2348 = vld [vmem:[%s6 + $0x158] sm:$0xff]
      %v2349 = vld [vmem:[%s6 + $0x160] sm:$0xff]
      %v2350 = vld [vmem:[%s6 + $0x168] sm:$0xff]
      %v2351 = vld [vmem:[%s6 + $0x170] sm:$0xff]
      %v2352 = vld [vmem:[%s6 + $0x178] sm:$0xff]
      %v2353 = vld [vmem:[%s6 + $0x180] sm:$0xff]
      %v2354 = vld [vmem:[%s6 + $0x188] sm:$0xff]
      %v2355 = vld [vmem:[%s6 + $0x190] sm:$0xff]
      %v2356 = vld [vmem:[%s6 + $0x198] sm:$0xff]
      %v2357 = vld [vmem:[%s6 + $0x1a0] sm:$0xff]
      %v2358 = vld [vmem:[%s6 + $0x1a8] sm:$0xff]
      %v2359 = vld [vmem:[%s6 + $0x1b0] sm:$0xff]
      %v2360 = vld [vmem:[%s6 + $0x1b8] sm:$0xff]
      %v2361 = vld [vmem:[%s6 + $0x1c0] sm:$0xff]
      %v2362 = vld [vmem:[%s6 + $0x1c8] sm:$0xff]
      %v2363 = vld [vmem:[%s6 + $0x1d0] sm:$0xff]
      %v2364 = vld [vmem:[%s6 + $0x1d8] sm:$0xff]
      %v2365 = vld [vmem:[%s6 + $0x1e0] sm:$0xff]
      %v2366 = vld [vmem:[%s6 + $0x1e8] sm:$0xff]
      %v2367 = vld [vmem:[%s6 + $0x1f0] sm:$0xff]
      %v2368 = vld [vmem:[%s6 + $0x1f8] sm:$0xff]
      %v2369 = vld [vmem:[%s6 + $0x200] sm:$0xff]
      %v2370 = vld [vmem:[%s6 + $0x208] sm:$0xff]
      %v2371 = vld [vmem:[%s6 + $0x210] sm:$0xff]
      %v2372 = vld [vmem:[%s6 + $0x218] sm:$0xff]
      %v2373 = vld [vmem:[%s6 + $0x220] sm:$0xff]
      %v2374 = vld [vmem:[%s6 + $0x228] sm:$0xff]
      %v2375 = vld [vmem:[%s6 + $0x230] sm:$0xff]
      %v2376 = vld [vmem:[%s6 + $0x238] sm:$0xff]
      %v2377 = vld [vmem:[%s6 + $0x240] sm:$0xff]
      %v2378 = vld [vmem:[%s6 + $0x248] sm:$0xff]
      %v2379 = vld [vmem:[%s6 + $0x250] sm:$0xff]
      %v2380 = vld [vmem:[%s6 + $0x258] sm:$0xff]
      %v2381 = vld [vmem:[%s6 + $0x260] sm:$0xff]
      %v2382 = vld [vmem:[%s6 + $0x268] sm:$0xff]
      %v2383 = vld [vmem:[%s6 + $0x270] sm:$0xff]
      %v2384 = vld [vmem:[%s6 + $0x278] sm:$0xff]
      %v2385 = vld [vmem:[%s6 + $0x280] sm:$0xff]
      %v2386 = vld [vmem:[%s6 + $0x288] sm:$0xff]
      %v2387 = vld [vmem:[%s6 + $0x290] sm:$0xff]
      %v2388 = vld [vmem:[%s6 + $0x298] sm:$0xff]
      %v2389 = vld [vmem:[%s6 + $0x2a0] sm:$0xff]
      %v2390 = vld [vmem:[%s6 + $0x2a8] sm:$0xff]
      %v2391 = vld [vmem:[%s6 + $0x2b0] sm:$0xff]
      %v2392 = vld [vmem:[%s6 + $0x2b8] sm:$0xff]
      %v2393 = vld [vmem:[%s6 + $0x2c0] sm:$0xff]
      %v2394 = vld [vmem:[%s6 + $0x2c8] sm:$0xff]
      %v2395 = vld [vmem:[%s6 + $0x2d0] sm:$0xff]
      %v2396 = vld [vmem:[%s6 + $0x2d8] sm:$0xff]
      %v2397 = vld [vmem:[%s6 + $0x2e0] sm:$0xff]
      %v2398 = vld [vmem:[%s6 + $0x2e8] sm:$0xff]
      %v2399 = vld [vmem:[%s6 + $0x2f0] sm:$0xff]
      %v2400 = vld [vmem:[%s6 + $0x2f8] sm:$0xff]
      %v2401 = vld [vmem:[%s6 + $0x300] sm:$0xff]
      %v2402 = vld [vmem:[%s6 + $0x308] sm:$0xff]
      %v2403 = vld [vmem:[%s6 + $0x310] sm:$0xff]
      %v2404 = vld [vmem:[%s6 + $0x318] sm:$0xff]
      %v2405 = vld [vmem:[%s6 + $0x320] sm:$0xff]
      %v2406 = vld [vmem:[%s6 + $0x328] sm:$0xff]
      %v2407 = vld [vmem:[%s6 + $0x330] sm:$0xff]
      %v2408 = vld [vmem:[%s6 + $0x338] sm:$0xff]
      %v2409 = vld [vmem:[%s6 + $0x340] sm:$0xff]
      %v2410 = vld [vmem:[%s6 + $0x348] sm:$0xff]
      %v2411 = vld [vmem:[%s6 + $0x350] sm:$0xff]
      %v2412 = vld [vmem:[%s6 + $0x358] sm:$0xff]
      %v2413 = vld [vmem:[%s6 + $0x360] sm:$0xff]
      %v2414 = vld [vmem:[%s6 + $0x368] sm:$0xff]
      %v2415 = vld [vmem:[%s6 + $0x370] sm:$0xff]
      %v2416 = vld [vmem:[%s6 + $0x378] sm:$0xff]
      %v2417 = vld [vmem:[%s6 + $0x380] sm:$0xff]
      %v2418 = vld [vmem:[%s6 + $0x388] sm:$0xff]
      %v2419 = vld [vmem:[%s6 + $0x390] sm:$0xff]
      %v2420 = vld [vmem:[%s6 + $0x398] sm:$0xff]
      %v2421 = vld [vmem:[%s6 + $0x3a0] sm:$0xff]
      %v2422 = vld [vmem:[%s6 + $0x3a8] sm:$0xff]
      %v2423 = vld [vmem:[%s6 + $0x3b0] sm:$0xff]
      %v2424 = vld [vmem:[%s6 + $0x3b8] sm:$0xff]
      %v2425 = vld [vmem:[%s6 + $0x3c0] sm:$0xff]
      %v2426 = vld [vmem:[%s6 + $0x3c8] sm:$0xff]
      %v2427 = vld [vmem:[%s6 + $0x3d0] sm:$0xff]
      %v2428 = vld [vmem:[%s6 + $0x3d8] sm:$0xff]
      %v2429 = vld [vmem:[%s6 + $0x3e0] sm:$0xff]
      %v2430 = vld [vmem:[%s6 + $0x3e8] sm:$0xff]
      %v2431 = vld [vmem:[%s6 + $0x3f0] sm:$0xff]
      %v2432 = vld [vmem:[%s6 + $0x3f8] sm:$0xff]
      %v2433 = vld [vmem:[%s6 + $0x400] sm:$0xff]
      %v2434 = vld [vmem:[%s6 + $0x408] sm:$0xff]
      %v2435 = vld [vmem:[%s6 + $0x410] sm:$0xff]
      %v2436 = vld [vmem:[%s6 + $0x418] sm:$0xff]
      %v2437 = vld [vmem:[%s6 + $0x420] sm:$0xff]
      %v2438 = vld [vmem:[%s6 + $0x428] sm:$0xff]
      %v2439 = vld [vmem:[%s6 + $0x430] sm:$0xff]
      %v2440 = vld [vmem:[%s6 + $0x438] sm:$0xff]
      %v2441 = vld [vmem:[%s6 + $0x440] sm:$0xff]
      %v2442 = vld [vmem:[%s6 + $0x448] sm:$0xff]
      %v2443 = vld [vmem:[%s6 + $0x450] sm:$0xff]
      %v2444 = vld [vmem:[%s6 + $0x458] sm:$0xff]
      %v2445 = vld [vmem:[%s6 + $0x460] sm:$0xff]
      %v2446 = vld [vmem:[%s6 + $0x468] sm:$0xff]
      %v2447 = vld [vmem:[%s6 + $0x470] sm:$0xff]
      %v2448 = vld [vmem:[%s6 + $0x478] sm:$0xff]
      %v2449 = vld [vmem:[%s6 + $0x480] sm:$0xff]
      %v2450 = vld [vmem:[%s6 + $0x488] sm:$0xff]
      %v2451 = vld [vmem:[%s6 + $0x490] sm:$0xff]
      %v2452 = vld [vmem:[%s6 + $0x498] sm:$0xff]
      %v2453 = vld [vmem:[%s6 + $0x4a0] sm:$0xff]
      %v2454 = vld [vmem:[%s6 + $0x4a8] sm:$0xff]
      %v2455 = vld [vmem:[%s6 + $0x4b0] sm:$0xff]
      %v2456 = vld [vmem:[%s6 + $0x4b8] sm:$0xff]
      %v2457 = vld [vmem:[%s6 + $0x4c0] sm:$0xff]
      %v2458 = vld [vmem:[%s6 + $0x4c8] sm:$0xff]
      %v2459 = vld [vmem:[%s6 + $0x4d0] sm:$0xff]
      %v2460 = vld [vmem:[%s6 + $0x4d8] sm:$0xff]
      %v2461 = vld [vmem:[%s6 + $0x4e0] sm:$0xff]
      %v2462 = vld [vmem:[%s6 + $0x4e8] sm:$0xff]
      %v2463 = vld [vmem:[%s6 + $0x4f0] sm:$0xff]
      %v2464 = vld [vmem:[%s6 + $0x4f8] sm:$0xff]
      %v2465 = vld [vmem:[%s6 + $0x500] sm:$0xff]
      %v2466 = vld [vmem:[%s6 + $0x508] sm:$0xff]
      %v2467 = vld [vmem:[%s6 + $0x510] sm:$0xff]
      %v2468 = vld [vmem:[%s6 + $0x518] sm:$0xff]
      %v2469 = vld [vmem:[%s6 + $0x520] sm:$0xff]
      %v2470 = vld [vmem:[%s6 + $0x528] sm:$0xff]
      %v2471 = vld [vmem:[%s6 + $0x530] sm:$0xff]
      %v2472 = vld [vmem:[%s6 + $0x538] sm:$0xff]
      %v2473 = vld [vmem:[%s6 + $0x540] sm:$0xff]
      %v2474 = vld [vmem:[%s6 + $0x548] sm:$0xff]
      %v2475 = vld [vmem:[%s6 + $0x550] sm:$0xff]
      %v2476 = vld [vmem:[%s6 + $0x558] sm:$0xff]
      %v2477 = vld [vmem:[%s6 + $0x560] sm:$0xff]
      %v2478 = vld [vmem:[%s6 + $0x568] sm:$0xff]
      %v2479 = vld [vmem:[%s6 + $0x570] sm:$0xff]
      %v2480 = vld [vmem:[%s6 + $0x578] sm:$0xff]
      %v2481 = vld [vmem:[%s6 + $0x580] sm:$0xff]
      %v2482 = vld [vmem:[%s6 + $0x588] sm:$0xff]
      %v2483 = vld [vmem:[%s6 + $0x590] sm:$0xff]
      %v2484 = vld [vmem:[%s6 + $0x598] sm:$0xff]
      %v2485 = vld [vmem:[%s6 + $0x5a0] sm:$0xff]
      %v2486 = vld [vmem:[%s6 + $0x5a8] sm:$0xff]
      %v2487 = vld [vmem:[%s6 + $0x5b0] sm:$0xff]
      %v2488 = vld [vmem:[%s6 + $0x5b8] sm:$0xff]
      %v2489 = vld [vmem:[%s6 + $0x5c0] sm:$0xff]
      %v2490 = vld [vmem:[%s6 + $0x5c8] sm:$0xff]
      %v2491 = vld [vmem:[%s6 + $0x5d0] sm:$0xff]
      %v2492 = vld [vmem:[%s6 + $0x5d8] sm:$0xff]
      %v2493 = vld [vmem:[%s6 + $0x5e0] sm:$0xff]
      %v2494 = vld [vmem:[%s6 + $0x5e8] sm:$0xff]
      %v2495 = vld [vmem:[%s6 + $0x5f0] sm:$0xff]
      %v2496 = vld [vmem:[%s6 + $0x5f8] sm:$0xff]
      %v2497 = vld [vmem:[%s6 + $0x600] sm:$0xff]
      %v2498 = vld [vmem:[%s6 + $0x608] sm:$0xff]
      %v2499 = vld [vmem:[%s6 + $0x610] sm:$0xff]
      %v2500 = vld [vmem:[%s6 + $0x618] sm:$0xff]
      %v2501 = vld [vmem:[%s6 + $0x620] sm:$0xff]
      %v2502 = vld [vmem:[%s6 + $0x628] sm:$0xff]
      %v2503 = vld [vmem:[%s6 + $0x630] sm:$0xff]
      %v2504 = vld [vmem:[%s6 + $0x638] sm:$0xff]
      %v2505 = vld [vmem:[%s6 + $0x640] sm:$0xff]
      %v2506 = vld [vmem:[%s6 + $0x648] sm:$0xff]
      %v2507 = vld [vmem:[%s6 + $0x650] sm:$0xff]
      %v2508 = vld [vmem:[%s6 + $0x658] sm:$0xff]
      %v2509 = vld [vmem:[%s6 + $0x660] sm:$0xff]
      %v2510 = vld [vmem:[%s6 + $0x668] sm:$0xff]
      %v2511 = vld [vmem:[%s6 + $0x670] sm:$0xff]
      %v2512 = vld [vmem:[%s6 + $0x678] sm:$0xff]
      %v2513 = vld [vmem:[%s6 + $0x680] sm:$0xff]
      %v2514 = vld [vmem:[%s6 + $0x688] sm:$0xff]
      %v2515 = vld [vmem:[%s6 + $0x690] sm:$0xff]
      %v2516 = vld [vmem:[%s6 + $0x698] sm:$0xff]
      %v2517 = vld [vmem:[%s6 + $0x6a0] sm:$0xff]
      %v2518 = vld [vmem:[%s6 + $0x6a8] sm:$0xff]
      %v2519 = vld [vmem:[%s6 + $0x6b0] sm:$0xff]
      %v2520 = vld [vmem:[%s6 + $0x6b8] sm:$0xff]
      %v2521 = vld [vmem:[%s6 + $0x6c0] sm:$0xff]
      %v2522 = vld [vmem:[%s6 + $0x6c8] sm:$0xff]
      %v2523 = vld [vmem:[%s6 + $0x6d0] sm:$0xff]
      %v2524 = vld [vmem:[%s6 + $0x6d8] sm:$0xff]
      %v2525 = vld [vmem:[%s6 + $0x6e0] sm:$0xff]
      %v2526 = vld [vmem:[%s6 + $0x6e8] sm:$0xff]
      %v2527 = vld [vmem:[%s6 + $0x6f0] sm:$0xff]
      %v2528 = vld [vmem:[%s6 + $0x6f8] sm:$0xff]
      %v2529 = vld [vmem:[%s6 + $0x700] sm:$0xff]
      %v2530 = vld [vmem:[%s6 + $0x708] sm:$0xff]
      %v2531 = vld [vmem:[%s6 + $0x710] sm:$0xff]
      %v2532 = vld [vmem:[%s6 + $0x718] sm:$0xff]
      %v2533 = vld [vmem:[%s6 + $0x720] sm:$0xff]
      %v2534 = vld [vmem:[%s6 + $0x728] sm:$0xff]
      %v2535 = vld [vmem:[%s6 + $0x730] sm:$0xff]
      %v2536 = vld [vmem:[%s6 + $0x738] sm:$0xff]
      %v2537 = vld [vmem:[%s6 + $0x740] sm:$0xff]
      %v2538 = vld [vmem:[%s6 + $0x748] sm:$0xff]
      %v2539 = vld [vmem:[%s6 + $0x750] sm:$0xff]
      %v2540 = vld [vmem:[%s6 + $0x758] sm:$0xff]
      %v2541 = vld [vmem:[%s6 + $0x760] sm:$0xff]
      %v2542 = vld [vmem:[%s6 + $0x768] sm:$0xff]
      %v2543 = vld [vmem:[%s6 + $0x770] sm:$0xff]
      %v2544 = vld [vmem:[%s6 + $0x778] sm:$0xff]
      %v2545 = vld [vmem:[%s6 + $0x780] sm:$0xff]
      %v2546 = vld [vmem:[%s6 + $0x788] sm:$0xff]
      %v2547 = vld [vmem:[%s6 + $0x790] sm:$0xff]
      %v2548 = vld [vmem:[%s6 + $0x798] sm:$0xff]
      %v2549 = vld [vmem:[%s6 + $0x7a0] sm:$0xff]
      %v2550 = vld [vmem:[%s6 + $0x7a8] sm:$0xff]
      %v2551 = vld [vmem:[%s6 + $0x7b0] sm:$0xff]
      %v2552 = vld [vmem:[%s6 + $0x7b8] sm:$0xff]
      %v2553 = vld [vmem:[%s6 + $0x7c0] sm:$0xff]
      %v2554 = vld [vmem:[%s6 + $0x7c8] sm:$0xff]
      %v2555 = vld [vmem:[%s6 + $0x7d0] sm:$0xff]
      %v2556 = vld [vmem:[%s6 + $0x7d8] sm:$0xff]
      %v2557 = vld [vmem:[%s6 + $0x7e0] sm:$0xff]
      %v2558 = vld [vmem:[%s6 + $0x7e8] sm:$0xff]
      %v2559 = vld [vmem:[%s6 + $0x7f0] sm:$0xff]
      %v2560 = vld [vmem:[%s6 + $0x7f8] sm:$0xff]
      %v2561 = vld [vmem:[%s6 + $0x800] sm:$0xff]
      %v2562 = vld [vmem:[%s6 + $0x808] sm:$0xff]
      %v2563 = vld [vmem:[%s6 + $0x810] sm:$0xff]
      %v2564 = vld [vmem:[%s6 + $0x818] sm:$0xff]
      %v2565 = vld [vmem:[%s6 + $0x820] sm:$0xff]
      %v2566 = vld [vmem:[%s6 + $0x828] sm:$0xff]
      %v2567 = vld [vmem:[%s6 + $0x830] sm:$0xff]
      %v2568 = vld [vmem:[%s6 + $0x838] sm:$0xff]
      %v2569 = vld [vmem:[%s6 + $0x840] sm:$0xff]
      %v2570 = vld [vmem:[%s6 + $0x848] sm:$0xff]
      %v2571 = vld [vmem:[%s6 + $0x850] sm:$0xff]
      %v2572 = vld [vmem:[%s6 + $0x858] sm:$0xff]
      %v2573 = vld [vmem:[%s6 + $0x860] sm:$0xff]
      %v2574 = vld [vmem:[%s6 + $0x868] sm:$0xff]
      %v2575 = vld [vmem:[%s6 + $0x870] sm:$0xff]
      %v2576 = vld [vmem:[%s6 + $0x878] sm:$0xff]
      %v2577 = vld [vmem:[%s6 + $0x880] sm:$0xff]
      %v2578 = vld [vmem:[%s6 + $0x888] sm:$0xff]
      %v2579 = vld [vmem:[%s6 + $0x890] sm:$0xff]
      %v2580 = vld [vmem:[%s6 + $0x898] sm:$0xff]
      %v2581 = vld [vmem:[%s6 + $0x8a0] sm:$0xff]
      %v2582 = vld [vmem:[%s6 + $0x8a8] sm:$0xff]
      %v2583 = vld [vmem:[%s6 + $0x8b0] sm:$0xff]
      %v2584 = vld [vmem:[%s6 + $0x8b8] sm:$0xff]
      %v2585 = vld [vmem:[%s6 + $0x8c0] sm:$0xff]
      %v2586 = vld [vmem:[%s6 + $0x8c8] sm:$0xff]
      %v2587 = vld [vmem:[%s6 + $0x8d0] sm:$0xff]
      %v2588 = vld [vmem:[%s6 + $0x8d8] sm:$0xff]
      %v2589 = vld [vmem:[%s6 + $0x8e0] sm:$0xff]
      %v2590 = vld [vmem:[%s6 + $0x8e8] sm:$0xff]
      %v2591 = vld [vmem:[%s6 + $0x8f0] sm:$0xff]
      %v2592 = vld [vmem:[%s6 + $0x8f8] sm:$0xff]
      %v2593 = vld [vmem:[%s6 + $0x900] sm:$0xff]
      %v2594 = vld [vmem:[%s6 + $0x908] sm:$0xff]
      %v2595 = vld [vmem:[%s6 + $0x910] sm:$0xff]
      %v2596 = vld [vmem:[%s6 + $0x918] sm:$0xff]
      %v2597 = vld [vmem:[%s6 + $0x920] sm:$0xff]
      %v2598 = vld [vmem:[%s6 + $0x928] sm:$0xff]
      %v2599 = vld [vmem:[%s6 + $0x930] sm:$0xff]
      %v2600 = vld [vmem:[%s6 + $0x938] sm:$0xff]
      %v2601 = vld [vmem:[%s6 + $0x940] sm:$0xff]
      %v2602 = vld [vmem:[%s6 + $0x948] sm:$0xff]
      %v2603 = vld [vmem:[%s6 + $0x950] sm:$0xff]
      %v2604 = vld [vmem:[%s6 + $0x958] sm:$0xff]
      %v2605 = vld [vmem:[%s6 + $0x960] sm:$0xff]
      %v2606 = vld [vmem:[%s6 + $0x968] sm:$0xff]
      %v2607 = vld [vmem:[%s6 + $0x970] sm:$0xff]
      %v2608 = vld [vmem:[%s6 + $0x978] sm:$0xff]
      %v2609 = vld [vmem:[%s6 + $0x980] sm:$0xff]
      %v2610 = vld [vmem:[%s6 + $0x988] sm:$0xff]
      %v2611 = vld [vmem:[%s6 + $0x990] sm:$0xff]
      %v2612 = vld [vmem:[%s6 + $0x998] sm:$0xff]
      %v2613 = vld [vmem:[%s6 + $0x9a0] sm:$0xff]
      %v2614 = vld [vmem:[%s6 + $0x9a8] sm:$0xff]
      %v2615 = vld [vmem:[%s6 + $0x9b0] sm:$0xff]
      %v2616 = vld [vmem:[%s6 + $0x9b8] sm:$0xff]
      %v2617 = vld [vmem:[%s6 + $0x9c0] sm:$0xff]
      %v2618 = vld [vmem:[%s6 + $0x9c8] sm:$0xff]
      %v2619 = vld [vmem:[%s6 + $0x9d0] sm:$0xff]
      %v2620 = vld [vmem:[%s6 + $0x9d8] sm:$0xff]
      %v2621 = vld [vmem:[%s6 + $0x9e0] sm:$0xff]
      %v2622 = vld [vmem:[%s6 + $0x9e8] sm:$0xff]
      %v2623 = vld [vmem:[%s6 + $0x9f0] sm:$0xff]
      %v2624 = vld [vmem:[%s6 + $0x9f8] sm:$0xff]
      %v2625 = vld [vmem:[%s6 + $0xa00] sm:$0xff]
      %v2626 = vld [vmem:[%s6 + $0xa08] sm:$0xff]
      %v2627 = vld [vmem:[%s6 + $0xa10] sm:$0xff]
      %v2628 = vld [vmem:[%s6 + $0xa18] sm:$0xff]
      %v2629 = vld [vmem:[%s6 + $0xa20] sm:$0xff]
      %v2630 = vld [vmem:[%s6 + $0xa28] sm:$0xff]
      %v2631 = vld [vmem:[%s6 + $0xa30] sm:$0xff]
      %v2632 = vld [vmem:[%s6 + $0xa38] sm:$0xff]
      %v2633 = vld [vmem:[%s6 + $0xa40] sm:$0xff]
      %v2634 = vld [vmem:[%s6 + $0xa48] sm:$0xff]
      %v2635 = vld [vmem:[%s6 + $0xa50] sm:$0xff]
      %v2636 = vld [vmem:[%s6 + $0xa58] sm:$0xff]
      %v2637 = vld [vmem:[%s6 + $0xa60] sm:$0xff]
      %v2638 = vld [vmem:[%s6 + $0xa68] sm:$0xff]
      %v2639 = vld [vmem:[%s6 + $0xa70] sm:$0xff]
      %v2640 = vld [vmem:[%s6 + $0xa78] sm:$0xff]
      %v2641 = vld [vmem:[%s6 + $0xa80] sm:$0xff]
      %v2642 = vld [vmem:[%s6 + $0xa88] sm:$0xff]
      %v2643 = vld [vmem:[%s6 + $0xa90] sm:$0xff]
      %v2644 = vld [vmem:[%s6 + $0xa98] sm:$0xff]
      %v2645 = vld [vmem:[%s6 + $0xaa0] sm:$0xff]
      %v2646 = vld [vmem:[%s6 + $0xaa8] sm:$0xff]
      %v2647 = vld [vmem:[%s6 + $0xab0] sm:$0xff]
      %v2648 = vld [vmem:[%s6 + $0xab8] sm:$0xff]
      %v2649 = vld [vmem:[%s6 + $0xac0] sm:$0xff]
      %v2650 = vld [vmem:[%s6 + $0xac8] sm:$0xff]
      %v2651 = vld [vmem:[%s6 + $0xad0] sm:$0xff]
      %v2652 = vld [vmem:[%s6 + $0xad8] sm:$0xff]
      %v2653 = vld [vmem:[%s6 + $0xae0] sm:$0xff]
      %v2654 = vld [vmem:[%s6 + $0xae8] sm:$0xff]
      %v2655 = vld [vmem:[%s6 + $0xaf0] sm:$0xff]
      %v2656 = vld [vmem:[%s6 + $0xaf8] sm:$0xff]
      %v2657 = vld [vmem:[%s6 + $0xb00] sm:$0xff]
      %v2658 = vld [vmem:[%s6 + $0xb08] sm:$0xff]
      %v2659 = vld [vmem:[%s6 + $0xb10] sm:$0xff]
      %v2660 = vld [vmem:[%s6 + $0xb18] sm:$0xff]
      %v2661 = vld [vmem:[%s6 + $0xb20] sm:$0xff]
      %v2662 = vld [vmem:[%s6 + $0xb28] sm:$0xff]
      %v2663 = vld [vmem:[%s6 + $0xb30] sm:$0xff]
      %v2664 = vld [vmem:[%s6 + $0xb38] sm:$0xff]
      %v2665 = vld [vmem:[%s6 + $0xb40] sm:$0xff]
      %v2666 = vld [vmem:[%s6 + $0xb48] sm:$0xff]
      %v2667 = vld [vmem:[%s6 + $0xb50] sm:$0xff]
      %v2668 = vld [vmem:[%s6 + $0xb58] sm:$0xff]
      %v2669 = vld [vmem:[%s6 + $0xb60] sm:$0xff]
      %v2670 = vld [vmem:[%s6 + $0xb68] sm:$0xff]
      %v2671 = vld [vmem:[%s6 + $0xb70] sm:$0xff]
      %v2672 = vld [vmem:[%s6 + $0xb78] sm:$0xff]
      %v2673 = vld [vmem:[%s6 + $0xb80] sm:$0xff]
      %v2674 = vld [vmem:[%s6 + $0xb88] sm:$0xff]
      %v2675 = vld [vmem:[%s6 + $0xb90] sm:$0xff]
      %v2676 = vld [vmem:[%s6 + $0xb98] sm:$0xff]
      %v2677 = vld [vmem:[%s6 + $0xba0] sm:$0xff]
      %v2678 = vld [vmem:[%s6 + $0xba8] sm:$0xff]
      %v2679 = vld [vmem:[%s6 + $0xbb0] sm:$0xff]
      %v2680 = vld [vmem:[%s6 + $0xbb8] sm:$0xff]
      %v2681 = vld [vmem:[%s6 + $0xbc0] sm:$0xff]
      %v2682 = vld [vmem:[%s6 + $0xbc8] sm:$0xff]
      %v2683 = vld [vmem:[%s6 + $0xbd0] sm:$0xff]
      %v2684 = vld [vmem:[%s6 + $0xbd8] sm:$0xff]
      %v2685 = vld [vmem:[%s6 + $0xbe0] sm:$0xff]
      %v2686 = vld [vmem:[%s6 + $0xbe8] sm:$0xff]
      %v2687 = vld [vmem:[%s6 + $0xbf0] sm:$0xff]
      %v2688 = vld [vmem:[%s6 + $0xbf8] sm:$0xff]
      %v2689 = vld [vmem:[%s7] sm:$0x7]
      %v2691 = vlaneseq
      %v2692 = vshrl.u32 %v2691, 7
      %v2693 = vsub.s32 0, %v2692
      %v2694 = vrot.slane %v2689, %v2693
      %v2695 = vlaneseq
      %v2696 = vshrl.u32 %v2695, 7
      %v2697 = vsub.s32 1, %v2696
      %v2698 = vrot.slane %v2689, %v2697
      %v2699 = vlaneseq
      %v2700 = vshrl.u32 %v2699, 7
      %v2701 = vsub.s32 2, %v2700
      %v2702 = vrot.slane %v2689, %v2701
      %2706 = vmatprep.subr.mxu0 %v2306
      %2707 = vmatpush1.msra.mxu0 %v2305
      %2708 = vmatprep.subr.mxu0 %v2309
      %2709 = vmatpush1.msra.mxu0 %v2308
      %2710 = vmatprep.subr.mxu0 %v2312
      %2711 = vmatpush1.msra.mxu0 %v2311
      %2712 = vmatprep.subr.mxu0 %v2315
      %2713 = vmatpush1.msra.mxu0 %v2314
      %2714 = vmatprep.subr.mxu0 %v2318
      %2715 = vmatpush1.msra.mxu0 %v2317
      %2716 = vmatprep.subr.mxu0 %v2321
      %2717 = vmatpush1.msra.mxu0 %v2320
      %2718 = vmatprep.subr.mxu0 %v2324
      %2719 = vmatpush1.msra.mxu0 %v2323
      %2720 = vmatprep.subr.mxu0 %v2327
      %2721 = vmatpush1.msra.mxu0 %v2326
      %2722 = vmatprep.subr.mxu0 %v2330
      %2723 = vmatpush1.msra.mxu0 %v2329
      %2724 = vmatprep.subr.mxu0 %v2333
      %2725 = vmatpush1.msra.mxu0 %v2332
      %2726 = vmatprep.subr.mxu0 %v2336
      %2727 = vmatpush1.msra.mxu0 %v2335
      %2728 = vmatprep.subr.mxu0 %v2339
      %2729 = vmatpush1.msra.mxu0 %v2338
      %2730 = vmatprep.subr.mxu0 %v2342
      %2731 = vmatpush1.msra.mxu0 %v2341
      %2732 = vmatprep.subr.mxu0 %v2345
      %2733 = vmatpush1.msra.mxu0 %v2344
      %2734 = vmatprep.subr.mxu0 %v2348
      %2735 = vmatpush1.msra.mxu0 %v2347
      %2736 = vmatprep.subr.mxu0 %v2351
      %2737 = vmatpush1.msra.mxu0 %v2350
      %2738 = vmatprep.subr.mxu0 %v2354
      %2739 = vmatpush1.msra.mxu0 %v2353
      %2740 = vmatprep.subr.mxu0 %v2357
      %2741 = vmatpush1.msra.mxu0 %v2356
      %2742 = vmatprep.subr.mxu0 %v2360
      %2743 = vmatpush1.msra.mxu0 %v2359
      %2744 = vmatprep.subr.mxu0 %v2363
      %2745 = vmatpush1.msra.mxu0 %v2362
      %2746 = vmatprep.subr.mxu0 %v2366
      %2747 = vmatpush1.msra.mxu0 %v2365
      %2748 = vmatprep.subr.mxu0 %v2369
      %2749 = vmatpush1.msra.mxu0 %v2368
      %2750 = vmatprep.subr.mxu0 %v2372
      %2751 = vmatpush1.msra.mxu0 %v2371
      %2752 = vmatprep.subr.mxu0 %v2375
      %2753 = vmatpush1.msra.mxu0 %v2374
      %2754 = vmatprep.subr.mxu0 %v2378
      %2755 = vmatpush1.msra.mxu0 %v2377
      %2756 = vmatprep.subr.mxu0 %v2381
      %2757 = vmatpush1.msra.mxu0 %v2380
      %2758 = vmatprep.subr.mxu0 %v2384
      %2759 = vmatpush1.msra.mxu0 %v2383
      %2760 = vmatprep.subr.mxu0 %v2387
      %2761 = vmatpush1.msra.mxu0 %v2386
      %2762 = vmatprep.subr.mxu0 %v2390
      %2763 = vmatpush1.msra.mxu0 %v2389
      %2764 = vmatprep.subr.mxu0 %v2393
      %2765 = vmatpush1.msra.mxu0 %v2392
      %2766 = vmatprep.subr.mxu0 %v2396
      %2767 = vmatpush1.msra.mxu0 %v2395
      %2768 = vmatprep.subr.mxu0 %v2399
      %2769 = vmatpush1.msra.mxu0 %v2398
      %2770 = vmatprep.mubr.f32.mxu0 %v2274
      %2771 = vmatmul.mubr.f32.gmra.mrb[0].mxu0 %v2273
      %v2772 = vpop.f32.mrb[0].mxu0
      %v2773 = vadd.f32 %v2694, %v2772
      %v2774 = vpop.f32.mrb[0].mxu0
      %v2775 = vadd.f32 %v2698, %v2774
      %2776 = vmatprep.mubr.f32.mxu0 %v2282
      %2777 = vmatmul.mubr.f32.gmra.mrb[0].mxu0 %v2281
      %v2778 = vpop.f32.mrb[0].mxu0
      %v2779 = vadd.f32 %v2694, %v2778
      %v2780 = vpop.f32.mrb[0].mxu0
      %v2781 = vadd.f32 %v2698, %v2780
      %2782 = vmatprep.mubr.f32.mxu0 %v2290
      %2783 = vmatmul.mubr.f32.gmra.mrb[0].mxu0 %v2289
      %v2784 = vpop.f32.mrb[0].mxu0
      %v2785 = vadd.f32 %v2694, %v2784
      %v2786 = vpop.f32.mrb[0].mxu0
      %v2787 = vadd.f32 %v2698, %v2786
      %2788 = vmatprep.mubr.f32.mxu0 %v2298
      %2789 = vmatmul.mubr.f32.gmra.mrb[0].mxu0 %v2297
      %v2790 = vpop.f32.mrb[0].mxu0
      %v2791 = vadd.f32 %v2694, %v2790
      %v2792 = vpop.f32.mrb[0].mxu0
      %v2793 = vadd.f32 %v2698, %v2792
      %2794 = vdwg.mxu0
      %2795 = vmatprep.subr.mxu0 %v2402
      %2796 = vmatpush1.msra.mxu0 %v2401
      %2797 = vmatprep.subr.mxu0 %v2405
      %2798 = vmatpush1.msra.mxu0 %v2404
      %2799 = vmatprep.subr.mxu0 %v2408
      %2800 = vmatpush1.msra.mxu0 %v2407
      %2801 = vmatprep.subr.mxu0 %v2411
      %2802 = vmatpush1.msra.mxu0 %v2410
      %2803 = vmatprep.subr.mxu0 %v2414
      %2804 = vmatpush1.msra.mxu0 %v2413
      %2805 = vmatprep.subr.mxu0 %v2417
      %2806 = vmatpush1.msra.mxu0 %v2416
      %2807 = vmatprep.subr.mxu0 %v2420
      %2808 = vmatpush1.msra.mxu0 %v2419
      %2809 = vmatprep.subr.mxu0 %v2423
      %2810 = vmatpush1.msra.mxu0 %v2422
      %2811 = vmatprep.subr.mxu0 %v2426
      %2812 = vmatpush1.msra.mxu0 %v2425
      %2813 = vmatprep.subr.mxu0 %v2429
      %2814 = vmatpush1.msra.mxu0 %v2428
      %2815 = vmatprep.subr.mxu0 %v2432
      %2816 = vmatpush1.msra.mxu0 %v2431
      %2817 = vmatprep.subr.mxu0 %v2435
      %2818 = vmatpush1.msra.mxu0 %v2434
      %2819 = vmatprep.subr.mxu0 %v2438
      %2820 = vmatpush1.msra.mxu0 %v2437
      %2821 = vmatprep.subr.mxu0 %v2441
      %2822 = vmatpush1.msra.mxu0 %v2440
      %2823 = vmatprep.subr.mxu0 %v2444
      %2824 = vmatpush1.msra.mxu0 %v2443
      %2825 = vmatprep.subr.mxu0 %v2447
      %2826 = vmatpush1.msra.mxu0 %v2446
      %2827 = vmatprep.subr.mxu0 %v2450
      %2828 = vmatpush1.msra.mxu0 %v2449
      %2829 = vmatprep.subr.mxu0 %v2453
      %2830 = vmatpush1.msra.mxu0 %v2452
      %2831 = vmatprep.subr.mxu0 %v2456
      %2832 = vmatpush1.msra.mxu0 %v2455
      %2833 = vmatprep.subr.mxu0 %v2459
      %2834 = vmatpush1.msra.mxu0 %v2458
      %2835 = vmatprep.subr.mxu0 %v2462
      %2836 = vmatpush1.msra.mxu0 %v2461
      %2837 = vmatprep.subr.mxu0 %v2465
      %2838 = vmatpush1.msra.mxu0 %v2464
      %2839 = vmatprep.subr.mxu0 %v2468
      %2840 = vmatpush1.msra.mxu0 %v2467
      %2841 = vmatprep.subr.mxu0 %v2471
      %2842 = vmatpush1.msra.mxu0 %v2470
      %2843 = vmatprep.subr.mxu0 %v2474
      %2844 = vmatpush1.msra.mxu0 %v2473
      %2845 = vmatprep.subr.mxu0 %v2477
      %2846 = vmatpush1.msra.mxu0 %v2476
      %2847 = vmatprep.subr.mxu0 %v2480
      %2848 = vmatpush1.msra.mxu0 %v2479
      %2849 = vmatprep.subr.mxu0 %v2483
      %2850 = vmatpush1.msra.mxu0 %v2482
      %2851 = vmatprep.subr.mxu0 %v2486
      %2852 = vmatpush1.msra.mxu0 %v2485
      %2853 = vmatprep.subr.mxu0 %v2489
      %2854 = vmatpush1.msra.mxu0 %v2488
      %2855 = vmatprep.subr.mxu0 %v2492
      %2856 = vmatpush1.msra.mxu0 %v2491
      %2857 = vmatprep.subr.mxu0 %v2495
      %2858 = vmatpush1.msra.mxu0 %v2494
      %2859 = vmatprep.mubr.f32.mxu0 %v2276
      %2860 = vmatmul.mubr.f32.gmra.mrb[0].mxu0 %v2275
      %v2861 = vpop.f32.mrb[0].mxu0
      %v2862 = vadd.f32 %v2773, %v2861
      %v2863 = vpop.f32.mrb[0].mxu0
      %v2864 = vadd.f32 %v2775, %v2863
      %2865 = vmatprep.mubr.f32.mxu0 %v2284
      %2866 = vmatmul.mubr.f32.gmra.mrb[0].mxu0 %v2283
      %v2867 = vpop.f32.mrb[0].mxu0
      %v2868 = vadd.f32 %v2779, %v2867
      %v2869 = vpop.f32.mrb[0].mxu0
      %v2870 = vadd.f32 %v2781, %v2869
      %2871 = vmatprep.mubr.f32.mxu0 %v2292
      %2872 = vmatmul.mubr.f32.gmra.mrb[0].mxu0 %v2291
      %v2873 = vpop.f32.mrb[0].mxu0
      %v2874 = vadd.f32 %v2785, %v2873
      %v2875 = vpop.f32.mrb[0].mxu0
      %v2876 = vadd.f32 %v2787, %v2875
      %2877 = vmatprep.mubr.f32.mxu0 %v2300
      %2878 = vmatmul.mubr.f32.gmra.mrb[0].mxu0 %v2299
      %v2879 = vpop.f32.mrb[0].mxu0
      %v2880 = vadd.f32 %v2791, %v2879
      %v2881 = vpop.f32.mrb[0].mxu0
      %v2882 = vadd.f32 %v2793, %v2881
      %2883 = vdwg.mxu0
      %2884 = vmatprep.subr.mxu0 %v2498
      %2885 = vmatpush1.msra.mxu0 %v2497
      %2886 = vmatprep.subr.mxu0 %v2501
      %2887 = vmatpush1.msra.mxu0 %v2500
      %2888 = vmatprep.subr.mxu0 %v2504
      %2889 = vmatpush1.msra.mxu0 %v2503
      %2890 = vmatprep.subr.mxu0 %v2507
      %2891 = vmatpush1.msra.mxu0 %v2506
      %2892 = vmatprep.subr.mxu0 %v2510
      %2893 = vmatpush1.msra.mxu0 %v2509
      %2894 = vmatprep.subr.mxu0 %v2513
      %2895 = vmatpush1.msra.mxu0 %v2512
      %2896 = vmatprep.subr.mxu0 %v2516
      %2897 = vmatpush1.msra.mxu0 %v2515
      %2898 = vmatprep.subr.mxu0 %v2519
      %2899 = vmatpush1.msra.mxu0 %v2518
      %2900 = vmatprep.subr.mxu0 %v2522
      %2901 = vmatpush1.msra.mxu0 %v2521
      %2902 = vmatprep.subr.mxu0 %v2525
      %2903 = vmatpush1.msra.mxu0 %v2524
      %2904 = vmatprep.subr.mxu0 %v2528
      %2905 = vmatpush1.msra.mxu0 %v2527
      %2906 = vmatprep.subr.mxu0 %v2531
      %2907 = vmatpush1.msra.mxu0 %v2530
      %2908 = vmatprep.subr.mxu0 %v2534
      %2909 = vmatpush1.msra.mxu0 %v2533
      %2910 = vmatprep.subr.mxu0 %v2537
      %2911 = vmatpush1.msra.mxu0 %v2536
      %2912 = vmatprep.subr.mxu0 %v2540
      %2913 = vmatpush1.msra.mxu0 %v2539
      %2914 = vmatprep.subr.mxu0 %v2543
      %2915 = vmatpush1.msra.mxu0 %v2542
      %2916 = vmatprep.subr.mxu0 %v2546
      %2917 = vmatpush1.msra.mxu0 %v2545
      %2918 = vmatprep.subr.mxu0 %v2549
      %2919 = vmatpush1.msra.mxu0 %v2548
      %2920 = vmatprep.subr.mxu0 %v2552
      %2921 = vmatpush1.msra.mxu0 %v2551
      %2922 = vmatprep.subr.mxu0 %v2555
      %2923 = vmatpush1.msra.mxu0 %v2554
      %2924 = vmatprep.subr.mxu0 %v2558
      %2925 = vmatpush1.msra.mxu0 %v2557
      %2926 = vmatprep.subr.mxu0 %v2561
      %2927 = vmatpush1.msra.mxu0 %v2560
      %2928 = vmatprep.subr.mxu0 %v2564
      %2929 = vmatpush1.msra.mxu0 %v2563
      %2930 = vmatprep.subr.mxu0 %v2567
      %2931 = vmatpush1.msra.mxu0 %v2566
      %2932 = vmatprep.subr.mxu0 %v2570
      %2933 = vmatpush1.msra.mxu0 %v2569
      %2934 = vmatprep.subr.mxu0 %v2573
      %2935 = vmatpush1.msra.mxu0 %v2572
      %2936 = vmatprep.subr.mxu0 %v2576
      %2937 = vmatpush1.msra.mxu0 %v2575
      %2938 = vmatprep.subr.mxu0 %v2579
      %2939 = vmatpush1.msra.mxu0 %v2578
      %2940 = vmatprep.subr.mxu0 %v2582
      %2941 = vmatpush1.msra.mxu0 %v2581
      %2942 = vmatprep.subr.mxu0 %v2585
      %2943 = vmatpush1.msra.mxu0 %v2584
      %2944 = vmatprep.subr.mxu0 %v2588
      %2945 = vmatpush1.msra.mxu0 %v2587
      %2946 = vmatprep.subr.mxu0 %v2591
      %2947 = vmatpush1.msra.mxu0 %v2590
      %2948 = vmatprep.mubr.f32.mxu0 %v2278
      %2949 = vmatmul.mubr.f32.gmra.mrb[0].mxu0 %v2277
      %v2950 = vpop.f32.mrb[0].mxu0
      %v2951 = vadd.f32 %v2862, %v2950
      %v2952 = vpop.f32.mrb[0].mxu0
      %v2953 = vadd.f32 %v2864, %v2952
      %2954 = vmatprep.mubr.f32.mxu0 %v2286
      %2955 = vmatmul.mubr.f32.gmra.mrb[0].mxu0 %v2285
      %v2956 = vpop.f32.mrb[0].mxu0
      %v2957 = vadd.f32 %v2868, %v2956
      %v2958 = vpop.f32.mrb[0].mxu0
      %v2959 = vadd.f32 %v2870, %v2958
      %2960 = vmatprep.mubr.f32.mxu0 %v2294
      %2961 = vmatmul.mubr.f32.gmra.mrb[0].mxu0 %v2293
      %v2962 = vpop.f32.mrb[0].mxu0
      %v2963 = vadd.f32 %v2874, %v2962
      %v2964 = vpop.f32.mrb[0].mxu0
      %v2965 = vadd.f32 %v2876, %v2964
      %2966 = vmatprep.mubr.f32.mxu0 %v2302
      %2967 = vmatmul.mubr.f32.gmra.mrb[0].mxu0 %v2301
      %v2968 = vpop.f32.mrb[0].mxu0
      %v2969 = vadd.f32 %v2880, %v2968
      %v2970 = vpop.f32.mrb[0].mxu0
      %v2971 = vadd.f32 %v2882, %v2970
      %2972 = vdwg.mxu0
      %2973 = vmatprep.subr.mxu0 %v2594
      %2974 = vmatpush1.msra.mxu0 %v2593
      %2975 = vmatprep.subr.mxu0 %v2597
      %2976 = vmatpush1.msra.mxu0 %v2596
      %2977 = vmatprep.subr.mxu0 %v2600
      %2978 = vmatpush1.msra.mxu0 %v2599
      %2979 = vmatprep.subr.mxu0 %v2603
      %2980 = vmatpush1.msra.mxu0 %v2602
      %2981 = vmatprep.subr.mxu0 %v2606
      %2982 = vmatpush1.msra.mxu0 %v2605
      %2983 = vmatprep.subr.mxu0 %v2609
      %2984 = vmatpush1.msra.mxu0 %v2608
      %2985 = vmatprep.subr.mxu0 %v2612
      %2986 = vmatpush1.msra.mxu0 %v2611
      %2987 = vmatprep.subr.mxu0 %v2615
      %2988 = vmatpush1.msra.mxu0 %v2614
      %2989 = vmatprep.subr.mxu0 %v2618
      %2990 = vmatpush1.msra.mxu0 %v2617
      %2991 = vmatprep.subr.mxu0 %v2621
      %2992 = vmatpush1.msra.mxu0 %v2620
      %2993 = vmatprep.subr.mxu0 %v2624
      %2994 = vmatpush1.msra.mxu0 %v2623
      %2995 = vmatprep.subr.mxu0 %v2627
      %2996 = vmatpush1.msra.mxu0 %v2626
      %2997 = vmatprep.subr.mxu0 %v2630
      %2998 = vmatpush1.msra.mxu0 %v2629
      %2999 = vmatprep.subr.mxu0 %v2633
      %3000 = vmatpush1.msra.mxu0 %v2632
      %3001 = vmatprep.subr.mxu0 %v2636
      %3002 = vmatpush1.msra.mxu0 %v2635
      %3003 = vmatprep.subr.mxu0 %v2639
      %3004 = vmatpush1.msra.mxu0 %v2638
      %3005 = vmatprep.subr.mxu0 %v2642
      %3006 = vmatpush1.msra.mxu0 %v2641
      %3007 = vmatprep.subr.mxu0 %v2645
      %3008 = vmatpush1.msra.mxu0 %v2644
      %3009 = vmatprep.subr.mxu0 %v2648
      %3010 = vmatpush1.msra.mxu0 %v2647
      %3011 = vmatprep.subr.mxu0 %v2651
      %3012 = vmatpush1.msra.mxu0 %v2650
      %3013 = vmatprep.subr.mxu0 %v2654
      %3014 = vmatpush1.msra.mxu0 %v2653
      %3015 = vmatprep.subr.mxu0 %v2657
      %3016 = vmatpush1.msra.mxu0 %v2656
      %3017 = vmatprep.subr.mxu0 %v2660
      %3018 = vmatpush1.msra.mxu0 %v2659
      %3019 = vmatprep.subr.mxu0 %v2663
      %3020 = vmatpush1.msra.mxu0 %v2662
      %3021 = vmatprep.subr.mxu0 %v2666
      %3022 = vmatpush1.msra.mxu0 %v2665
      %3023 = vmatprep.subr.mxu0 %v2669
      %3024 = vmatpush1.msra.mxu0 %v2668
      %3025 = vmatprep.subr.mxu0 %v2672
      %3026 = vmatpush1.msra.mxu0 %v2671
      %3027 = vmatprep.subr.mxu0 %v2675
      %3028 = vmatpush1.msra.mxu0 %v2674
      %3029 = vmatprep.subr.mxu0 %v2678
      %3030 = vmatpush1.msra.mxu0 %v2677
      %3031 = vmatprep.subr.mxu0 %v2681
      %3032 = vmatpush1.msra.mxu0 %v2680
      %3033 = vmatprep.subr.mxu0 %v2684
      %3034 = vmatpush1.msra.mxu0 %v2683
      %3035 = vmatprep.subr.mxu0 %v2687
      %3036 = vmatpush1.msra.mxu0 %v2686
      %3037 = vmatprep.mubr.f32.mxu0 %v2280
      %3038 = vmatmul.mubr.f32.gmra.mrb[0].mxu0 %v2279
      %v3039 = vpop.f32.mrb[0].mxu0
      %v3040 = vadd.f32 %v2951, %v3039
      %v3041 = vpop.f32.mrb[0].mxu0
      %v3042 = vadd.f32 %v2953, %v3041
      %3043 = vmatprep.mubr.f32.mxu0 %v2288
      %3044 = vmatmul.mubr.f32.gmra.mrb[0].mxu0 %v2287
      %v3045 = vpop.f32.mrb[0].mxu0
      %v3046 = vadd.f32 %v2957, %v3045
      %v3047 = vpop.f32.mrb[0].mxu0
      %v3048 = vadd.f32 %v2959, %v3047
      %3049 = vmatprep.mubr.f32.mxu0 %v2296
      %3050 = vmatmul.mubr.f32.gmra.mrb[0].mxu0 %v2295
      %v3051 = vpop.f32.mrb[0].mxu0
      %v3052 = vadd.f32 %v2963, %v3051
      %v3053 = vpop.f32.mrb[0].mxu0
      %v3054 = vadd.f32 %v2965, %v3053
      %3055 = vmatprep.mubr.f32.mxu0 %v2304
      %3056 = vmatmul.mubr.f32.gmra.mrb[0].mxu0 %v2303
      %v3057 = vpop.f32.mrb[0].mxu0
      %v3058 = vadd.f32 %v2969, %v3057
      %v3059 = vpop.f32.mrb[0].mxu0
      %v3060 = vadd.f32 %v2971, %v3059
      %3061 = vdwg.mxu0
      %3062 = vmatprep.subr.mxu0 0.0
      %3063 = vmatpush1.msra.mxu0 %v2307
      %3064 = vmatprep.subr.mxu0 0.0
      %3065 = vmatpush1.msra.mxu0 %v2310
      %3066 = vmatprep.subr.mxu0 0.0
      %3067 = vmatpush1.msra.mxu0 %v2313
      %3068 = vmatprep.subr.mxu0 0.0
      %3069 = vmatpush1.msra.mxu0 %v2316
      %3070 = vmatprep.subr.mxu0 0.0
      %3071 = vmatpush1.msra.mxu0 %v2319
      %3072 = vmatprep.subr.mxu0 0.0
      %3073 = vmatpush1.msra.mxu0 %v2322
      %3074 = vmatprep.subr.mxu0 0.0
      %3075 = vmatpush1.msra.mxu0 %v2325
      %3076 = vmatprep.subr.mxu0 0.0
      %3077 = vmatpush1.msra.mxu0 %v2328
      %3078 = vmatprep.subr.mxu0 0.0
      %3079 = vmatpush1.msra.mxu0 %v2331
      %3080 = vmatprep.subr.mxu0 0.0
      %3081 = vmatpush1.msra.mxu0 %v2334
      %3082 = vmatprep.subr.mxu0 0.0
      %3083 = vmatpush1.msra.mxu0 %v2337
      %3084 = vmatprep.subr.mxu0 0.0
      %3085 = vmatpush1.msra.mxu0 %v2340
      %3086 = vmatprep.subr.mxu0 0.0
      %3087 = vmatpush1.msra.mxu0 %v2343
      %3088 = vmatprep.subr.mxu0 0.0
      %3089 = vmatpush1.msra.mxu0 %v2346
      %3090 = vmatprep.subr.mxu0 0.0
      %3091 = vmatpush1.msra.mxu0 %v2349
      %3092 = vmatprep.subr.mxu0 0.0
      %3093 = vmatpush1.msra.mxu0 %v2352
      %3094 = vmatprep.subr.mxu0 0.0
      %3095 = vmatpush1.msra.mxu0 %v2355
      %3096 = vmatprep.subr.mxu0 0.0
      %3097 = vmatpush1.msra.mxu0 %v2358
      %3098 = vmatprep.subr.mxu0 0.0
      %3099 = vmatpush1.msra.mxu0 %v2361
      %3100 = vmatprep.subr.mxu0 0.0
      %3101 = vmatpush1.msra.mxu0 %v2364
      %3102 = vmatprep.subr.mxu0 0.0
      %3103 = vmatpush1.msra.mxu0 %v2367
      %3104 = vmatprep.subr.mxu0 0.0
      %3105 = vmatpush1.msra.mxu0 %v2370
      %3106 = vmatprep.subr.mxu0 0.0
      %3107 = vmatpush1.msra.mxu0 %v2373
      %3108 = vmatprep.subr.mxu0 0.0
      %3109 = vmatpush1.msra.mxu0 %v2376
      %3110 = vmatprep.subr.mxu0 0.0
      %3111 = vmatpush1.msra.mxu0 %v2379
      %3112 = vmatprep.subr.mxu0 0.0
      %3113 = vmatpush1.msra.mxu0 %v2382
      %3114 = vmatprep.subr.mxu0 0.0
      %3115 = vmatpush1.msra.mxu0 %v2385
      %3116 = vmatprep.subr.mxu0 0.0
      %3117 = vmatpush1.msra.mxu0 %v2388
      %3118 = vmatprep.subr.mxu0 0.0
      %3119 = vmatpush1.msra.mxu0 %v2391
      %3120 = vmatprep.subr.mxu0 0.0
      %3121 = vmatpush1.msra.mxu0 %v2394
      %3122 = vmatprep.subr.mxu0 0.0
      %3123 = vmatpush1.msra.mxu0 %v2397
      %3124 = vmatprep.subr.mxu0 0.0
      %3125 = vmatpush1.msra.mxu0 %v2400
      %3126 = vmatprep.mubr.f32.mxu0 %v2274
      %3127 = vmatmul.mubr.f32.gmra.mrb[0].mxu0 %v2273
      %v3128 = vpop.f32.mrb[0].mxu0
      %v3129 = vadd.f32 %v2702, %v3128
      %v3130 = vpop.f32.mrb[0].mxu0
      %3131 = vmatprep.mubr.f32.mxu0 %v2282
      %3132 = vmatmul.mubr.f32.gmra.mrb[0].mxu0 %v2281
      %v3133 = vpop.f32.mrb[0].mxu0
      %v3134 = vadd.f32 %v2702, %v3133
      %v3135 = vpop.f32.mrb[0].mxu0
      %3136 = vmatprep.mubr.f32.mxu0 %v2290
      %3137 = vmatmul.mubr.f32.gmra.mrb[0].mxu0 %v2289
      %v3138 = vpop.f32.mrb[0].mxu0
      %v3139 = vadd.f32 %v2702, %v3138
      %v3140 = vpop.f32.mrb[0].mxu0
      %3141 = vmatprep.mubr.f32.mxu0 %v2298
      %3142 = vmatmul.mubr.f32.gmra.mrb[0].mxu0 %v2297
      %v3143 = vpop.f32.mrb[0].mxu0
      %v3144 = vadd.f32 %v2702, %v3143
      %v3145 = vpop.f32.mrb[0].mxu0
      %3146 = vdwg.mxu0
      %3147 = vmatprep.subr.mxu0 0.0
      %3148 = vmatpush1.msra.mxu0 %v2403
      %3149 = vmatprep.subr.mxu0 0.0
      %3150 = vmatpush1.msra.mxu0 %v2406
      %3151 = vmatprep.subr.mxu0 0.0
      %3152 = vmatpush1.msra.mxu0 %v2409
      %3153 = vmatprep.subr.mxu0 0.0
      %3154 = vmatpush1.msra.mxu0 %v2412
      %3155 = vmatprep.subr.mxu0 0.0
      %3156 = vmatpush1.msra.mxu0 %v2415
      %3157 = vmatprep.subr.mxu0 0.0
      %3158 = vmatpush1.msra.mxu0 %v2418
      %3159 = vmatprep.subr.mxu0 0.0
      %3160 = vmatpush1.msra.mxu0 %v2421
      %3161 = vmatprep.subr.mxu0 0.0
      %3162 = vmatpush1.msra.mxu0 %v2424
      %3163 = vmatprep.subr.mxu0 0.0
      %3164 = vmatpush1.msra.mxu0 %v2427
      %3165 = vmatprep.subr.mxu0 0.0
      %3166 = vmatpush1.msra.mxu0 %v2430
      %3167 = vmatprep.subr.mxu0 0.0
      %3168 = vmatpush1.msra.mxu0 %v2433
      %3169 = vmatprep.subr.mxu0 0.0
      %3170 = vmatpush1.msra.mxu0 %v2436
      %3171 = vmatprep.subr.mxu0 0.0
      %3172 = vmatpush1.msra.mxu0 %v2439
      %3173 = vmatprep.subr.mxu0 0.0
      %3174 = vmatpush1.msra.mxu0 %v2442
      %3175 = vmatprep.subr.mxu0 0.0
      %3176 = vmatpush1.msra.mxu0 %v2445
      %3177 = vmatprep.subr.mxu0 0.0
      %3178 = vmatpush1.msra.mxu0 %v2448
      %3179 = vmatprep.subr.mxu0 0.0
      %3180 = vmatpush1.msra.mxu0 %v2451
      %3181 = vmatprep.subr.mxu0 0.0
      %3182 = vmatpush1.msra.mxu0 %v2454
      %3183 = vmatprep.subr.mxu0 0.0
      %3184 = vmatpush1.msra.mxu0 %v2457
      %3185 = vmatprep.subr.mxu0 0.0
      %3186 = vmatpush1.msra.mxu0 %v2460
      %3187 = vmatprep.subr.mxu0 0.0
      %3188 = vmatpush1.msra.mxu0 %v2463
      %3189 = vmatprep.subr.mxu0 0.0
      %3190 = vmatpush1.msra.mxu0 %v2466
      %3191 = vmatprep.subr.mxu0 0.0
      %3192 = vmatpush1.msra.mxu0 %v2469
      %3193 = vmatprep.subr.mxu0 0.0
      %3194 = vmatpush1.msra.mxu0 %v2472
      %3195 = vmatprep.subr.mxu0 0.0
      %3196 = vmatpush1.msra.mxu0 %v2475
      %3197 = vmatprep.subr.mxu0 0.0
      %3198 = vmatpush1.msra.mxu0 %v2478
      %3199 = vmatprep.subr.mxu0 0.0
      %3200 = vmatpush1.msra.mxu0 %v2481
      %3201 = vmatprep.subr.mxu0 0.0
      %3202 = vmatpush1.msra.mxu0 %v2484
      %3203 = vmatprep.subr.mxu0 0.0
      %3204 = vmatpush1.msra.mxu0 %v2487
      %3205 = vmatprep.subr.mxu0 0.0
      %3206 = vmatpush1.msra.mxu0 %v2490
      %3207 = vmatprep.subr.mxu0 0.0
      %3208 = vmatpush1.msra.mxu0 %v2493
      %3209 = vmatprep.subr.mxu0 0.0
      %3210 = vmatpush1.msra.mxu0 %v2496
      %3211 = vmatprep.mubr.f32.mxu0 %v2276
      %3212 = vmatmul.mubr.f32.gmra.mrb[0].mxu0 %v2275
      %v3213 = vpop.f32.mrb[0].mxu0
      %v3214 = vadd.f32 %v3129, %v3213
      %v3215 = vpop.f32.mrb[0].mxu0
      %3216 = vmatprep.mubr.f32.mxu0 %v2284
      %3217 = vmatmul.mubr.f32.gmra.mrb[0].mxu0 %v2283
      %v3218 = vpop.f32.mrb[0].mxu0
      %v3219 = vadd.f32 %v3134, %v3218
      %v3220 = vpop.f32.mrb[0].mxu0
      %3221 = vmatprep.mubr.f32.mxu0 %v2292
      %3222 = vmatmul.mubr.f32.gmra.mrb[0].mxu0 %v2291
      %v3223 = vpop.f32.mrb[0].mxu0
      %v3224 = vadd.f32 %v3139, %v3223
      %v3225 = vpop.f32.mrb[0].mxu0
      %3226 = vmatprep.mubr.f32.mxu0 %v2300
      %3227 = vmatmul.mubr.f32.gmra.mrb[0].mxu0 %v2299
      %v3228 = vpop.f32.mrb[0].mxu0
      %v3229 = vadd.f32 %v3144, %v3228
      %v3230 = vpop.f32.mrb[0].mxu0
      %3231 = vdwg.mxu0
      %3232 = vmatprep.subr.mxu0 0.0
      %3233 = vmatpush1.msra.mxu0 %v2499
      %3234 = vmatprep.subr.mxu0 0.0
      %3235 = vmatpush1.msra.mxu0 %v2502
      %3236 = vmatprep.subr.mxu0 0.0
      %3237 = vmatpush1.msra.mxu0 %v2505
      %3238 = vmatprep.subr.mxu0 0.0
      %3239 = vmatpush1.msra.mxu0 %v2508
      %3240 = vmatprep.subr.mxu0 0.0
      %3241 = vmatpush1.msra.mxu0 %v2511
      %3242 = vmatprep.subr.mxu0 0.0
      %3243 = vmatpush1.msra.mxu0 %v2514
      %3244 = vmatprep.subr.mxu0 0.0
      %3245 = vmatpush1.msra.mxu0 %v2517
      %3246 = vmatprep.subr.mxu0 0.0
      %3247 = vmatpush1.msra.mxu0 %v2520
      %3248 = vmatprep.subr.mxu0 0.0
      %3249 = vmatpush1.msra.mxu0 %v2523
      %3250 = vmatprep.subr.mxu0 0.0
      %3251 = vmatpush1.msra.mxu0 %v2526
      %3252 = vmatprep.subr.mxu0 0.0
      %3253 = vmatpush1.msra.mxu0 %v2529
      %3254 = vmatprep.subr.mxu0 0.0
      %3255 = vmatpush1.msra.mxu0 %v2532
      %3256 = vmatprep.subr.mxu0 0.0
      %3257 = vmatpush1.msra.mxu0 %v2535
      %3258 = vmatprep.subr.mxu0 0.0
      %3259 = vmatpush1.msra.mxu0 %v2538
      %3260 = vmatprep.subr.mxu0 0.0
      %3261 = vmatpush1.msra.mxu0 %v2541
      %3262 = vmatprep.subr.mxu0 0.0
      %3263 = vmatpush1.msra.mxu0 %v2544
      %3264 = vmatprep.subr.mxu0 0.0
      %3265 = vmatpush1.msra.mxu0 %v2547
      %3266 = vmatprep.subr.mxu0 0.0
      %3267 = vmatpush1.msra.mxu0 %v2550
      %3268 = vmatprep.subr.mxu0 0.0
      %3269 = vmatpush1.msra.mxu0 %v2553
      %3270 = vmatprep.subr.mxu0 0.0
      %3271 = vmatpush1.msra.mxu0 %v2556
      %3272 = vmatprep.subr.mxu0 0.0
      %3273 = vmatpush1.msra.mxu0 %v2559
      %3274 = vmatprep.subr.mxu0 0.0
      %3275 = vmatpush1.msra.mxu0 %v2562
      %3276 = vmatprep.subr.mxu0 0.0
      %3277 = vmatpush1.msra.mxu0 %v2565
      %3278 = vmatprep.subr.mxu0 0.0
      %3279 = vmatpush1.msra.mxu0 %v2568
      %3280 = vmatprep.subr.mxu0 0.0
      %3281 = vmatpush1.msra.mxu0 %v2571
      %3282 = vmatprep.subr.mxu0 0.0
      %3283 = vmatpush1.msra.mxu0 %v2574
      %3284 = vmatprep.subr.mxu0 0.0
      %3285 = vmatpush1.msra.mxu0 %v2577
      %3286 = vmatprep.subr.mxu0 0.0
      %3287 = vmatpush1.msra.mxu0 %v2580
      %3288 = vmatprep.subr.mxu0 0.0
      %3289 = vmatpush1.msra.mxu0 %v2583
      %3290 = vmatprep.subr.mxu0 0.0
      %3291 = vmatpush1.msra.mxu0 %v2586
      %3292 = vmatprep.subr.mxu0 0.0
      %3293 = vmatpush1.msra.mxu0 %v2589
      %3294 = vmatprep.subr.mxu0 0.0
      %3295 = vmatpush1.msra.mxu0 %v2592
      %3296 = vmatprep.mubr.f32.mxu0 %v2278
      %3297 = vmatmul.mubr.f32.gmra.mrb[0].mxu0 %v2277
      %v3298 = vpop.f32.mrb[0].mxu0
      %v3299 = vadd.f32 %v3214, %v3298
      %v3300 = vpop.f32.mrb[0].mxu0
      %3301 = vmatprep.mubr.f32.mxu0 %v2286
      %3302 = vmatmul.mubr.f32.gmra.mrb[0].mxu0 %v2285
      %v3303 = vpop.f32.mrb[0].mxu0
      %v3304 = vadd.f32 %v3219, %v3303
      %v3305 = vpop.f32.mrb[0].mxu0
      %3306 = vmatprep.mubr.f32.mxu0 %v2294
      %3307 = vmatmul.mubr.f32.gmra.mrb[0].mxu0 %v2293
      %v3308 = vpop.f32.mrb[0].mxu0
      %v3309 = vadd.f32 %v3224, %v3308
      %v3310 = vpop.f32.mrb[0].mxu0
      %3311 = vmatprep.mubr.f32.mxu0 %v2302
      %3312 = vmatmul.mubr.f32.gmra.mrb[0].mxu0 %v2301
      %v3313 = vpop.f32.mrb[0].mxu0
      %v3314 = vadd.f32 %v3229, %v3313
      %v3315 = vpop.f32.mrb[0].mxu0
      %3316 = vdwg.mxu0
      %3317 = vmatprep.subr.mxu0 0.0
      %3318 = vmatpush1.msra.mxu0 %v2595
      %3319 = vmatprep.subr.mxu0 0.0
      %3320 = vmatpush1.msra.mxu0 %v2598
      %3321 = vmatprep.subr.mxu0 0.0
      %3322 = vmatpush1.msra.mxu0 %v2601
      %3323 = vmatprep.subr.mxu0 0.0
      %3324 = vmatpush1.msra.mxu0 %v2604
      %3325 = vmatprep.subr.mxu0 0.0
      %3326 = vmatpush1.msra.mxu0 %v2607
      %3327 = vmatprep.subr.mxu0 0.0
      %3328 = vmatpush1.msra.mxu0 %v2610
      %3329 = vmatprep.subr.mxu0 0.0
      %3330 = vmatpush1.msra.mxu0 %v2613
      %3331 = vmatprep.subr.mxu0 0.0
      %3332 = vmatpush1.msra.mxu0 %v2616
      %3333 = vmatprep.subr.mxu0 0.0
      %3334 = vmatpush1.msra.mxu0 %v2619
      %3335 = vmatprep.subr.mxu0 0.0
      %3336 = vmatpush1.msra.mxu0 %v2622
      %3337 = vmatprep.subr.mxu0 0.0
      %3338 = vmatpush1.msra.mxu0 %v2625
      %3339 = vmatprep.subr.mxu0 0.0
      %3340 = vmatpush1.msra.mxu0 %v2628
      %3341 = vmatprep.subr.mxu0 0.0
      %3342 = vmatpush1.msra.mxu0 %v2631
      %3343 = vmatprep.subr.mxu0 0.0
      %3344 = vmatpush1.msra.mxu0 %v2634
      %3345 = vmatprep.subr.mxu0 0.0
      %3346 = vmatpush1.msra.mxu0 %v2637
      %3347 = vmatprep.subr.mxu0 0.0
      %3348 = vmatpush1.msra.mxu0 %v2640
      %3349 = vmatprep.subr.mxu0 0.0
      %3350 = vmatpush1.msra.mxu0 %v2643
      %3351 = vmatprep.subr.mxu0 0.0
      %3352 = vmatpush1.msra.mxu0 %v2646
      %3353 = vmatprep.subr.mxu0 0.0
      %3354 = vmatpush1.msra.mxu0 %v2649
      %3355 = vmatprep.subr.mxu0 0.0
      %3356 = vmatpush1.msra.mxu0 %v2652
      %3357 = vmatprep.subr.mxu0 0.0
      %3358 = vmatpush1.msra.mxu0 %v2655
      %3359 = vmatprep.subr.mxu0 0.0
      %3360 = vmatpush1.msra.mxu0 %v2658
      %3361 = vmatprep.subr.mxu0 0.0
      %3362 = vmatpush1.msra.mxu0 %v2661
      %3363 = vmatprep.subr.mxu0 0.0
      %3364 = vmatpush1.msra.mxu0 %v2664
      %3365 = vmatprep.subr.mxu0 0.0
      %3366 = vmatpush1.msra.mxu0 %v2667
      %3367 = vmatprep.subr.mxu0 0.0
      %3368 = vmatpush1.msra.mxu0 %v2670
      %3369 = vmatprep.subr.mxu0 0.0
      %3370 = vmatpush1.msra.mxu0 %v2673
      %3371 = vmatprep.subr.mxu0 0.0
      %3372 = vmatpush1.msra.mxu0 %v2676
      %3373 = vmatprep.subr.mxu0 0.0
      %3374 = vmatpush1.msra.mxu0 %v2679
      %3375 = vmatprep.subr.mxu0 0.0
      %3376 = vmatpush1.msra.mxu0 %v2682
      %3377 = vmatprep.subr.mxu0 0.0
      %3378 = vmatpush1.msra.mxu0 %v2685
      %3379 = vmatprep.subr.mxu0 0.0
      %3380 = vmatpush1.msra.mxu0 %v2688
      %3381 = vmatprep.mubr.f32.mxu0 %v2280
      %3382 = vmatmul.mubr.f32.gmra.mrb[0].mxu0 %v2279
      %v3383 = vpop.f32.mrb[0].mxu0
      %v3384 = vadd.f32 %v3299, %v3383
      %v3385 = vpop.f32.mrb[0].mxu0
      %3386 = vmatprep.mubr.f32.mxu0 %v2288
      %3387 = vmatmul.mubr.f32.gmra.mrb[0].mxu0 %v2287
      %v3388 = vpop.f32.mrb[0].mxu0
      %v3389 = vadd.f32 %v3304, %v3388
      %v3390 = vpop.f32.mrb[0].mxu0
      %3391 = vmatprep.mubr.f32.mxu0 %v2296
      %3392 = vmatmul.mubr.f32.gmra.mrb[0].mxu0 %v2295
      %v3393 = vpop.f32.mrb[0].mxu0
      %v3394 = vadd.f32 %v3309, %v3393
      %v3395 = vpop.f32.mrb[0].mxu0
      %3396 = vmatprep.mubr.f32.mxu0 %v2304
      %3397 = vmatmul.mubr.f32.gmra.mrb[0].mxu0 %v2303
      %v3398 = vpop.f32.mrb[0].mxu0
      %v3399 = vadd.f32 %v3314, %v3398
      %v3400 = vpop.f32.mrb[0].mxu0
      %3401 = vdwg.mxu0
      %3406 = vrot.lane.b32.xlu0 %v3040, 96
      %v3407 = vpop.permute.xlu0 %3406
      %3408 = vrot.lane.b32.xlu0 %v3046, 96
      %v3409 = vpop.permute.xlu0 %3408
      %3410 = vrot.lane.b32.xlu0 %v3052, 96
      %v3411 = vpop.permute.xlu0 %3410
      %3412 = vrot.lane.b32.xlu0 %v3058, 96
      %v3413 = vpop.permute.xlu0 %3412
      %v3418 = vmax.f32 %v3040, %v3407
      %v3419 = vmax.f32 %v3046, %v3409
      %v3420 = vmax.f32 %v3052, %v3411
      %v3421 = vmax.f32 %v3058, %v3413
      %3422 = vrot.lane.b32.xlu0 %v3040, 64
      %v3423 = vpop.permute.xlu0 %3422
      %3424 = vrot.lane.b32.xlu0 %v3046, 64
      %v3425 = vpop.permute.xlu0 %3424
      %3426 = vrot.lane.b32.xlu0 %v3052, 64
      %v3427 = vpop.permute.xlu0 %3426
      %3428 = vrot.lane.b32.xlu0 %v3058, 64
      %v3429 = vpop.permute.xlu0 %3428
      %v3434 = vmax.f32 %v3418, %v3423
      %v3435 = vmax.f32 %v3419, %v3425
      %v3436 = vmax.f32 %v3420, %v3427
      %v3437 = vmax.f32 %v3421, %v3429
      %3438 = vrot.lane.b32.xlu0 %v3040, 32
      %v3439 = vpop.permute.xlu0 %3438
      %3440 = vrot.lane.b32.xlu0 %v3046, 32
      %v3441 = vpop.permute.xlu0 %3440
      %3442 = vrot.lane.b32.xlu0 %v3052, 32
      %v3443 = vpop.permute.xlu0 %3442
      %3444 = vrot.lane.b32.xlu0 %v3058, 32
      %v3445 = vpop.permute.xlu0 %3444
      %v3450 = vmax.f32 %v3434, %v3439
      %v3451 = vmax.f32 %v3435, %v3441
      %v3452 = vmax.f32 %v3436, %v3443
      %v3453 = vmax.f32 %v3437, %v3445
      %v3454 = vmax.f32 %v3450, %v3042
      %v3455 = vmax.f32 %v3451, %v3048
      %v3456 = vmax.f32 %v3452, %v3054
      %v3457 = vmax.f32 %v3453, %v3060
      %3462 = vrot.lane.b32.xlu0 %v3042, 96
      %v3463 = vpop.permute.xlu0 %3462
      %3464 = vrot.lane.b32.xlu0 %v3048, 96
      %v3465 = vpop.permute.xlu0 %3464
      %3466 = vrot.lane.b32.xlu0 %v3054, 96
      %v3467 = vpop.permute.xlu0 %3466
      %3468 = vrot.lane.b32.xlu0 %v3060, 96
      %v3469 = vpop.permute.xlu0 %3468
      %v3474 = vmax.f32 %v3454, %v3463
      %v3475 = vmax.f32 %v3455, %v3465
      %v3476 = vmax.f32 %v3456, %v3467
      %v3477 = vmax.f32 %v3457, %v3469
      %3478 = vrot.lane.b32.xlu0 %v3042, 64
      %v3479 = vpop.permute.xlu0 %3478
      %3480 = vrot.lane.b32.xlu0 %v3048, 64
      %v3481 = vpop.permute.xlu0 %3480
      %3482 = vrot.lane.b32.xlu0 %v3054, 64
      %v3483 = vpop.permute.xlu0 %3482
      %3484 = vrot.lane.b32.xlu0 %v3060, 64
      %v3485 = vpop.permute.xlu0 %3484
      %v3490 = vmax.f32 %v3474, %v3479
      %v3491 = vmax.f32 %v3475, %v3481
      %v3492 = vmax.f32 %v3476, %v3483
      %v3493 = vmax.f32 %v3477, %v3485
      %3494 = vrot.lane.b32.xlu0 %v3042, 32
      %v3495 = vpop.permute.xlu0 %3494
      %3496 = vrot.lane.b32.xlu0 %v3048, 32
      %v3497 = vpop.permute.xlu0 %3496
      %3498 = vrot.lane.b32.xlu0 %v3054, 32
      %v3499 = vpop.permute.xlu0 %3498
      %3500 = vrot.lane.b32.xlu0 %v3060, 32
      %v3501 = vpop.permute.xlu0 %3500
      %v3506 = vmax.f32 %v3490, %v3495
      %v3507 = vmax.f32 %v3491, %v3497
      %v3508 = vmax.f32 %v3492, %v3499
      %v3509 = vmax.f32 %v3493, %v3501
      %v3510 = vmax.f32 %v3506, %v3384
      %v3511 = vmax.f32 %v3507, %v3389
      %v3512 = vmax.f32 %v3508, %v3394
      %v3513 = vmax.f32 %v3509, %v3399
      %v3514 = vsub.f32 %v3040, %v3510
      %v3515 = vsub.f32 %v3046, %v3511
      %v3516 = vsub.f32 %v3052, %v3512
      %v3517 = vsub.f32 %v3058, %v3513
      %v3518 = vmul.f32 %v3514, 1.442695
      %v3519 = vpow.pop %v3518
      %v3520 = vmul.f32 %v3515, 1.442695
      %v3521 = vpow.pop %v3520
      %v3522 = vmul.f32 %v3516, 1.442695
      %v3523 = vpow.pop %v3522
      %v3524 = vmul.f32 %v3517, 1.442695
      %v3525 = vpow.pop %v3524
      %3530 = vrot.lane.b32.xlu0 %v3510, 32
      %v3531 = vpop.permute.xlu0 %3530
      %3532 = vrot.lane.b32.xlu0 %v3511, 32
      %v3533 = vpop.permute.xlu0 %3532
      %3534 = vrot.lane.b32.xlu0 %v3512, 32
      %v3535 = vpop.permute.xlu0 %3534
      %3536 = vrot.lane.b32.xlu0 %v3513, 32
      %v3537 = vpop.permute.xlu0 %3536
      %v3542 = vsub.f32 %v3040, %v3531
      %v3543 = vsub.f32 %v3046, %v3533
      %v3544 = vsub.f32 %v3052, %v3535
      %v3545 = vsub.f32 %v3058, %v3537
      %v3546 = vmul.f32 %v3542, 1.442695
      %v3547 = vpow.pop %v3546
      %v3548 = vmul.f32 %v3543, 1.442695
      %v3549 = vpow.pop %v3548
      %v3550 = vmul.f32 %v3544, 1.442695
      %v3551 = vpow.pop %v3550
      %v3552 = vmul.f32 %v3545, 1.442695
      %v3553 = vpow.pop %v3552
      %3554 = vrot.lane.b32.xlu0 %v3510, 64
      %v3555 = vpop.permute.xlu0 %3554
      %3556 = vrot.lane.b32.xlu0 %v3511, 64
      %v3557 = vpop.permute.xlu0 %3556
      %3558 = vrot.lane.b32.xlu0 %v3512, 64
      %v3559 = vpop.permute.xlu0 %3558
      %3560 = vrot.lane.b32.xlu0 %v3513, 64
      %v3561 = vpop.permute.xlu0 %3560
      %v3566 = vsub.f32 %v3040, %v3555
      %v3567 = vsub.f32 %v3046, %v3557
      %v3568 = vsub.f32 %v3052, %v3559
      %v3569 = vsub.f32 %v3058, %v3561
      %v3570 = vmul.f32 %v3566, 1.442695
      %v3571 = vpow.pop %v3570
      %v3572 = vmul.f32 %v3567, 1.442695
      %v3573 = vpow.pop %v3572
      %v3574 = vmul.f32 %v3568, 1.442695
      %v3575 = vpow.pop %v3574
      %v3576 = vmul.f32 %v3569, 1.442695
      %v3577 = vpow.pop %v3576
      %3578 = vrot.lane.b32.xlu0 %v3510, 96
      %v3579 = vpop.permute.xlu0 %3578
      %3580 = vrot.lane.b32.xlu0 %v3511, 96
      %v3581 = vpop.permute.xlu0 %3580
      %3582 = vrot.lane.b32.xlu0 %v3512, 96
      %v3583 = vpop.permute.xlu0 %3582
      %3584 = vrot.lane.b32.xlu0 %v3513, 96
      %v3585 = vpop.permute.xlu0 %3584
      %v3590 = vsub.f32 %v3040, %v3579
      %v3591 = vsub.f32 %v3046, %v3581
      %v3592 = vsub.f32 %v3052, %v3583
      %v3593 = vsub.f32 %v3058, %v3585
      %v3594 = vmul.f32 %v3590, 1.442695
      %v3595 = vpow.pop %v3594
      %v3596 = vmul.f32 %v3591, 1.442695
      %v3597 = vpow.pop %v3596
      %v3598 = vmul.f32 %v3592, 1.442695
      %v3599 = vpow.pop %v3598
      %v3600 = vmul.f32 %v3593, 1.442695
      %v3601 = vpow.pop %v3600
      %v3602 = vsub.f32 %v3042, %v3510
      %v3603 = vsub.f32 %v3048, %v3511
      %v3604 = vsub.f32 %v3054, %v3512
      %v3605 = vsub.f32 %v3060, %v3513
      %v3606 = vmul.f32 %v3602, 1.442695
      %v3607 = vpow.pop %v3606
      %v3608 = vmul.f32 %v3603, 1.442695
      %v3609 = vpow.pop %v3608
      %v3610 = vmul.f32 %v3604, 1.442695
      %v3611 = vpow.pop %v3610
      %v3612 = vmul.f32 %v3605, 1.442695
      %v3613 = vpow.pop %v3612
      %v3614 = vsub.f32 %v3042, %v3531
      %v3615 = vsub.f32 %v3048, %v3533
      %v3616 = vsub.f32 %v3054, %v3535
      %v3617 = vsub.f32 %v3060, %v3537
      %v3618 = vmul.f32 %v3614, 1.442695
      %v3619 = vpow.pop %v3618
      %v3620 = vmul.f32 %v3615, 1.442695
      %v3621 = vpow.pop %v3620
      %v3622 = vmul.f32 %v3616, 1.442695
      %v3623 = vpow.pop %v3622
      %v3624 = vmul.f32 %v3617, 1.442695
      %v3625 = vpow.pop %v3624
      %v3626 = vsub.f32 %v3042, %v3555
      %v3627 = vsub.f32 %v3048, %v3557
      %v3628 = vsub.f32 %v3054, %v3559
      %v3629 = vsub.f32 %v3060, %v3561
      %v3630 = vmul.f32 %v3626, 1.442695
      %v3631 = vpow.pop %v3630
      %v3632 = vmul.f32 %v3627, 1.442695
      %v3633 = vpow.pop %v3632
      %v3634 = vmul.f32 %v3628, 1.442695
      %v3635 = vpow.pop %v3634
      %v3636 = vmul.f32 %v3629, 1.442695
      %v3637 = vpow.pop %v3636
      %v3638 = vsub.f32 %v3042, %v3579
      %v3639 = vsub.f32 %v3048, %v3581
      %v3640 = vsub.f32 %v3054, %v3583
      %v3641 = vsub.f32 %v3060, %v3585
      %v3642 = vmul.f32 %v3638, 1.442695
      %v3643 = vpow.pop %v3642
      %v3644 = vmul.f32 %v3639, 1.442695
      %v3645 = vpow.pop %v3644
      %v3646 = vmul.f32 %v3640, 1.442695
      %v3647 = vpow.pop %v3646
      %v3648 = vmul.f32 %v3641, 1.442695
      %v3649 = vpow.pop %v3648
      %v3650 = vsub.f32 %v3384, %v3510
      %v3651 = vsub.f32 %v3389, %v3511
      %v3652 = vsub.f32 %v3394, %v3512
      %v3653 = vsub.f32 %v3399, %v3513
      %v3654 = vmul.f32 %v3650, 1.442695
      %v3655 = vpow.pop %v3654
      %v3656 = vmul.f32 %v3651, 1.442695
      %v3657 = vpow.pop %v3656
      %v3658 = vmul.f32 %v3652, 1.442695
      %v3659 = vpow.pop %v3658
      %v3660 = vmul.f32 %v3653, 1.442695
      %v3661 = vpow.pop %v3660
      %3666 = vrot.lane.b32.xlu0 %v3547, 96
      %v3667 = vpop.permute.xlu0 %3666
      %3668 = vrot.lane.b32.xlu0 %v3549, 96
      %v3669 = vpop.permute.xlu0 %3668
      %3670 = vrot.lane.b32.xlu0 %v3551, 96
      %v3671 = vpop.permute.xlu0 %3670
      %3672 = vrot.lane.b32.xlu0 %v3553, 96
      %v3673 = vpop.permute.xlu0 %3672
      %v3678 = vadd.f32 %v3519, %v3667
      %v3679 = vadd.f32 %v3521, %v3669
      %v3680 = vadd.f32 %v3523, %v3671
      %v3681 = vadd.f32 %v3525, %v3673
      %3686 = vrot.lane.b32.xlu0 %v3571, 64
      %v3687 = vpop.permute.xlu0 %3686
      %3688 = vrot.lane.b32.xlu0 %v3573, 64
      %v3689 = vpop.permute.xlu0 %3688
      %3690 = vrot.lane.b32.xlu0 %v3575, 64
      %v3691 = vpop.permute.xlu0 %3690
      %3692 = vrot.lane.b32.xlu0 %v3577, 64
      %v3693 = vpop.permute.xlu0 %3692
      %v3698 = vadd.f32 %v3678, %v3687
      %v3699 = vadd.f32 %v3679, %v3689
      %v3700 = vadd.f32 %v3680, %v3691
      %v3701 = vadd.f32 %v3681, %v3693
      %3706 = vrot.lane.b32.xlu0 %v3595, 32
      %v3707 = vpop.permute.xlu0 %3706
      %3708 = vrot.lane.b32.xlu0 %v3597, 32
      %v3709 = vpop.permute.xlu0 %3708
      %3710 = vrot.lane.b32.xlu0 %v3599, 32
      %v3711 = vpop.permute.xlu0 %3710
      %3712 = vrot.lane.b32.xlu0 %v3601, 32
      %v3713 = vpop.permute.xlu0 %3712
      %v3718 = vadd.f32 %v3698, %v3707
      %v3719 = vadd.f32 %v3699, %v3709
      %v3720 = vadd.f32 %v3700, %v3711
      %v3721 = vadd.f32 %v3701, %v3713
      %v3722 = vadd.f32 %v3718, %v3607
      %v3723 = vadd.f32 %v3719, %v3609
      %v3724 = vadd.f32 %v3720, %v3611
      %v3725 = vadd.f32 %v3721, %v3613
      %3730 = vrot.lane.b32.xlu0 %v3619, 96
      %v3731 = vpop.permute.xlu0 %3730
      %3732 = vrot.lane.b32.xlu0 %v3621, 96
      %v3733 = vpop.permute.xlu0 %3732
      %3734 = vrot.lane.b32.xlu0 %v3623, 96
      %v3735 = vpop.permute.xlu0 %3734
      %3736 = vrot.lane.b32.xlu0 %v3625, 96
      %v3737 = vpop.permute.xlu0 %3736
      %v3742 = vadd.f32 %v3722, %v3731
      %v3743 = vadd.f32 %v3723, %v3733
      %v3744 = vadd.f32 %v3724, %v3735
      %v3745 = vadd.f32 %v3725, %v3737
      %3750 = vrot.lane.b32.xlu0 %v3631, 64
      %v3751 = vpop.permute.xlu0 %3750
      %3752 = vrot.lane.b32.xlu0 %v3633, 64
      %v3753 = vpop.permute.xlu0 %3752
      %3754 = vrot.lane.b32.xlu0 %v3635, 64
      %v3755 = vpop.permute.xlu0 %3754
      %3756 = vrot.lane.b32.xlu0 %v3637, 64
      %v3757 = vpop.permute.xlu0 %3756
      %v3762 = vadd.f32 %v3742, %v3751
      %v3763 = vadd.f32 %v3743, %v3753
      %v3764 = vadd.f32 %v3744, %v3755
      %v3765 = vadd.f32 %v3745, %v3757
      %3770 = vrot.lane.b32.xlu0 %v3643, 32
      %v3771 = vpop.permute.xlu0 %3770
      %3772 = vrot.lane.b32.xlu0 %v3645, 32
      %v3773 = vpop.permute.xlu0 %3772
      %3774 = vrot.lane.b32.xlu0 %v3647, 32
      %v3775 = vpop.permute.xlu0 %3774
      %3776 = vrot.lane.b32.xlu0 %v3649, 32
      %v3777 = vpop.permute.xlu0 %3776
      %v3782 = vadd.f32 %v3762, %v3771
      %v3783 = vadd.f32 %v3763, %v3773
      %v3784 = vadd.f32 %v3764, %v3775
      %v3785 = vadd.f32 %v3765, %v3777
      %v3786 = vadd.f32 %v3782, %v3655
      %v3787 = vadd.f32 %v3783, %v3657
      %v3788 = vadd.f32 %v3784, %v3659
      %v3789 = vadd.f32 %v3785, %v3661
      %v3790 = vrcp.pop %v3786
      %v3791 = vrcp.pop %v3787
      %v3792 = vrcp.pop %v3788
      %v3793 = vrcp.pop %v3789
      %3798 = vrot.lane.b32.xlu0 %v3790, 64
      %v3799 = vpop.permute.xlu0 %3798
      %3800 = vrot.lane.b32.xlu0 %v3791, 64
      %v3801 = vpop.permute.xlu0 %3800
      %3802 = vrot.lane.b32.xlu0 %v3792, 64
      %v3803 = vpop.permute.xlu0 %3802
      %3804 = vrot.lane.b32.xlu0 %v3793, 64
      %v3805 = vpop.permute.xlu0 %3804
      %v3810 = vmul.f32 %v3631, %v3799
      %v3811 = vmul.f32 %v3633, %v3801
      %v3812 = vmul.f32 %v3635, %v3803
      %v3813 = vmul.f32 %v3637, %v3805
      %v3814 = vld [vmem:[%s10] sm:$0xff]
      %v3815 = vld [vmem:[%s10 + $0x8] sm:$0xff]
      %v3816 = vld [vmem:[%s10 + $0x10] sm:$0xff]
      %v3817 = vld [vmem:[%s10 + $0x18] sm:$0xff]
      %3822 = vrot.lane.b32.xlu0 %v3810, 64
      %v3823 = vpop.permute.xlu0 %3822
      %3824 = vrot.lane.b32.xlu0 %v3811, 64
      %v3825 = vpop.permute.xlu0 %3824
      %3826 = vrot.lane.b32.xlu0 %v3812, 64
      %v3827 = vpop.permute.xlu0 %3826
      %3828 = vrot.lane.b32.xlu0 %v3813, 64
      %v3829 = vpop.permute.xlu0 %3828
      %vm3830 = vcmask 261120
      %v3831 = vsel %vm3830, %v3823, 0
      %v3833 = vsel %vm3830, %v3825, 0
      %v3835 = vsel %vm3830, %v3827, 0
      %v3837 = vsel %vm3830, %v3829, 0
      %3839 = vmatprep.subr.mxu0 0.0
      %3840 = vmatpush1.msra.mxu0 %v3814
      %3841 = vmatprep.subr.mxu0 0.0
      %3842 = vmatpush1.msra.mxu0 %v3815
      %3843 = vmatprep.subr.mxu0 0.0
      %3844 = vmatpush1.msra.mxu0 %v3816
      %3845 = vmatprep.subr.mxu0 0.0
      %3846 = vmatpush1.msra.mxu0 %v3817
      %3847 = vmatprep.subr.mxu0 0.0
      %3848 = vmatpush1.msra.mxu0 0.0
      %3849 = vmatprep.subr.mxu0 0.0
      %3850 = vmatpush1.msra.mxu0 0.0
      %3851 = vmatprep.subr.mxu0 0.0
      %3852 = vmatpush1.msra.mxu0 0.0
      %3853 = vmatprep.subr.mxu0 0.0
      %3854 = vmatpush1.msra.mxu0 0.0
      %3855 = vmatprep.subr.mxu0 0.0
      %3856 = vmatpush1.msra.mxu0 0.0
      %3857 = vmatprep.subr.mxu0 0.0
      %3858 = vmatpush1.msra.mxu0 0.0
      %3859 = vmatprep.subr.mxu0 0.0
      %3860 = vmatpush1.msra.mxu0 0.0
      %3861 = vmatprep.subr.mxu0 0.0
      %3862 = vmatpush1.msra.mxu0 0.0
      %3863 = vmatprep.subr.mxu0 0.0
      %3864 = vmatpush1.msra.mxu0 0.0
      %3865 = vmatprep.subr.mxu0 0.0
      %3866 = vmatpush1.msra.mxu0 0.0
      %3867 = vmatprep.subr.mxu0 0.0
      %3868 = vmatpush1.msra.mxu0 0.0
      %3869 = vmatprep.subr.mxu0 0.0
      %3870 = vmatpush1.msra.mxu0 0.0
      %3871 = vmatprep.subr.mxu0 0.0
      %3872 = vmatpush1.msra.mxu0 0.0
      %3873 = vmatprep.subr.mxu0 0.0
      %3874 = vmatpush1.msra.mxu0 0.0
      %3875 = vmatprep.subr.mxu0 0.0
      %3876 = vmatpush1.msra.mxu0 0.0
      %3877 = vmatprep.subr.mxu0 0.0
      %3878 = vmatpush1.msra.mxu0 0.0
      %3879 = vmatprep.subr.mxu0 0.0
      %3880 = vmatpush1.msra.mxu0 0.0
      %3881 = vmatprep.subr.mxu0 0.0
      %3882 = vmatpush1.msra.mxu0 0.0
      %3883 = vmatprep.subr.mxu0 0.0
      %3884 = vmatpush1.msra.mxu0 0.0
      %3885 = vmatprep.subr.mxu0 0.0
      %3886 = vmatpush1.msra.mxu0 0.0
      %3887 = vmatprep.subr.mxu0 0.0
      %3888 = vmatpush1.msra.mxu0 0.0
      %3889 = vmatprep.subr.mxu0 0.0
      %3890 = vmatpush1.msra.mxu0 0.0
      %3891 = vmatprep.subr.mxu0 0.0
      %3892 = vmatpush1.msra.mxu0 0.0
      %3893 = vmatprep.subr.mxu0 0.0
      %3894 = vmatpush1.msra.mxu0 0.0
      %3895 = vmatprep.subr.mxu0 0.0
      %3896 = vmatpush1.msra.mxu0 0.0
      %3897 = vmatprep.subr.mxu0 0.0
      %3898 = vmatpush1.msra.mxu0 0.0
      %3899 = vmatprep.subr.mxu0 0.0
      %3900 = vmatpush1.msra.mxu0 0.0
      %3901 = vmatprep.subr.mxu0 0.0
      %3902 = vmatpush1.msra.mxu0 0.0
      %3903 = vmatprep.mubr.f32.mxu0 0.0
      %3904 = vmatmul.mubr.f32.gmra.mrb[0].mxu0 %v3831
      %v3905 = vpop.f32.mrb[0].mxu0
      %v3906 = vadd.f32 0.0, %v3905
      %v3907 = vpop.f32.mrb[0].mxu0
      %3908 = vmatprep.mubr.f32.mxu0 0.0
      %3909 = vmatmul.mubr.f32.gmra.mrb[0].mxu0 %v3833
      %v3910 = vpop.f32.mrb[0].mxu0
      %v3911 = vadd.f32 0.0, %v3910
      %v3912 = vpop.f32.mrb[0].mxu0
      %3913 = vmatprep.mubr.f32.mxu0 0.0
      %3914 = vmatmul.mubr.f32.gmra.mrb[0].mxu0 %v3835
      %v3915 = vpop.f32.mrb[0].mxu0
      %v3916 = vadd.f32 0.0, %v3915
      %v3917 = vpop.f32.mrb[0].mxu0
      %3918 = vmatprep.mubr.f32.mxu0 0.0
      %3919 = vmatmul.mubr.f32.gmra.mrb[0].mxu0 %v3837
      %v3920 = vpop.f32.mrb[0].mxu0
      %v3921 = vadd.f32 0.0, %v3920
      %v3922 = vpop.f32.mrb[0].mxu0
      %3923 = vdwg.mxu0
      %v3924 = vld [vmem:[%s8] sm:$0xff]
      %v3925 = vld [vmem:[%s8 + $0x8] sm:$0xff]
      %v3926 = vld [vmem:[%s8 + $0x10] sm:$0xff]
      %v3927 = vld [vmem:[%s8 + $0x18] sm:$0xff]
      %v3929 = vsel %vm3830, %v3924, 0
      %v3932 = vsel %vm3830, %v3925, 0
      %v3935 = vsel %vm3830, %v3926, 0
      %v3938 = vsel %vm3830, %v3927, 0
      %3940 = vmatprep.subr.mxu0 0.0
      %3941 = vmatpush1.msra.mxu0 %v3906
      %3942 = vmatprep.subr.mxu0 0.0
      %3943 = vmatpush1.msra.mxu0 %v3911
      %3944 = vmatprep.subr.mxu0 0.0
      %3945 = vmatpush1.msra.mxu0 %v3916
      %3946 = vmatprep.subr.mxu0 0.0
      %3947 = vmatpush1.msra.mxu0 %v3921
      %3948 = vmatprep.subr.mxu0 0.0
      %3949 = vmatpush1.msra.mxu0 0.0
      %3950 = vmatprep.subr.mxu0 0.0
      %3951 = vmatpush1.msra.mxu0 0.0
      %3952 = vmatprep.subr.mxu0 0.0
      %3953 = vmatpush1.msra.mxu0 0.0
      %3954 = vmatprep.subr.mxu0 0.0
      %3955 = vmatpush1.msra.mxu0 0.0
      %3956 = vmatprep.subr.mxu0 0.0
      %3957 = vmatpush1.msra.mxu0 0.0
      %3958 = vmatprep.subr.mxu0 0.0
      %3959 = vmatpush1.msra.mxu0 0.0
      %3960 = vmatprep.subr.mxu0 0.0
      %3961 = vmatpush1.msra.mxu0 0.0
      %3962 = vmatprep.subr.mxu0 0.0
      %3963 = vmatpush1.msra.mxu0 0.0
      %3964 = vmatprep.subr.mxu0 0.0
      %3965 = vmatpush1.msra.mxu0 0.0
      %3966 = vmatprep.subr.mxu0 0.0
      %3967 = vmatpush1.msra.mxu0 0.0
      %3968 = vmatprep.subr.mxu0 0.0
      %3969 = vmatpush1.msra.mxu0 0.0
      %3970 = vmatprep.subr.mxu0 0.0
      %3971 = vmatpush1.msra.mxu0 0.0
      %3972 = vmatprep.subr.mxu0 0.0
      %3973 = vmatpush1.msra.mxu0 0.0
      %3974 = vmatprep.subr.mxu0 0.0
      %3975 = vmatpush1.msra.mxu0 0.0
      %3976 = vmatprep.subr.mxu0 0.0
      %3977 = vmatpush1.msra.mxu0 0.0
      %3978 = vmatprep.subr.mxu0 0.0
      %3979 = vmatpush1.msra.mxu0 0.0
      %3980 = vmatprep.subr.mxu0 0.0
      %3981 = vmatpush1.msra.mxu0 0.0
      %3982 = vmatprep.subr.mxu0 0.0
      %3983 = vmatpush1.msra.mxu0 0.0
      %3984 = vmatprep.subr.mxu0 0.0
      %3985 = vmatpush1.msra.mxu0 0.0
      %3986 = vmatprep.subr.mxu0 0.0
      %3987 = vmatpush1.msra.mxu0 0.0
      %3988 = vmatprep.subr.mxu0 0.0
      %3989 = vmatpush1.msra.mxu0 0.0
      %3990 = vmatprep.subr.mxu0 0.0
      %3991 = vmatpush1.msra.mxu0 0.0
      %3992 = vmatprep.subr.mxu0 0.0
      %3993 = vmatpush1.msra.mxu0 0.0
      %3994 = vmatprep.subr.mxu0 0.0
      %3995 = vmatpush1.msra.mxu0 0.0
      %3996 = vmatprep.subr.mxu0 0.0
      %3997 = vmatpush1.msra.mxu0 0.0
      %3998 = vmatprep.subr.mxu0 0.0
      %3999 = vmatpush1.msra.mxu0 0.0
      %4000 = vmatprep.subr.mxu0 0.0
      %4001 = vmatpush1.msra.mxu0 0.0
      %4002 = vmatprep.subr.mxu0 0.0
      %4003 = vmatpush1.msra.mxu0 0.0
      %4004 = vmatprep.mubr.f32.mxu0 0.0
      %4005 = vmatmul.mubr.f32.gmra.mrb[0].mxu0 %v3929
      %v4006 = vpop.f32.mrb[0].mxu0
      %v4007 = vadd.f32 0.0, %v4006
      %v4008 = vpop.f32.mrb[0].mxu0
      %4009 = vmatprep.mubr.f32.mxu0 0.0
      %4010 = vmatmul.mubr.f32.gmra.mrb[0].mxu0 %v3932
      %v4011 = vpop.f32.mrb[0].mxu0
      %v4012 = vadd.f32 0.0, %v4011
      %v4013 = vpop.f32.mrb[0].mxu0
      %4014 = vmatprep.mubr.f32.mxu0 0.0
      %4015 = vmatmul.mubr.f32.gmra.mrb[0].mxu0 %v3935
      %v4016 = vpop.f32.mrb[0].mxu0
      %v4017 = vadd.f32 0.0, %v4016
      %v4018 = vpop.f32.mrb[0].mxu0
      %4019 = vmatprep.mubr.f32.mxu0 0.0
      %4020 = vmatmul.mubr.f32.gmra.mrb[0].mxu0 %v3938
      %v4021 = vpop.f32.mrb[0].mxu0
      %v4022 = vadd.f32 0.0, %v4021
      %v4023 = vpop.f32.mrb[0].mxu0
      %4024 = vdwg.mxu0
      %v4025 = vld [vmem:[%s9] sm:$0xff]
      %v4026 = vld [vmem:[%s9 + $0x8] sm:$0xff]
      %v4027 = vld [vmem:[%s9 + $0x10] sm:$0xff]
      %v4028 = vld [vmem:[%s9 + $0x18] sm:$0xff]
      %v4030 = vsel %vm3830, %v4025, 0
      %v4033 = vsel %vm3830, %v4026, 0
      %v4036 = vsel %vm3830, %v4027, 0
      %v4039 = vsel %vm3830, %v4028, 0
      %4041 = vmatprep.subr.mxu0 0.0
      %4042 = vmatpush1.msra.mxu0 %v3906
      %4043 = vmatprep.subr.mxu0 0.0
      %4044 = vmatpush1.msra.mxu0 %v3911
      %4045 = vmatprep.subr.mxu0 0.0
      %4046 = vmatpush1.msra.mxu0 %v3916
      %4047 = vmatprep.subr.mxu0 0.0
      %4048 = vmatpush1.msra.mxu0 %v3921
      %4049 = vmatprep.subr.mxu0 0.0
      %4050 = vmatpush1.msra.mxu0 0.0
      %4051 = vmatprep.subr.mxu0 0.0
      %4052 = vmatpush1.msra.mxu0 0.0
      %4053 = vmatprep.subr.mxu0 0.0
      %4054 = vmatpush1.msra.mxu0 0.0
      %4055 = vmatprep.subr.mxu0 0.0
      %4056 = vmatpush1.msra.mxu0 0.0
      %4057 = vmatprep.subr.mxu0 0.0
      %4058 = vmatpush1.msra.mxu0 0.0
      %4059 = vmatprep.subr.mxu0 0.0
      %4060 = vmatpush1.msra.mxu0 0.0
      %4061 = vmatprep.subr.mxu0 0.0
      %4062 = vmatpush1.msra.mxu0 0.0
      %4063 = vmatprep.subr.mxu0 0.0
      %4064 = vmatpush1.msra.mxu0 0.0
      %4065 = vmatprep.subr.mxu0 0.0
      %4066 = vmatpush1.msra.mxu0 0.0
      %4067 = vmatprep.subr.mxu0 0.0
      %4068 = vmatpush1.msra.mxu0 0.0
      %4069 = vmatprep.subr.mxu0 0.0
      %4070 = vmatpush1.msra.mxu0 0.0
      %4071 = vmatprep.subr.mxu0 0.0
      %4072 = vmatpush1.msra.mxu0 0.0
      %4073 = vmatprep.subr.mxu0 0.0
      %4074 = vmatpush1.msra.mxu0 0.0
      %4075 = vmatprep.subr.mxu0 0.0
      %4076 = vmatpush1.msra.mxu0 0.0
      %4077 = vmatprep.subr.mxu0 0.0
      %4078 = vmatpush1.msra.mxu0 0.0
      %4079 = vmatprep.subr.mxu0 0.0
      %4080 = vmatpush1.msra.mxu0 0.0
      %4081 = vmatprep.subr.mxu0 0.0
      %4082 = vmatpush1.msra.mxu0 0.0
      %4083 = vmatprep.subr.mxu0 0.0
      %4084 = vmatpush1.msra.mxu0 0.0
      %4085 = vmatprep.subr.mxu0 0.0
      %4086 = vmatpush1.msra.mxu0 0.0
      %4087 = vmatprep.subr.mxu0 0.0
      %4088 = vmatpush1.msra.mxu0 0.0
      %4089 = vmatprep.subr.mxu0 0.0
      %4090 = vmatpush1.msra.mxu0 0.0
      %4091 = vmatprep.subr.mxu0 0.0
      %4092 = vmatpush1.msra.mxu0 0.0
      %4093 = vmatprep.subr.mxu0 0.0
      %4094 = vmatpush1.msra.mxu0 0.0
      %4095 = vmatprep.subr.mxu0 0.0
      %4096 = vmatpush1.msra.mxu0 0.0
      %4097 = vmatprep.subr.mxu0 0.0
      %4098 = vmatpush1.msra.mxu0 0.0
      %4099 = vmatprep.subr.mxu0 0.0
      %4100 = vmatpush1.msra.mxu0 0.0
      %4101 = vmatprep.subr.mxu0 0.0
      %4102 = vmatpush1.msra.mxu0 0.0
      %4103 = vmatprep.subr.mxu0 0.0
      %4104 = vmatpush1.msra.mxu0 0.0
      %4105 = vmatprep.mubr.f32.mxu0 0.0
      %4106 = vmatmul.mubr.f32.gmra.mrb[0].mxu0 %v4030
      %v4107 = vpop.f32.mrb[0].mxu0
      %v4108 = vadd.f32 0.0, %v4107
      %v4109 = vpop.f32.mrb[0].mxu0
      %4110 = vmatprep.mubr.f32.mxu0 0.0
      %4111 = vmatmul.mubr.f32.gmra.mrb[0].mxu0 %v4033
      %v4112 = vpop.f32.mrb[0].mxu0
      %v4113 = vadd.f32 0.0, %v4112
      %v4114 = vpop.f32.mrb[0].mxu0
      %4115 = vmatprep.mubr.f32.mxu0 0.0
      %4116 = vmatmul.mubr.f32.gmra.mrb[0].mxu0 %v4036
      %v4117 = vpop.f32.mrb[0].mxu0
      %v4118 = vadd.f32 0.0, %v4117
      %v4119 = vpop.f32.mrb[0].mxu0
      %4120 = vmatprep.mubr.f32.mxu0 0.0
      %4121 = vmatmul.mubr.f32.gmra.mrb[0].mxu0 %v4039
      %v4122 = vpop.f32.mrb[0].mxu0
      %v4123 = vadd.f32 0.0, %v4122
      %v4124 = vpop.f32.mrb[0].mxu0
      %4125 = vdwg.mxu0
      %4130 = vrot.lane.b32.xlu0 %v4108, 64
      %v4131 = vpop.permute.xlu0 %4130
      %4132 = vrot.lane.b32.xlu0 %v4113, 64
      %v4133 = vpop.permute.xlu0 %4132
      %4134 = vrot.lane.b32.xlu0 %v4118, 64
      %v4135 = vpop.permute.xlu0 %4134
      %4136 = vrot.lane.b32.xlu0 %v4123, 64
      %v4137 = vpop.permute.xlu0 %4136
      %v4142 = vsel %vm408, %v4007, %v4131
      %v4143 = vsel %vm408, %v4012, %v4133
      %v4144 = vsel %vm408, %v4017, %v4135
      %v4145 = vsel %vm408, %v4022, %v4137
      %4146 = vst [vmem:[%s386] sm:$0xff] %v4142
      %4147 = vst [vmem:[%s386 + $0x8] sm:$0xff] %v4143
      %4148 = vst [vmem:[%s386 + $0x10] sm:$0xff] %v4144
      %4149 = vst [vmem:[%s386 + $0x18] sm:$0xff] %v4145
      %p4150 = scmp.lt.s32.totalorder %s22, 1
      %s4151 = scalar_select %p4150, %s22, 1
      %s4152 = smul.addr %s4151, 4
      %s4153 = smul.addr %s4152, 8
      %s4154 = scalar_lea.vmem %s11, %s4153
      // Predicated region
      $region65: #{_fused_forward.1} parent=63 // pred_check
        %p4155 = pneg %p276
      $region66: #{_fused_forward.1} parent=63 // pred_check_branch
        %4157 = sbr.rel (%p4155) target = $region68
      $region67: #{_fused_forward.1} parent=63 // pred_region
        _
      $region68: #{_fused_forward.1} parent=63 // pred_fallthru
        _
    $region64: #{_fused_forward.1} parent=5 // pred_fallthru
      _
    %p4158 = scmp.le.s32.totalorder 2, %s17
    // Predicated region
    $region69: #{_fused_forward.1} parent=5 // pred_check
      %p4159 = pneg %p4158
    $region70: #{_fused_forward.1} parent=5 // pred_check_branch
      %4161 = sbr.rel (%p4159) target = $region72
    $region71: #{_fused_forward.1} parent=5 // pred_region
      %s4162 = ssub.s32 %s17, 2
      // Predicated region
      $region73: #{_fused_forward.1} parent=71 // pred_check
        %p4163 = pneg %p282
      $region74: #{_fused_forward.1} parent=71 // pred_check_branch
        %4165 = sbr.rel (%p4163) target = $region76
      $region75: #{_fused_forward.1} parent=71 // pred_region
        %p4166 = scmp.lt.s32.totalorder %s23, 1
        %s4167 = scalar_select %p4166, %s23, 1
        %s4168 = smul.addr %s4167, 4
        %s4169 = smul.addr %s4168, 8
        %s4170 = scalar_lea.vmem %s11, %s4169
      $region76: #{_fused_forward.1} parent=71 // pred_fallthru
        _
    $region72: #{_fused_forward.1} parent=5 // pred_fallthru
      _
  $region6: #{_fused_forward.1} parent=0 // loop_footer
    %s21 = sadd.s32 1, %s17
  $region7: #{_fused_forward.1} parent=0 // loop_footer_branch
    %16 = sbr.rel target = $region3
  $region8: #{_fused_forward.1} parent=0 // loop_exit
    _

</llo_original>
